<compile_context>
chip_gen: v6e
topology: v6e:2x2x1
jax: 0.10.0
libtpu: 0.0.40
codegen_flags: <defaults>
</compile_context>

<pallas_src>
import functools

import jax
import jax.numpy as jnp
from jax.experimental import pallas as pl
from jax.experimental.pallas import tpu as pltpu

# ----------------------------- small synthetic config -----------------------------
B = 2              # batch
DEPTH_IMG = 6      # depth of each 3-D modality (2 * 1 * DEPTH_IMG must be divisible by 3)
H_IMG = 16
W_IMG = 16
PATCH = 2          # patch_size
EMB = 64           # emb_size (final_feat_dim, use_clinical_data=False)
HEADS = 8          # final_num_heads when use_clinical_data=False
HEAD_DIM = EMB // HEADS
DEPTH_ATT = 2      # number of transformer encoder blocks (depth_attention)
EXPANSION = 4
N_CLASSES = 1
LN_EPS = 1e-5

# sequence length: n_modalities * depth_img * patch_size**2 // num_channels (+ cls)
SEQ_PATCHES = 2 * 1 * DEPTH_IMG * PATCH * PATCH // 3        # = 16
SEQ_LEN = SEQ_PATCHES + 1                                   # + cls token = 17
S_PAD = ((SEQ_LEN + 7) // 8) * 8                            # 24 (8-sublane aligned)
HEAD_PAD = 128                                              # lane-dense head output
OUT_ROWS = 8                                                # 8-sublane-aligned cls block
PATCH_H = H_IMG // PATCH
PATCH_W = W_IMG // PATCH
BACKBONE_IN = 3 * PATCH_H * PATCH_W                         # 192
MISC_W = EXPANSION * EMB                                    # 256 (widest small bias)
assert 3 * EMB <= MISC_W


# =============================== Pallas kernel =====================================
def _layernorm(x, gamma, beta):
    mu = jnp.mean(x, axis=-1, keepdims=True)
    var = jnp.mean(jnp.square(x - mu), axis=-1, keepdims=True)
    return (x - mu) * jax.lax.rsqrt(var + LN_EPS) * gamma + beta


def _fused_forward_kernel(
    patches_ref,   # (S_PAD, BACKBONE_IN) bf16  patch pixels at rows 1..16, rest zero
    wbb_ref,       # (BACKBONE_IN, EMB)   bf16  synthetic backbone FC
    pos_ref,       # (S_PAD, EMB)         f32   cls + positions + backbone bias folded
    wqkv_ref,      # (L, EMB, 3*EMB)      bf16  columns [Q heads | K heads | V heads/√E]
    wp_ref,        # (L, EMB, EMB)        bf16  attention output projection
    w1_ref,        # (L, EMB, 4*EMB)      bf16  FFN in
    w2_ref,        # (L, 4*EMB, EMB)      bf16  FFN out
    misc_ref,      # (L, 8, MISC_W)       f32   packed small per-layer vectors
    wh_ref,        # (EMB, HEAD_PAD)      bf16  head (zero-padded to 128 lanes)
    bh_ref,        # (1, HEAD_PAD)        f32
    o_ref,         # (OUT_ROWS, HEAD_PAD) f32   row 0 = cls logits
    *, n_layers, num_heads, s_pad, seq_len):
    f32 = jnp.float32
    bf16 = jnp.bfloat16
    e = pos_ref.shape[-1]
    d = e // num_heads

    # ---- backbone FC (one lane-dense matmul); cls token + positional embedding +
    #      backbone bias come pre-folded in pos_ref (zero pixel rows -> exactly cls/pad)
    emb = jnp.dot(patches_ref[...], wbb_ref[...], preferred_element_type=f32)
    x = emb + pos_ref[...]                                   # (S_PAD, E) f32

    # additive key-padding mask: keys at sequence positions >= seq_len are 8-alignment pad
    neg = jnp.where(
        jax.lax.broadcasted_iota(jnp.int32, (1, s_pad), 1) < seq_len,
        0.0, -1e30).astype(f32)                              # (1, S_PAD)

    for l in range(n_layers):
        # packed per-layer small vectors
        bqkv = misc_ref[l, 0:1, 0:3 * e]                     # (1, 3E)
        b1 = misc_ref[l, 1:2, :]                             # (1, 4E)
        ln1g = misc_ref[l, 2:3, 0:e]
        ln1b = misc_ref[l, 3:4, 0:e]
        ln2g = misc_ref[l, 4:5, 0:e]
        ln2b = misc_ref[l, 5:6, 0:e]
        bp = misc_ref[l, 6:7, 0:e]
        b2 = misc_ref[l, 7:8, 0:e]

        # ---------------- residual 1: LayerNorm -> MHA -> add ----------------------
        h = _layernorm(x, ln1g, ln1b).astype(bf16)
        qkv = jnp.dot(h, wqkv_ref[l], preferred_element_type=f32) + bqkv   # (S, 3E)

        ctx_parts = []
        for hd in range(num_heads):
            q_h = qkv[:, hd * d:(hd + 1) * d].astype(bf16)
            k_h = qkv[:, e + hd * d:e + (hd + 1) * d].astype(bf16)
            v_h = qkv[:, 2 * e + hd * d:2 * e + (hd + 1) * d].astype(bf16)
            energy = jnp.einsum('qd,kd->qk', q_h, k_h,
                                preferred_element_type=f32) + neg          # (S, S)
            mmax = jnp.max(energy, axis=-1, keepdims=True)
            pexp = jnp.exp(energy - mmax)
            denom = jnp.sum(pexp, axis=-1, keepdims=True)
            ctx_h = jnp.dot(pexp.astype(bf16), v_h,
                            preferred_element_type=f32)                    # (S, D)
            # NOTE: reference divides by sqrt(emb_size) AFTER the softmax; that scale is
            # folded into the V weights/bias, so only the softmax denominator remains.
            ctx_parts.append(ctx_h * pl.reciprocal(denom, approx=True))
        ctx = jnp.concatenate(ctx_parts, axis=-1).astype(bf16)             # (S, E)
        x = x + jnp.dot(ctx, wp_ref[l], preferred_element_type=f32) + bp

        # ---------------- residual 2: LayerNorm -> FeedForward -> add --------------
        h2 = _layernorm(x, ln2g, ln2b).astype(bf16)
        f = jnp.dot(h2, w1_ref[l], preferred_element_type=f32) + b1
        # TODO(synk): nn.GELU() is the exact erf GELU; tanh approximation used for Mosaic.
        f = jax.nn.gelu(f, approximate=True)
        x = x + jnp.dot(f.astype(bf16), w2_ref[l], preferred_element_type=f32) + b2

    # ---- classification head only on the cls-row block (row 0 is the cls token) ----
    o_ref[...] = (jnp.dot(x[0:OUT_ROWS, :].astype(bf16), wh_ref[...],
                          preferred_element_type=f32) + bh_ref[...])


def _full_spec(arr):
    """Whole-array block, resident in VMEM for every grid step."""
    zeros = (0,) * arr.ndim
    return pl.BlockSpec(arr.shape, lambda b, _z=zeros: _z)


def fused_forward(patches_pad, p):
    """patches_pad: (B*S_PAD, BACKBONE_IN) bf16 -> (B*OUT_ROWS, HEAD_PAD) f32 logits."""
    rows = patches_pad.shape[0]
    batch = rows // S_PAD
    kern = functools.partial(
        _fused_forward_kernel,
        n_layers=DEPTH_ATT, num_heads=HEADS, s_pad=S_PAD, seq_len=SEQ_LEN)

    args = (patches_pad, p['w_backbone'], p['pos_bias'],
            p['wqkv'], p['wp'], p['w1'], p['w2'], p['misc'],
            p['wh'], p['bh'])
    in_specs = [pl.BlockSpec((S_PAD, BACKBONE_IN), lambda b: (b, 0))]
    in_specs += [_full_spec(a) for a in args[1:]]

    # Single fully VMEM-resident invocation per batch element; the (B,) grid only exists
    # so v7x's two TensorCores can each take one batch ("parallel").  No reduction
    # tiling / deeper pipelining: total working set is < 1 MiB and latency-bound.
    return pl.pallas_call(
        kern,
        out_shape=jax.ShapeDtypeStruct((batch * OUT_ROWS, HEAD_PAD), jnp.float32),
        grid=(batch,),
        in_specs=in_specs,
        out_specs=pl.BlockSpec((OUT_ROWS, HEAD_PAD), lambda b: (b, 0)),
        compiler_params=pltpu.CompilerParams(dimension_semantics=("parallel",)),
    )(*args)


# =============================== parameter init ====================================
def init_params(key):
    def normal(k, shape, std=0.02):
        return std * jax.random.normal(k, shape, dtype=jnp.float32)

    keys = iter(jax.random.split(key, 64))
    bf16 = jnp.bfloat16
    inv_scale = 1.0 / (float(EMB) ** 0.5)

    # --- PatchEmbedding ---
    # TODO(synk): torchvision resnet18 (pretrained) backbone has no in-script equivalent;
    # replaced by a single synthetic FC over the flattened 3 x H' x W' patch pixels,
    # producing the same (B*L, emb_size) output shape.
    w_backbone = normal(next(keys), (BACKBONE_IN, EMB))
    b_backbone = normal(next(keys), (EMB,))
    cls_token = jax.random.normal(next(keys), (EMB,), dtype=jnp.float32)
    positions = jax.random.normal(next(keys), (SEQ_LEN, EMB), dtype=jnp.float32)

    # Fold cls token + positional embedding + backbone bias into one additive (S_PAD, E)
    # slab: row 0 = cls + pos[0]; patch rows = pos + backbone bias; pad rows = 0.
    pos_bias = jnp.zeros((S_PAD, EMB), jnp.float32)
    pos_bias = pos_bias.at[:SEQ_LEN].set(positions)
    pos_bias = pos_bias.at[0].add(cls_token)
    pos_bias = pos_bias.at[1:SEQ_LEN].add(b_backbone)

    # --- transformer encoder blocks (stacked along a leading layer axis) ---
    wqkv_l, wp_l, w1_l, w2_l, misc_l = [], [], [], [], []
    for _ in range(DEPTH_ATT):
        w_qkv = normal(next(keys), (EMB, 3 * EMB))
        b_qkv = normal(next(keys), (3 * EMB,))
        # PyTorch qkv Linear columns are laid out '(h d qkv)'; regroup into contiguous
        # [Q heads | K heads | V heads] blocks (pure re-association of the same map).
        # The reference's post-softmax 1/sqrt(emb_size) scale is folded into V here.
        w_r = w_qkv.reshape(EMB, HEADS, HEAD_DIM, 3)
        b_r = b_qkv.reshape(HEADS, HEAD_DIM, 3)
        wq = w_r[..., 0].reshape(EMB, EMB)
        wk = w_r[..., 1].reshape(EMB, EMB)
        wv = w_r[..., 2].reshape(EMB, EMB) * inv_scale
        bq = b_r[..., 0].reshape(EMB)
        bk = b_r[..., 1].reshape(EMB)
        bv = b_r[..., 2].reshape(EMB) * inv_scale
        wqkv_l.append(jnp.concatenate([wq, wk, wv], axis=1))          # (E, 3E)
        bqkv = jnp.concatenate([bq, bk, bv])                          # (3E,)

        wp_l.append(normal(next(keys), (EMB, EMB)))                   # (E, E)
        bp = normal(next(keys), (EMB,))
        w1_l.append(normal(next(keys), (EMB, EXPANSION * EMB)))
        b1 = normal(next(keys), (EXPANSION * EMB,))
        w2_l.append(normal(next(keys), (EXPANSION * EMB, EMB)))
        b2 = normal(next(keys), (EMB,))
        ln1g = jnp.ones((EMB,), jnp.float32)
        ln1b = jnp.zeros((EMB,), jnp.float32)
        ln2g = jnp.ones((EMB,), jnp.float32)
        ln2b = jnp.zeros((EMB,), jnp.float32)

        # pack all small per-layer f32 vectors into one (8, MISC_W) slab (one DMA).
        misc = jnp.zeros((8, MISC_W), jnp.float32)
        misc = misc.at[0, :3 * EMB].set(bqkv)
        misc = misc.at[1, :].set(b1)
        misc = misc.at[2, :EMB].set(ln1g)
        misc = misc.at[3, :EMB].set(ln1b)
        misc = misc.at[4, :EMB].set(ln2g)
        misc = misc.at[5, :EMB].set(ln2b)
        misc = misc.at[6, :EMB].set(bp)
        misc = misc.at[7, :EMB].set(b2)
        misc_l.append(misc)

    # --- head (zero-padded to a lane-dense 128-wide output) ---
    w_head = normal(next(keys), (EMB, N_CLASSES))
    b_head = normal(next(keys), (N_CLASSES,))
    wh = jnp.zeros((EMB, HEAD_PAD), jnp.float32).at[:, :N_CLASSES].set(w_head)
    bh = jnp.zeros((1, HEAD_PAD), jnp.float32).at[:, :N_CLASSES].set(b_head)

    stack = lambda xs: jnp.stack(xs, axis=0)
    return {
        'w_backbone': w_backbone.astype(bf16),
        'pos_bias': pos_bias,
        'wqkv': stack(wqkv_l).astype(bf16),
        'wp': stack(wp_l).astype(bf16),
        'w1': stack(w1_l).astype(bf16),
        'w2': stack(w2_l).astype(bf16),
        'misc': stack(misc_l),
        'wh': wh.astype(bf16),
        'bh': bh,
    }


# =============================== forward (glue + kernel) ===========================
def patch_rearrange(mr, rtd):
    """Replicates the einops rearranges of PatchEmbedding (pure layout glue)."""
    # mr/rtd: (B, D, H, W) -> (B, n=2, c=1, D, H, W)
    mm = jnp.concatenate([mr[:, None, None], rtd[:, None, None]], axis=1)
    b, n, c, d, h, w = mm.shape
    ps = mm.reshape(b, n * c * d, h, w)                    # 'b n c d h w -> b (n c d) h w'
    ps = ps.reshape(b, (n * c * d) // 3, 3, h, w)          # '... (ncd ch3) ..., ch3=3'
    if PATCH > 1:                                          # 'b d c (h p1) (w p2) -> b (d p1 p2) c h w'
        bb, dd, cc, hh, ww = ps.shape
        ps = ps.reshape(bb, dd, cc, hh // PATCH, PATCH, ww // PATCH, PATCH)
        ps = ps.transpose(0, 1, 4, 6, 2, 3, 5)             # b d p1 p2 c h w
        ps = ps.reshape(bb, dd * PATCH * PATCH, cc, hh // PATCH, ww // PATCH)
    return ps                                              # (B, L, 3, H', W')


@jax.jit
def trans_med_forward(params, mr, rtd, clinical_data):
    # use_clinical_data=False -> clinical_data is ignored (matches reference path)
    del clinical_data
    patches = patch_rearrange(mr, rtd)                     # (B, L, 3, H', W')
    b, l = patches.shape[:2]
    flat = patches.reshape(b, l, BACKBONE_IN).astype(jnp.bfloat16)
    # Single pad op: patch rows land at sequence positions 1..L of an 8-aligned row grid;
    # the cls row (0) and pad rows (>= SEQ_LEN) stay zero (cls/pos come from pos_bias).
    rows = jnp.pad(flat, ((0, 0), (1, S_PAD - 1 - l), (0, 0)))

    out = fused_forward(rows.reshape(b * S_PAD, BACKBONE_IN), params)
    out = out.reshape(b, OUT_ROWS, HEAD_PAD)[:, 0, :N_CLASSES]
    return out                                             # (B, n_classes)


# ====================================== main =======================================
if __name__ == "__main__":
    key = jax.random.PRNGKey(0)
    k_mr, k_rtd, k_cd, k_par = jax.random.split(key, 4)

    mr = jax.random.normal(k_mr, (B, DEPTH_IMG, H_IMG, W_IMG), dtype=jnp.float32)
    rtd = jax.random.normal(k_rtd, (B, DEPTH_IMG, H_IMG, W_IMG), dtype=jnp.float32)
    clinical_data = jax.random.normal(k_cd, (B, 10), dtype=jnp.float32)  # unused

    params = init_params(k_par)

    out = trans_med_forward(params, mr, rtd, clinical_data)
    out = jax.block_until_ready(out)
    assert out.shape == (B, N_CLASSES), out.shape
    assert bool(jnp.all(jnp.isfinite(out)))
    print("KERNEL_OK")
</pallas_src>

<mosaic_0001>
module attributes {stable_mosaic.version = 11 : i64} {
  func.func @_fused_forward_kernel(%arg0: i32, %arg1: memref<24x192xbf16, #tpu.memory_space<vmem>>, %arg2: memref<192x64xbf16, #tpu.memory_space<vmem>>, %arg3: memref<24x64xf32, #tpu.memory_space<vmem>>, %arg4: memref<2x64x192xbf16, #tpu.memory_space<vmem>>, %arg5: memref<2x64x64xbf16, #tpu.memory_space<vmem>>, %arg6: memref<2x64x256xbf16, #tpu.memory_space<vmem>>, %arg7: memref<2x256x64xbf16, #tpu.memory_space<vmem>>, %arg8: memref<2x8x256xf32, #tpu.memory_space<vmem>>, %arg9: memref<64x128xbf16, #tpu.memory_space<vmem>>, %arg10: memref<1x128xf32, #tpu.memory_space<vmem>>, %arg11: memref<8x128xf32, #tpu.memory_space<vmem>>) attributes {dimension_semantics = [#tpu.dimension_semantics<parallel>], iteration_bounds = array<i64: 2>, scalar_prefetch = 0 : i64, scratch_operands = 0 : i64, tpu.core_type = #tpu.core_type<tc>, window_params = [{transform_indices = @transform_0, window_bounds = array<i64: 24, 192>}, {pipeline_mode = #tpu.pipeline_mode<synchronous>, transform_indices = @transform_1, window_bounds = array<i64: 192, 64>}, {pipeline_mode = #tpu.pipeline_mode<synchronous>, transform_indices = @transform_2, window_bounds = array<i64: 24, 64>}, {pipeline_mode = #tpu.pipeline_mode<synchronous>, transform_indices = @transform_3, window_bounds = array<i64: 2, 64, 192>}, {pipeline_mode = #tpu.pipeline_mode<synchronous>, transform_indices = @transform_4, window_bounds = array<i64: 2, 64, 64>}, {pipeline_mode = #tpu.pipeline_mode<synchronous>, transform_indices = @transform_5, window_bounds = array<i64: 2, 64, 256>}, {pipeline_mode = #tpu.pipeline_mode<synchronous>, transform_indices = @transform_6, window_bounds = array<i64: 2, 256, 64>}, {pipeline_mode = #tpu.pipeline_mode<synchronous>, transform_indices = @transform_7, window_bounds = array<i64: 2, 8, 256>}, {pipeline_mode = #tpu.pipeline_mode<synchronous>, transform_indices = @transform_8, window_bounds = array<i64: 64, 128>}, {pipeline_mode = #tpu.pipeline_mode<synchronous>, transform_indices = @transform_9, window_bounds = array<i64: 1, 128>}, {transform_indices = @transform_10, window_bounds = array<i64: 8, 128>}]} {
    %c0 = arith.constant 0 : index
    %c0_0 = arith.constant 0 : index
    %0 = vector.load %arg1[%c0, %c0_0] : memref<24x192xbf16, #tpu.memory_space<vmem>>, vector<24x192xbf16>
    %c0_1 = arith.constant 0 : index
    %c0_2 = arith.constant 0 : index
    %1 = vector.load %arg2[%c0_1, %c0_2] : memref<192x64xbf16, #tpu.memory_space<vmem>>, vector<192x64xbf16>
    %cst = arith.constant dense<0.000000e+00> : vector<24x64xf32>
    %2 = tpu.matmul %0, %1, %cst {dimension_numbers = #tpu.dot_dimension_numbers<[1], [0], [0], [1], [0, 0, 1, 1], [], []>} : vector<24x192xbf16>, vector<192x64xbf16>, vector<24x64xf32> -> vector<24x64xf32>
    %c0_3 = arith.constant 0 : index
    %c0_4 = arith.constant 0 : index
    %3 = vector.load %arg3[%c0_3, %c0_4] : memref<24x64xf32, #tpu.memory_space<vmem>>, vector<24x64xf32>
    %4 = arith.addf %2, %3 : vector<24x64xf32>
    %5 = tpu.iota {dimensions = array<i32: 1>} : vector<1x24xi32>
    %c17_i32 = arith.constant 17 : i32
    %6 = vector.broadcast %c17_i32 : i32 to vector<1x24xi32>
    %7 = arith.cmpi slt, %5, %6 : vector<1x24xi32>
    %cst_5 = arith.constant 0.000000e+00 : f32
    %cst_6 = arith.constant -1.000000e+30 : f32
    %8 = vector.broadcast %cst_5 : f32 to vector<1x24xf32>
    %9 = vector.broadcast %cst_6 : f32 to vector<1x24xf32>
    %10 = arith.select %7, %8, %9 : vector<1x24xi1>, vector<1x24xf32>
    %c0_7 = arith.constant 0 : index
    %c0_8 = arith.constant 0 : index
    %c0_9 = arith.constant 0 : index
    %11 = vector.load %arg8[%c0_7, %c0_8, %c0_9] : memref<2x8x256xf32, #tpu.memory_space<vmem>>, vector<1x1x192xf32>
    %12 = vector.shape_cast %11 : vector<1x1x192xf32> to vector<1x192xf32>
    %c0_10 = arith.constant 0 : index
    %c1 = arith.constant 1 : index
    %c0_11 = arith.constant 0 : index
    %13 = vector.load %arg8[%c0_10, %c1, %c0_11] : memref<2x8x256xf32, #tpu.memory_space<vmem>>, vector<1x1x256xf32>
    %14 = vector.shape_cast %13 : vector<1x1x256xf32> to vector<1x256xf32>
    %c0_12 = arith.constant 0 : index
    %c2 = arith.constant 2 : index
    %c0_13 = arith.constant 0 : index
    %15 = vector.load %arg8[%c0_12, %c2, %c0_13] : memref<2x8x256xf32, #tpu.memory_space<vmem>>, vector<1x1x64xf32>
    %16 = vector.shape_cast %15 : vector<1x1x64xf32> to vector<1x64xf32>
    %c0_14 = arith.constant 0 : index
    %c3 = arith.constant 3 : index
    %c0_15 = arith.constant 0 : index
    %17 = vector.load %arg8[%c0_14, %c3, %c0_15] : memref<2x8x256xf32, #tpu.memory_space<vmem>>, vector<1x1x64xf32>
    %18 = vector.shape_cast %17 : vector<1x1x64xf32> to vector<1x64xf32>
    %c0_16 = arith.constant 0 : index
    %c4 = arith.constant 4 : index
    %c0_17 = arith.constant 0 : index
    %19 = vector.load %arg8[%c0_16, %c4, %c0_17] : memref<2x8x256xf32, #tpu.memory_space<vmem>>, vector<1x1x64xf32>
    %20 = vector.shape_cast %19 : vector<1x1x64xf32> to vector<1x64xf32>
    %c0_18 = arith.constant 0 : index
    %c5 = arith.constant 5 : index
    %c0_19 = arith.constant 0 : index
    %21 = vector.load %arg8[%c0_18, %c5, %c0_19] : memref<2x8x256xf32, #tpu.memory_space<vmem>>, vector<1x1x64xf32>
    %22 = vector.shape_cast %21 : vector<1x1x64xf32> to vector<1x64xf32>
    %c0_20 = arith.constant 0 : index
    %c6 = arith.constant 6 : index
    %c0_21 = arith.constant 0 : index
    %23 = vector.load %arg8[%c0_20, %c6, %c0_21] : memref<2x8x256xf32, #tpu.memory_space<vmem>>, vector<1x1x64xf32>
    %24 = vector.shape_cast %23 : vector<1x1x64xf32> to vector<1x64xf32>
    %c0_22 = arith.constant 0 : index
    %c7 = arith.constant 7 : index
    %c0_23 = arith.constant 0 : index
    %25 = vector.load %arg8[%c0_22, %c7, %c0_23] : memref<2x8x256xf32, #tpu.memory_space<vmem>>, vector<1x1x64xf32>
    %26 = vector.shape_cast %25 : vector<1x1x64xf32> to vector<1x64xf32>
    %cst_24 = arith.constant dense<0.000000e+00> : vector<24xf32>
    %27 = vector.multi_reduction <add>, %4, %cst_24 [1] : vector<24x64xf32> to vector<24xf32>
    %28 = vector.shape_cast %27 : vector<24xf32> to vector<24x1xf32>
    %cst_25 = arith.constant 6.400000e+01 : f32
    %29 = vector.broadcast %cst_25 : f32 to vector<24x1xf32>
    %30 = arith.divf %28, %29 : vector<24x1xf32>
    %31 = vector.broadcast %30 : vector<24x1xf32> to vector<24x64xf32>
    %32 = arith.subf %4, %31 : vector<24x64xf32>
    %33 = arith.mulf %32, %32 : vector<24x64xf32>
    %cst_26 = arith.constant dense<0.000000e+00> : vector<24xf32>
    %34 = vector.multi_reduction <add>, %33, %cst_26 [1] : vector<24x64xf32> to vector<24xf32>
    %35 = vector.shape_cast %34 : vector<24xf32> to vector<24x1xf32>
    %cst_27 = arith.constant 6.400000e+01 : f32
    %36 = vector.broadcast %cst_27 : f32 to vector<24x1xf32>
    %37 = arith.divf %35, %36 : vector<24x1xf32>
    %38 = vector.broadcast %30 : vector<24x1xf32> to vector<24x64xf32>
    %39 = arith.subf %4, %38 : vector<24x64xf32>
    %cst_28 = arith.constant 9.99999974E-6 : f32
    %40 = vector.broadcast %cst_28 : f32 to vector<24x1xf32>
    %41 = arith.addf %37, %40 : vector<24x1xf32>
    %42 = math.rsqrt %41 : vector<24x1xf32>
    %43 = vector.broadcast %42 : vector<24x1xf32> to vector<24x64xf32>
    %44 = arith.mulf %39, %43 : vector<24x64xf32>
    %45 = vector.broadcast %16 : vector<1x64xf32> to vector<24x64xf32>
    %46 = arith.mulf %44, %45 : vector<24x64xf32>
    %47 = vector.broadcast %18 : vector<1x64xf32> to vector<24x64xf32>
    %48 = arith.addf %46, %47 : vector<24x64xf32>
    %49 = arith.truncf %48 : vector<24x64xf32> to vector<24x64xbf16>
    %c0_29 = arith.constant 0 : index
    %c0_30 = arith.constant 0 : index
    %c0_31 = arith.constant 0 : index
    %50 = vector.load %arg4[%c0_29, %c0_30, %c0_31] : memref<2x64x192xbf16, #tpu.memory_space<vmem>>, vector<1x64x192xbf16>
    %51 = vector.shape_cast %50 : vector<1x64x192xbf16> to vector<64x192xbf16>
    %cst_32 = arith.constant dense<0.000000e+00> : vector<24x192xf32>
    %52 = tpu.matmul %49, %51, %cst_32 {dimension_numbers = #tpu.dot_dimension_numbers<[1], [0], [0], [1], [0, 0, 1, 1], [], []>} : vector<24x64xbf16>, vector<64x192xbf16>, vector<24x192xf32> -> vector<24x192xf32>
    %53 = vector.broadcast %12 : vector<1x192xf32> to vector<24x192xf32>
    %54 = arith.addf %52, %53 : vector<24x192xf32>
    %55 = vector.extract_strided_slice %54 {offsets = [0, 0], sizes = [24, 8], strides = [1, 1]} : vector<24x192xf32> to vector<24x8xf32>
    %56 = arith.truncf %55 : vector<24x8xf32> to vector<24x8xbf16>
    %57 = vector.extract_strided_slice %54 {offsets = [0, 64], sizes = [24, 8], strides = [1, 1]} : vector<24x192xf32> to vector<24x8xf32>
    %58 = arith.truncf %57 : vector<24x8xf32> to vector<24x8xbf16>
    %59 = vector.extract_strided_slice %54 {offsets = [0, 128], sizes = [24, 8], strides = [1, 1]} : vector<24x192xf32> to vector<24x8xf32>
    %60 = arith.truncf %59 : vector<24x8xf32> to vector<24x8xbf16>
    "tpu.trace_start"() <{level = 10 : i32, message = "qd,kd->qk"}> : () -> ()
    %cst_33 = arith.constant dense<0.000000e+00> : vector<24x24xf32>
    %61 = tpu.matmul %56, %58, %cst_33 {dimension_numbers = #tpu.dot_dimension_numbers<[1], [1], [0], [0], [0, 0, 1, 0], [], []>} : vector<24x8xbf16>, vector<24x8xbf16>, vector<24x24xf32> -> vector<24x24xf32>
    "tpu.trace_stop"() : () -> ()
    %62 = vector.broadcast %10 : vector<1x24xf32> to vector<24x24xf32>
    %63 = arith.addf %61, %62 : vector<24x24xf32>
    %cst_34 = arith.constant dense<0xFF800000> : vector<24xf32>
    %64 = vector.multi_reduction <maximumf>, %63, %cst_34 [1] : vector<24x24xf32> to vector<24xf32>
    %65 = vector.shape_cast %64 : vector<24xf32> to vector<24x1xf32>
    %66 = vector.broadcast %65 : vector<24x1xf32> to vector<24x24xf32>
    %67 = arith.subf %63, %66 : vector<24x24xf32>
    %68 = math.exp %67 : vector<24x24xf32>
    %cst_35 = arith.constant dense<0.000000e+00> : vector<24xf32>
    %69 = vector.multi_reduction <add>, %68, %cst_35 [1] : vector<24x24xf32> to vector<24xf32>
    %70 = vector.shape_cast %69 : vector<24xf32> to vector<24x1xf32>
    %71 = arith.truncf %68 : vector<24x24xf32> to vector<24x24xbf16>
    %cst_36 = arith.constant dense<0.000000e+00> : vector<24x8xf32>
    %72 = tpu.matmul %71, %60, %cst_36 {dimension_numbers = #tpu.dot_dimension_numbers<[1], [0], [0], [1], [0, 0, 1, 1], [], []>} : vector<24x24xbf16>, vector<24x8xbf16>, vector<24x8xf32> -> vector<24x8xf32>
    %73 = tpu.reciprocal %70 {approx = true} : vector<24x1xf32> -> vector<24x1xf32>
    %74 = vector.broadcast %73 : vector<24x1xf32> to vector<24x8xf32>
    %75 = arith.mulf %72, %74 : vector<24x8xf32>
    %76 = vector.extract_strided_slice %54 {offsets = [0, 8], sizes = [24, 8], strides = [1, 1]} : vector<24x192xf32> to vector<24x8xf32>
    %77 = arith.truncf %76 : vector<24x8xf32> to vector<24x8xbf16>
    %78 = vector.extract_strided_slice %54 {offsets = [0, 72], sizes = [24, 8], strides = [1, 1]} : vector<24x192xf32> to vector<24x8xf32>
    %79 = arith.truncf %78 : vector<24x8xf32> to vector<24x8xbf16>
    %80 = vector.extract_strided_slice %54 {offsets = [0, 136], sizes = [24, 8], strides = [1, 1]} : vector<24x192xf32> to vector<24x8xf32>
    %81 = arith.truncf %80 : vector<24x8xf32> to vector<24x8xbf16>
    "tpu.trace_start"() <{level = 10 : i32, message = "qd,kd->qk"}> : () -> ()
    %cst_37 = arith.constant dense<0.000000e+00> : vector<24x24xf32>
    %82 = tpu.matmul %77, %79, %cst_37 {dimension_numbers = #tpu.dot_dimension_numbers<[1], [1], [0], [0], [0, 0, 1, 0], [], []>} : vector<24x8xbf16>, vector<24x8xbf16>, vector<24x24xf32> -> vector<24x24xf32>
    "tpu.trace_stop"() : () -> ()
    %83 = vector.broadcast %10 : vector<1x24xf32> to vector<24x24xf32>
    %84 = arith.addf %82, %83 : vector<24x24xf32>
    %cst_38 = arith.constant dense<0xFF800000> : vector<24xf32>
    %85 = vector.multi_reduction <maximumf>, %84, %cst_38 [1] : vector<24x24xf32> to vector<24xf32>
    %86 = vector.shape_cast %85 : vector<24xf32> to vector<24x1xf32>
    %87 = vector.broadcast %86 : vector<24x1xf32> to vector<24x24xf32>
    %88 = arith.subf %84, %87 : vector<24x24xf32>
    %89 = math.exp %88 : vector<24x24xf32>
    %cst_39 = arith.constant dense<0.000000e+00> : vector<24xf32>
    %90 = vector.multi_reduction <add>, %89, %cst_39 [1] : vector<24x24xf32> to vector<24xf32>
    %91 = vector.shape_cast %90 : vector<24xf32> to vector<24x1xf32>
    %92 = arith.truncf %89 : vector<24x24xf32> to vector<24x24xbf16>
    %cst_40 = arith.constant dense<0.000000e+00> : vector<24x8xf32>
    %93 = tpu.matmul %92, %81, %cst_40 {dimension_numbers = #tpu.dot_dimension_numbers<[1], [0], [0], [1], [0, 0, 1, 1], [], []>} : vector<24x24xbf16>, vector<24x8xbf16>, vector<24x8xf32> -> vector<24x8xf32>
    %94 = tpu.reciprocal %91 {approx = true} : vector<24x1xf32> -> vector<24x1xf32>
    %95 = vector.broadcast %94 : vector<24x1xf32> to vector<24x8xf32>
    %96 = arith.mulf %93, %95 : vector<24x8xf32>
    %97 = vector.extract_strided_slice %54 {offsets = [0, 16], sizes = [24, 8], strides = [1, 1]} : vector<24x192xf32> to vector<24x8xf32>
    %98 = arith.truncf %97 : vector<24x8xf32> to vector<24x8xbf16>
    %99 = vector.extract_strided_slice %54 {offsets = [0, 80], sizes = [24, 8], strides = [1, 1]} : vector<24x192xf32> to vector<24x8xf32>
    %100 = arith.truncf %99 : vector<24x8xf32> to vector<24x8xbf16>
    %101 = vector.extract_strided_slice %54 {offsets = [0, 144], sizes = [24, 8], strides = [1, 1]} : vector<24x192xf32> to vector<24x8xf32>
    %102 = arith.truncf %101 : vector<24x8xf32> to vector<24x8xbf16>
    "tpu.trace_start"() <{level = 10 : i32, message = "qd,kd->qk"}> : () -> ()
    %cst_41 = arith.constant dense<0.000000e+00> : vector<24x24xf32>
    %103 = tpu.matmul %98, %100, %cst_41 {dimension_numbers = #tpu.dot_dimension_numbers<[1], [1], [0], [0], [0, 0, 1, 0], [], []>} : vector<24x8xbf16>, vector<24x8xbf16>, vector<24x24xf32> -> vector<24x24xf32>
    "tpu.trace_stop"() : () -> ()
    %104 = vector.broadcast %10 : vector<1x24xf32> to vector<24x24xf32>
    %105 = arith.addf %103, %104 : vector<24x24xf32>
    %cst_42 = arith.constant dense<0xFF800000> : vector<24xf32>
    %106 = vector.multi_reduction <maximumf>, %105, %cst_42 [1] : vector<24x24xf32> to vector<24xf32>
    %107 = vector.shape_cast %106 : vector<24xf32> to vector<24x1xf32>
    %108 = vector.broadcast %107 : vector<24x1xf32> to vector<24x24xf32>
    %109 = arith.subf %105, %108 : vector<24x24xf32>
    %110 = math.exp %109 : vector<24x24xf32>
    %cst_43 = arith.constant dense<0.000000e+00> : vector<24xf32>
    %111 = vector.multi_reduction <add>, %110, %cst_43 [1] : vector<24x24xf32> to vector<24xf32>
    %112 = vector.shape_cast %111 : vector<24xf32> to vector<24x1xf32>
    %113 = arith.truncf %110 : vector<24x24xf32> to vector<24x24xbf16>
    %cst_44 = arith.constant dense<0.000000e+00> : vector<24x8xf32>
    %114 = tpu.matmul %113, %102, %cst_44 {dimension_numbers = #tpu.dot_dimension_numbers<[1], [0], [0], [1], [0, 0, 1, 1], [], []>} : vector<24x24xbf16>, vector<24x8xbf16>, vector<24x8xf32> -> vector<24x8xf32>
    %115 = tpu.reciprocal %112 {approx = true} : vector<24x1xf32> -> vector<24x1xf32>
    %116 = vector.broadcast %115 : vector<24x1xf32> to vector<24x8xf32>
    %117 = arith.mulf %114, %116 : vector<24x8xf32>
    %118 = vector.extract_strided_slice %54 {offsets = [0, 24], sizes = [24, 8], strides = [1, 1]} : vector<24x192xf32> to vector<24x8xf32>
    %119 = arith.truncf %118 : vector<24x8xf32> to vector<24x8xbf16>
    %120 = vector.extract_strided_slice %54 {offsets = [0, 88], sizes = [24, 8], strides = [1, 1]} : vector<24x192xf32> to vector<24x8xf32>
    %121 = arith.truncf %120 : vector<24x8xf32> to vector<24x8xbf16>
    %122 = vector.extract_strided_slice %54 {offsets = [0, 152], sizes = [24, 8], strides = [1, 1]} : vector<24x192xf32> to vector<24x8xf32>
    %123 = arith.truncf %122 : vector<24x8xf32> to vector<24x8xbf16>
    "tpu.trace_start"() <{level = 10 : i32, message = "qd,kd->qk"}> : () -> ()
    %cst_45 = arith.constant dense<0.000000e+00> : vector<24x24xf32>
    %124 = tpu.matmul %119, %121, %cst_45 {dimension_numbers = #tpu.dot_dimension_numbers<[1], [1], [0], [0], [0, 0, 1, 0], [], []>} : vector<24x8xbf16>, vector<24x8xbf16>, vector<24x24xf32> -> vector<24x24xf32>
    "tpu.trace_stop"() : () -> ()
    %125 = vector.broadcast %10 : vector<1x24xf32> to vector<24x24xf32>
    %126 = arith.addf %124, %125 : vector<24x24xf32>
    %cst_46 = arith.constant dense<0xFF800000> : vector<24xf32>
    %127 = vector.multi_reduction <maximumf>, %126, %cst_46 [1] : vector<24x24xf32> to vector<24xf32>
    %128 = vector.shape_cast %127 : vector<24xf32> to vector<24x1xf32>
    %129 = vector.broadcast %128 : vector<24x1xf32> to vector<24x24xf32>
    %130 = arith.subf %126, %129 : vector<24x24xf32>
    %131 = math.exp %130 : vector<24x24xf32>
    %cst_47 = arith.constant dense<0.000000e+00> : vector<24xf32>
    %132 = vector.multi_reduction <add>, %131, %cst_47 [1] : vector<24x24xf32> to vector<24xf32>
    %133 = vector.shape_cast %132 : vector<24xf32> to vector<24x1xf32>
    %134 = arith.truncf %131 : vector<24x24xf32> to vector<24x24xbf16>
    %cst_48 = arith.constant dense<0.000000e+00> : vector<24x8xf32>
    %135 = tpu.matmul %134, %123, %cst_48 {dimension_numbers = #tpu.dot_dimension_numbers<[1], [0], [0], [1], [0, 0, 1, 1], [], []>} : vector<24x24xbf16>, vector<24x8xbf16>, vector<24x8xf32> -> vector<24x8xf32>
    %136 = tpu.reciprocal %133 {approx = true} : vector<24x1xf32> -> vector<24x1xf32>
    %137 = vector.broadcast %136 : vector<24x1xf32> to vector<24x8xf32>
    %138 = arith.mulf %135, %137 : vector<24x8xf32>
    %139 = vector.extract_strided_slice %54 {offsets = [0, 32], sizes = [24, 8], strides = [1, 1]} : vector<24x192xf32> to vector<24x8xf32>
    %140 = arith.truncf %139 : vector<24x8xf32> to vector<24x8xbf16>
    %141 = vector.extract_strided_slice %54 {offsets = [0, 96], sizes = [24, 8], strides = [1, 1]} : vector<24x192xf32> to vector<24x8xf32>
    %142 = arith.truncf %141 : vector<24x8xf32> to vector<24x8xbf16>
    %143 = vector.extract_strided_slice %54 {offsets = [0, 160], sizes = [24, 8], strides = [1, 1]} : vector<24x192xf32> to vector<24x8xf32>
    %144 = arith.truncf %143 : vector<24x8xf32> to vector<24x8xbf16>
    "tpu.trace_start"() <{level = 10 : i32, message = "qd,kd->qk"}> : () -> ()
    %cst_49 = arith.constant dense<0.000000e+00> : vector<24x24xf32>
    %145 = tpu.matmul %140, %142, %cst_49 {dimension_numbers = #tpu.dot_dimension_numbers<[1], [1], [0], [0], [0, 0, 1, 0], [], []>} : vector<24x8xbf16>, vector<24x8xbf16>, vector<24x24xf32> -> vector<24x24xf32>
    "tpu.trace_stop"() : () -> ()
    %146 = vector.broadcast %10 : vector<1x24xf32> to vector<24x24xf32>
    %147 = arith.addf %145, %146 : vector<24x24xf32>
    %cst_50 = arith.constant dense<0xFF800000> : vector<24xf32>
    %148 = vector.multi_reduction <maximumf>, %147, %cst_50 [1] : vector<24x24xf32> to vector<24xf32>
    %149 = vector.shape_cast %148 : vector<24xf32> to vector<24x1xf32>
    %150 = vector.broadcast %149 : vector<24x1xf32> to vector<24x24xf32>
    %151 = arith.subf %147, %150 : vector<24x24xf32>
    %152 = math.exp %151 : vector<24x24xf32>
    %cst_51 = arith.constant dense<0.000000e+00> : vector<24xf32>
    %153 = vector.multi_reduction <add>, %152, %cst_51 [1] : vector<24x24xf32> to vector<24xf32>
    %154 = vector.shape_cast %153 : vector<24xf32> to vector<24x1xf32>
    %155 = arith.truncf %152 : vector<24x24xf32> to vector<24x24xbf16>
    %cst_52 = arith.constant dense<0.000000e+00> : vector<24x8xf32>
    %156 = tpu.matmul %155, %144, %cst_52 {dimension_numbers = #tpu.dot_dimension_numbers<[1], [0], [0], [1], [0, 0, 1, 1], [], []>} : vector<24x24xbf16>, vector<24x8xbf16>, vector<24x8xf32> -> vector<24x8xf32>
    %157 = tpu.reciprocal %154 {approx = true} : vector<24x1xf32> -> vector<24x1xf32>
    %158 = vector.broadcast %157 : vector<24x1xf32> to vector<24x8xf32>
    %159 = arith.mulf %156, %158 : vector<24x8xf32>
    %160 = vector.extract_strided_slice %54 {offsets = [0, 40], sizes = [24, 8], strides = [1, 1]} : vector<24x192xf32> to vector<24x8xf32>
    %161 = arith.truncf %160 : vector<24x8xf32> to vector<24x8xbf16>
    %162 = vector.extract_strided_slice %54 {offsets = [0, 104], sizes = [24, 8], strides = [1, 1]} : vector<24x192xf32> to vector<24x8xf32>
    %163 = arith.truncf %162 : vector<24x8xf32> to vector<24x8xbf16>
    %164 = vector.extract_strided_slice %54 {offsets = [0, 168], sizes = [24, 8], strides = [1, 1]} : vector<24x192xf32> to vector<24x8xf32>
    %165 = arith.truncf %164 : vector<24x8xf32> to vector<24x8xbf16>
    "tpu.trace_start"() <{level = 10 : i32, message = "qd,kd->qk"}> : () -> ()
    %cst_53 = arith.constant dense<0.000000e+00> : vector<24x24xf32>
    %166 = tpu.matmul %161, %163, %cst_53 {dimension_numbers = #tpu.dot_dimension_numbers<[1], [1], [0], [0], [0, 0, 1, 0], [], []>} : vector<24x8xbf16>, vector<24x8xbf16>, vector<24x24xf32> -> vector<24x24xf32>
    "tpu.trace_stop"() : () -> ()
    %167 = vector.broadcast %10 : vector<1x24xf32> to vector<24x24xf32>
    %168 = arith.addf %166, %167 : vector<24x24xf32>
    %cst_54 = arith.constant dense<0xFF800000> : vector<24xf32>
    %169 = vector.multi_reduction <maximumf>, %168, %cst_54 [1] : vector<24x24xf32> to vector<24xf32>
    %170 = vector.shape_cast %169 : vector<24xf32> to vector<24x1xf32>
    %171 = vector.broadcast %170 : vector<24x1xf32> to vector<24x24xf32>
    %172 = arith.subf %168, %171 : vector<24x24xf32>
    %173 = math.exp %172 : vector<24x24xf32>
    %cst_55 = arith.constant dense<0.000000e+00> : vector<24xf32>
    %174 = vector.multi_reduction <add>, %173, %cst_55 [1] : vector<24x24xf32> to vector<24xf32>
    %175 = vector.shape_cast %174 : vector<24xf32> to vector<24x1xf32>
    %176 = arith.truncf %173 : vector<24x24xf32> to vector<24x24xbf16>
    %cst_56 = arith.constant dense<0.000000e+00> : vector<24x8xf32>
    %177 = tpu.matmul %176, %165, %cst_56 {dimension_numbers = #tpu.dot_dimension_numbers<[1], [0], [0], [1], [0, 0, 1, 1], [], []>} : vector<24x24xbf16>, vector<24x8xbf16>, vector<24x8xf32> -> vector<24x8xf32>
    %178 = tpu.reciprocal %175 {approx = true} : vector<24x1xf32> -> vector<24x1xf32>
    %179 = vector.broadcast %178 : vector<24x1xf32> to vector<24x8xf32>
    %180 = arith.mulf %177, %179 : vector<24x8xf32>
    %181 = vector.extract_strided_slice %54 {offsets = [0, 48], sizes = [24, 8], strides = [1, 1]} : vector<24x192xf32> to vector<24x8xf32>
    %182 = arith.truncf %181 : vector<24x8xf32> to vector<24x8xbf16>
    %183 = vector.extract_strided_slice %54 {offsets = [0, 112], sizes = [24, 8], strides = [1, 1]} : vector<24x192xf32> to vector<24x8xf32>
    %184 = arith.truncf %183 : vector<24x8xf32> to vector<24x8xbf16>
    %185 = vector.extract_strided_slice %54 {offsets = [0, 176], sizes = [24, 8], strides = [1, 1]} : vector<24x192xf32> to vector<24x8xf32>
    %186 = arith.truncf %185 : vector<24x8xf32> to vector<24x8xbf16>
    "tpu.trace_start"() <{level = 10 : i32, message = "qd,kd->qk"}> : () -> ()
    %cst_57 = arith.constant dense<0.000000e+00> : vector<24x24xf32>
    %187 = tpu.matmul %182, %184, %cst_57 {dimension_numbers = #tpu.dot_dimension_numbers<[1], [1], [0], [0], [0, 0, 1, 0], [], []>} : vector<24x8xbf16>, vector<24x8xbf16>, vector<24x24xf32> -> vector<24x24xf32>
    "tpu.trace_stop"() : () -> ()
    %188 = vector.broadcast %10 : vector<1x24xf32> to vector<24x24xf32>
    %189 = arith.addf %187, %188 : vector<24x24xf32>
    %cst_58 = arith.constant dense<0xFF800000> : vector<24xf32>
    %190 = vector.multi_reduction <maximumf>, %189, %cst_58 [1] : vector<24x24xf32> to vector<24xf32>
    %191 = vector.shape_cast %190 : vector<24xf32> to vector<24x1xf32>
    %192 = vector.broadcast %191 : vector<24x1xf32> to vector<24x24xf32>
    %193 = arith.subf %189, %192 : vector<24x24xf32>
    %194 = math.exp %193 : vector<24x24xf32>
    %cst_59 = arith.constant dense<0.000000e+00> : vector<24xf32>
    %195 = vector.multi_reduction <add>, %194, %cst_59 [1] : vector<24x24xf32> to vector<24xf32>
    %196 = vector.shape_cast %195 : vector<24xf32> to vector<24x1xf32>
    %197 = arith.truncf %194 : vector<24x24xf32> to vector<24x24xbf16>
    %cst_60 = arith.constant dense<0.000000e+00> : vector<24x8xf32>
    %198 = tpu.matmul %197, %186, %cst_60 {dimension_numbers = #tpu.dot_dimension_numbers<[1], [0], [0], [1], [0, 0, 1, 1], [], []>} : vector<24x24xbf16>, vector<24x8xbf16>, vector<24x8xf32> -> vector<24x8xf32>
    %199 = tpu.reciprocal %196 {approx = true} : vector<24x1xf32> -> vector<24x1xf32>
    %200 = vector.broadcast %199 : vector<24x1xf32> to vector<24x8xf32>
    %201 = arith.mulf %198, %200 : vector<24x8xf32>
    %202 = vector.extract_strided_slice %54 {offsets = [0, 56], sizes = [24, 8], strides = [1, 1]} : vector<24x192xf32> to vector<24x8xf32>
    %203 = arith.truncf %202 : vector<24x8xf32> to vector<24x8xbf16>
    %204 = vector.extract_strided_slice %54 {offsets = [0, 120], sizes = [24, 8], strides = [1, 1]} : vector<24x192xf32> to vector<24x8xf32>
    %205 = arith.truncf %204 : vector<24x8xf32> to vector<24x8xbf16>
    %206 = vector.extract_strided_slice %54 {offsets = [0, 184], sizes = [24, 8], strides = [1, 1]} : vector<24x192xf32> to vector<24x8xf32>
    %207 = arith.truncf %206 : vector<24x8xf32> to vector<24x8xbf16>
    "tpu.trace_start"() <{level = 10 : i32, message = "qd,kd->qk"}> : () -> ()
    %cst_61 = arith.constant dense<0.000000e+00> : vector<24x24xf32>
    %208 = tpu.matmul %203, %205, %cst_61 {dimension_numbers = #tpu.dot_dimension_numbers<[1], [1], [0], [0], [0, 0, 1, 0], [], []>} : vector<24x8xbf16>, vector<24x8xbf16>, vector<24x24xf32> -> vector<24x24xf32>
    "tpu.trace_stop"() : () -> ()
    %209 = vector.broadcast %10 : vector<1x24xf32> to vector<24x24xf32>
    %210 = arith.addf %208, %209 : vector<24x24xf32>
    %cst_62 = arith.constant dense<0xFF800000> : vector<24xf32>
    %211 = vector.multi_reduction <maximumf>, %210, %cst_62 [1] : vector<24x24xf32> to vector<24xf32>
    %212 = vector.shape_cast %211 : vector<24xf32> to vector<24x1xf32>
    %213 = vector.broadcast %212 : vector<24x1xf32> to vector<24x24xf32>
    %214 = arith.subf %210, %213 : vector<24x24xf32>
    %215 = math.exp %214 : vector<24x24xf32>
    %cst_63 = arith.constant dense<0.000000e+00> : vector<24xf32>
    %216 = vector.multi_reduction <add>, %215, %cst_63 [1] : vector<24x24xf32> to vector<24xf32>
    %217 = vector.shape_cast %216 : vector<24xf32> to vector<24x1xf32>
    %218 = arith.truncf %215 : vector<24x24xf32> to vector<24x24xbf16>
    %cst_64 = arith.constant dense<0.000000e+00> : vector<24x8xf32>
    %219 = tpu.matmul %218, %207, %cst_64 {dimension_numbers = #tpu.dot_dimension_numbers<[1], [0], [0], [1], [0, 0, 1, 1], [], []>} : vector<24x24xbf16>, vector<24x8xbf16>, vector<24x8xf32> -> vector<24x8xf32>
    %220 = tpu.reciprocal %217 {approx = true} : vector<24x1xf32> -> vector<24x1xf32>
    %221 = vector.broadcast %220 : vector<24x1xf32> to vector<24x8xf32>
    %222 = arith.mulf %219, %221 : vector<24x8xf32>
    %223 = tpu.concatenate %75, %96, %117, %138, %159, %180, %201, %222 in 1 : vector<24x8xf32>, vector<24x8xf32>, vector<24x8xf32>, vector<24x8xf32>, vector<24x8xf32>, vector<24x8xf32>, vector<24x8xf32>, vector<24x8xf32> -> vector<24x64xf32>
    %224 = arith.truncf %223 : vector<24x64xf32> to vector<24x64xbf16>
    %c0_65 = arith.constant 0 : index
    %c0_66 = arith.constant 0 : index
    %c0_67 = arith.constant 0 : index
    %225 = vector.load %arg5[%c0_65, %c0_66, %c0_67] : memref<2x64x64xbf16, #tpu.memory_space<vmem>>, vector<1x64x64xbf16>
    %226 = vector.shape_cast %225 : vector<1x64x64xbf16> to vector<64x64xbf16>
    %cst_68 = arith.constant dense<0.000000e+00> : vector<24x64xf32>
    %227 = tpu.matmul %224, %226, %cst_68 {dimension_numbers = #tpu.dot_dimension_numbers<[1], [0], [0], [1], [0, 0, 1, 1], [], []>} : vector<24x64xbf16>, vector<64x64xbf16>, vector<24x64xf32> -> vector<24x64xf32>
    %228 = arith.addf %4, %227 : vector<24x64xf32>
    %229 = vector.broadcast %24 : vector<1x64xf32> to vector<24x64xf32>
    %230 = arith.addf %228, %229 : vector<24x64xf32>
    %cst_69 = arith.constant dense<0.000000e+00> : vector<24xf32>
    %231 = vector.multi_reduction <add>, %230, %cst_69 [1] : vector<24x64xf32> to vector<24xf32>
    %232 = vector.shape_cast %231 : vector<24xf32> to vector<24x1xf32>
    %cst_70 = arith.constant 6.400000e+01 : f32
    %233 = vector.broadcast %cst_70 : f32 to vector<24x1xf32>
    %234 = arith.divf %232, %233 : vector<24x1xf32>
    %235 = vector.broadcast %234 : vector<24x1xf32> to vector<24x64xf32>
    %236 = arith.subf %230, %235 : vector<24x64xf32>
    %237 = arith.mulf %236, %236 : vector<24x64xf32>
    %cst_71 = arith.constant dense<0.000000e+00> : vector<24xf32>
    %238 = vector.multi_reduction <add>, %237, %cst_71 [1] : vector<24x64xf32> to vector<24xf32>
    %239 = vector.shape_cast %238 : vector<24xf32> to vector<24x1xf32>
    %cst_72 = arith.constant 6.400000e+01 : f32
    %240 = vector.broadcast %cst_72 : f32 to vector<24x1xf32>
    %241 = arith.divf %239, %240 : vector<24x1xf32>
    %242 = vector.broadcast %234 : vector<24x1xf32> to vector<24x64xf32>
    %243 = arith.subf %230, %242 : vector<24x64xf32>
    %cst_73 = arith.constant 9.99999974E-6 : f32
    %244 = vector.broadcast %cst_73 : f32 to vector<24x1xf32>
    %245 = arith.addf %241, %244 : vector<24x1xf32>
    %246 = math.rsqrt %245 : vector<24x1xf32>
    %247 = vector.broadcast %246 : vector<24x1xf32> to vector<24x64xf32>
    %248 = arith.mulf %243, %247 : vector<24x64xf32>
    %249 = vector.broadcast %20 : vector<1x64xf32> to vector<24x64xf32>
    %250 = arith.mulf %248, %249 : vector<24x64xf32>
    %251 = vector.broadcast %22 : vector<1x64xf32> to vector<24x64xf32>
    %252 = arith.addf %250, %251 : vector<24x64xf32>
    %253 = arith.truncf %252 : vector<24x64xf32> to vector<24x64xbf16>
    %c0_74 = arith.constant 0 : index
    %c0_75 = arith.constant 0 : index
    %c0_76 = arith.constant 0 : index
    %254 = vector.load %arg6[%c0_74, %c0_75, %c0_76] : memref<2x64x256xbf16, #tpu.memory_space<vmem>>, vector<1x64x256xbf16>
    %255 = vector.shape_cast %254 : vector<1x64x256xbf16> to vector<64x256xbf16>
    %cst_77 = arith.constant dense<0.000000e+00> : vector<24x256xf32>
    %256 = tpu.matmul %253, %255, %cst_77 {dimension_numbers = #tpu.dot_dimension_numbers<[1], [0], [0], [1], [0, 0, 1, 1], [], []>} : vector<24x64xbf16>, vector<64x256xbf16>, vector<24x256xf32> -> vector<24x256xf32>
    %257 = vector.broadcast %14 : vector<1x256xf32> to vector<24x256xf32>
    %258 = arith.addf %256, %257 : vector<24x256xf32>
    %259 = arith.mulf %258, %258 : vector<24x256xf32>
    %260 = arith.mulf %258, %259 : vector<24x256xf32>
    %cst_78 = arith.constant 4.471500e-02 : f32
    %261 = vector.broadcast %cst_78 : f32 to vector<24x256xf32>
    %262 = arith.mulf %261, %260 : vector<24x256xf32>
    %263 = arith.addf %258, %262 : vector<24x256xf32>
    %cst_79 = arith.constant 0.797884583 : f32
    %264 = vector.broadcast %cst_79 : f32 to vector<24x256xf32>
    %265 = arith.mulf %264, %263 : vector<24x256xf32>
    %266 = math.tanh %265 : vector<24x256xf32>
    %cst_80 = arith.constant 1.000000e+00 : f32
    %267 = vector.broadcast %cst_80 : f32 to vector<24x256xf32>
    %268 = arith.addf %267, %266 : vector<24x256xf32>
    %cst_81 = arith.constant 5.000000e-01 : f32
    %269 = vector.broadcast %cst_81 : f32 to vector<24x256xf32>
    %270 = arith.mulf %269, %268 : vector<24x256xf32>
    %271 = arith.mulf %258, %270 : vector<24x256xf32>
    %272 = arith.truncf %271 : vector<24x256xf32> to vector<24x256xbf16>
    %c0_82 = arith.constant 0 : index
    %c0_83 = arith.constant 0 : index
    %c0_84 = arith.constant 0 : index
    %273 = vector.load %arg7[%c0_82, %c0_83, %c0_84] : memref<2x256x64xbf16, #tpu.memory_space<vmem>>, vector<1x256x64xbf16>
    %274 = vector.shape_cast %273 : vector<1x256x64xbf16> to vector<256x64xbf16>
    %cst_85 = arith.constant dense<0.000000e+00> : vector<24x64xf32>
    %275 = tpu.matmul %272, %274, %cst_85 {dimension_numbers = #tpu.dot_dimension_numbers<[1], [0], [0], [1], [0, 0, 1, 1], [], []>} : vector<24x256xbf16>, vector<256x64xbf16>, vector<24x64xf32> -> vector<24x64xf32>
    %276 = arith.addf %230, %275 : vector<24x64xf32>
    %277 = vector.broadcast %26 : vector<1x64xf32> to vector<24x64xf32>
    %278 = arith.addf %276, %277 : vector<24x64xf32>
    %c1_86 = arith.constant 1 : index
    %c0_87 = arith.constant 0 : index
    %c0_88 = arith.constant 0 : index
    %279 = vector.load %arg8[%c1_86, %c0_87, %c0_88] : memref<2x8x256xf32, #tpu.memory_space<vmem>>, vector<1x1x192xf32>
    %280 = vector.shape_cast %279 : vector<1x1x192xf32> to vector<1x192xf32>
    %c1_89 = arith.constant 1 : index
    %c1_90 = arith.constant 1 : index
    %c0_91 = arith.constant 0 : index
    %281 = vector.load %arg8[%c1_89, %c1_90, %c0_91] : memref<2x8x256xf32, #tpu.memory_space<vmem>>, vector<1x1x256xf32>
    %282 = vector.shape_cast %281 : vector<1x1x256xf32> to vector<1x256xf32>
    %c1_92 = arith.constant 1 : index
    %c2_93 = arith.constant 2 : index
    %c0_94 = arith.constant 0 : index
    %283 = vector.load %arg8[%c1_92, %c2_93, %c0_94] : memref<2x8x256xf32, #tpu.memory_space<vmem>>, vector<1x1x64xf32>
    %284 = vector.shape_cast %283 : vector<1x1x64xf32> to vector<1x64xf32>
    %c1_95 = arith.constant 1 : index
    %c3_96 = arith.constant 3 : index
    %c0_97 = arith.constant 0 : index
    %285 = vector.load %arg8[%c1_95, %c3_96, %c0_97] : memref<2x8x256xf32, #tpu.memory_space<vmem>>, vector<1x1x64xf32>
    %286 = vector.shape_cast %285 : vector<1x1x64xf32> to vector<1x64xf32>
    %c1_98 = arith.constant 1 : index
    %c4_99 = arith.constant 4 : index
    %c0_100 = arith.constant 0 : index
    %287 = vector.load %arg8[%c1_98, %c4_99, %c0_100] : memref<2x8x256xf32, #tpu.memory_space<vmem>>, vector<1x1x64xf32>
    %288 = vector.shape_cast %287 : vector<1x1x64xf32> to vector<1x64xf32>
    %c1_101 = arith.constant 1 : index
    %c5_102 = arith.constant 5 : index
    %c0_103 = arith.constant 0 : index
    %289 = vector.load %arg8[%c1_101, %c5_102, %c0_103] : memref<2x8x256xf32, #tpu.memory_space<vmem>>, vector<1x1x64xf32>
    %290 = vector.shape_cast %289 : vector<1x1x64xf32> to vector<1x64xf32>
    %c1_104 = arith.constant 1 : index
    %c6_105 = arith.constant 6 : index
    %c0_106 = arith.constant 0 : index
    %291 = vector.load %arg8[%c1_104, %c6_105, %c0_106] : memref<2x8x256xf32, #tpu.memory_space<vmem>>, vector<1x1x64xf32>
    %292 = vector.shape_cast %291 : vector<1x1x64xf32> to vector<1x64xf32>
    %c1_107 = arith.constant 1 : index
    %c7_108 = arith.constant 7 : index
    %c0_109 = arith.constant 0 : index
    %293 = vector.load %arg8[%c1_107, %c7_108, %c0_109] : memref<2x8x256xf32, #tpu.memory_space<vmem>>, vector<1x1x64xf32>
    %294 = vector.shape_cast %293 : vector<1x1x64xf32> to vector<1x64xf32>
    %cst_110 = arith.constant dense<0.000000e+00> : vector<24xf32>
    %295 = vector.multi_reduction <add>, %278, %cst_110 [1] : vector<24x64xf32> to vector<24xf32>
    %296 = vector.shape_cast %295 : vector<24xf32> to vector<24x1xf32>
    %cst_111 = arith.constant 6.400000e+01 : f32
    %297 = vector.broadcast %cst_111 : f32 to vector<24x1xf32>
    %298 = arith.divf %296, %297 : vector<24x1xf32>
    %299 = vector.broadcast %298 : vector<24x1xf32> to vector<24x64xf32>
    %300 = arith.subf %278, %299 : vector<24x64xf32>
    %301 = arith.mulf %300, %300 : vector<24x64xf32>
    %cst_112 = arith.constant dense<0.000000e+00> : vector<24xf32>
    %302 = vector.multi_reduction <add>, %301, %cst_112 [1] : vector<24x64xf32> to vector<24xf32>
    %303 = vector.shape_cast %302 : vector<24xf32> to vector<24x1xf32>
    %cst_113 = arith.constant 6.400000e+01 : f32
    %304 = vector.broadcast %cst_113 : f32 to vector<24x1xf32>
    %305 = arith.divf %303, %304 : vector<24x1xf32>
    %306 = vector.broadcast %298 : vector<24x1xf32> to vector<24x64xf32>
    %307 = arith.subf %278, %306 : vector<24x64xf32>
    %cst_114 = arith.constant 9.99999974E-6 : f32
    %308 = vector.broadcast %cst_114 : f32 to vector<24x1xf32>
    %309 = arith.addf %305, %308 : vector<24x1xf32>
    %310 = math.rsqrt %309 : vector<24x1xf32>
    %311 = vector.broadcast %310 : vector<24x1xf32> to vector<24x64xf32>
    %312 = arith.mulf %307, %311 : vector<24x64xf32>
    %313 = vector.broadcast %284 : vector<1x64xf32> to vector<24x64xf32>
    %314 = arith.mulf %312, %313 : vector<24x64xf32>
    %315 = vector.broadcast %286 : vector<1x64xf32> to vector<24x64xf32>
    %316 = arith.addf %314, %315 : vector<24x64xf32>
    %317 = arith.truncf %316 : vector<24x64xf32> to vector<24x64xbf16>
    %c1_115 = arith.constant 1 : index
    %c0_116 = arith.constant 0 : index
    %c0_117 = arith.constant 0 : index
    %318 = vector.load %arg4[%c1_115, %c0_116, %c0_117] : memref<2x64x192xbf16, #tpu.memory_space<vmem>>, vector<1x64x192xbf16>
    %319 = vector.shape_cast %318 : vector<1x64x192xbf16> to vector<64x192xbf16>
    %cst_118 = arith.constant dense<0.000000e+00> : vector<24x192xf32>
    %320 = tpu.matmul %317, %319, %cst_118 {dimension_numbers = #tpu.dot_dimension_numbers<[1], [0], [0], [1], [0, 0, 1, 1], [], []>} : vector<24x64xbf16>, vector<64x192xbf16>, vector<24x192xf32> -> vector<24x192xf32>
    %321 = vector.broadcast %280 : vector<1x192xf32> to vector<24x192xf32>
    %322 = arith.addf %320, %321 : vector<24x192xf32>
    %323 = vector.extract_strided_slice %322 {offsets = [0, 0], sizes = [24, 8], strides = [1, 1]} : vector<24x192xf32> to vector<24x8xf32>
    %324 = arith.truncf %323 : vector<24x8xf32> to vector<24x8xbf16>
    %325 = vector.extract_strided_slice %322 {offsets = [0, 64], sizes = [24, 8], strides = [1, 1]} : vector<24x192xf32> to vector<24x8xf32>
    %326 = arith.truncf %325 : vector<24x8xf32> to vector<24x8xbf16>
    %327 = vector.extract_strided_slice %322 {offsets = [0, 128], sizes = [24, 8], strides = [1, 1]} : vector<24x192xf32> to vector<24x8xf32>
    %328 = arith.truncf %327 : vector<24x8xf32> to vector<24x8xbf16>
    "tpu.trace_start"() <{level = 10 : i32, message = "qd,kd->qk"}> : () -> ()
    %cst_119 = arith.constant dense<0.000000e+00> : vector<24x24xf32>
    %329 = tpu.matmul %324, %326, %cst_119 {dimension_numbers = #tpu.dot_dimension_numbers<[1], [1], [0], [0], [0, 0, 1, 0], [], []>} : vector<24x8xbf16>, vector<24x8xbf16>, vector<24x24xf32> -> vector<24x24xf32>
    "tpu.trace_stop"() : () -> ()
    %330 = vector.broadcast %10 : vector<1x24xf32> to vector<24x24xf32>
    %331 = arith.addf %329, %330 : vector<24x24xf32>
    %cst_120 = arith.constant dense<0xFF800000> : vector<24xf32>
    %332 = vector.multi_reduction <maximumf>, %331, %cst_120 [1] : vector<24x24xf32> to vector<24xf32>
    %333 = vector.shape_cast %332 : vector<24xf32> to vector<24x1xf32>
    %334 = vector.broadcast %333 : vector<24x1xf32> to vector<24x24xf32>
    %335 = arith.subf %331, %334 : vector<24x24xf32>
    %336 = math.exp %335 : vector<24x24xf32>
    %cst_121 = arith.constant dense<0.000000e+00> : vector<24xf32>
    %337 = vector.multi_reduction <add>, %336, %cst_121 [1] : vector<24x24xf32> to vector<24xf32>
    %338 = vector.shape_cast %337 : vector<24xf32> to vector<24x1xf32>
    %339 = arith.truncf %336 : vector<24x24xf32> to vector<24x24xbf16>
    %cst_122 = arith.constant dense<0.000000e+00> : vector<24x8xf32>
    %340 = tpu.matmul %339, %328, %cst_122 {dimension_numbers = #tpu.dot_dimension_numbers<[1], [0], [0], [1], [0, 0, 1, 1], [], []>} : vector<24x24xbf16>, vector<24x8xbf16>, vector<24x8xf32> -> vector<24x8xf32>
    %341 = tpu.reciprocal %338 {approx = true} : vector<24x1xf32> -> vector<24x1xf32>
    %342 = vector.broadcast %341 : vector<24x1xf32> to vector<24x8xf32>
    %343 = arith.mulf %340, %342 : vector<24x8xf32>
    %344 = vector.extract_strided_slice %322 {offsets = [0, 8], sizes = [24, 8], strides = [1, 1]} : vector<24x192xf32> to vector<24x8xf32>
    %345 = arith.truncf %344 : vector<24x8xf32> to vector<24x8xbf16>
    %346 = vector.extract_strided_slice %322 {offsets = [0, 72], sizes = [24, 8], strides = [1, 1]} : vector<24x192xf32> to vector<24x8xf32>
    %347 = arith.truncf %346 : vector<24x8xf32> to vector<24x8xbf16>
    %348 = vector.extract_strided_slice %322 {offsets = [0, 136], sizes = [24, 8], strides = [1, 1]} : vector<24x192xf32> to vector<24x8xf32>
    %349 = arith.truncf %348 : vector<24x8xf32> to vector<24x8xbf16>
    "tpu.trace_start"() <{level = 10 : i32, message = "qd,kd->qk"}> : () -> ()
    %cst_123 = arith.constant dense<0.000000e+00> : vector<24x24xf32>
    %350 = tpu.matmul %345, %347, %cst_123 {dimension_numbers = #tpu.dot_dimension_numbers<[1], [1], [0], [0], [0, 0, 1, 0], [], []>} : vector<24x8xbf16>, vector<24x8xbf16>, vector<24x24xf32> -> vector<24x24xf32>
    "tpu.trace_stop"() : () -> ()
    %351 = vector.broadcast %10 : vector<1x24xf32> to vector<24x24xf32>
    %352 = arith.addf %350, %351 : vector<24x24xf32>
    %cst_124 = arith.constant dense<0xFF800000> : vector<24xf32>
    %353 = vector.multi_reduction <maximumf>, %352, %cst_124 [1] : vector<24x24xf32> to vector<24xf32>
    %354 = vector.shape_cast %353 : vector<24xf32> to vector<24x1xf32>
    %355 = vector.broadcast %354 : vector<24x1xf32> to vector<24x24xf32>
    %356 = arith.subf %352, %355 : vector<24x24xf32>
    %357 = math.exp %356 : vector<24x24xf32>
    %cst_125 = arith.constant dense<0.000000e+00> : vector<24xf32>
    %358 = vector.multi_reduction <add>, %357, %cst_125 [1] : vector<24x24xf32> to vector<24xf32>
    %359 = vector.shape_cast %358 : vector<24xf32> to vector<24x1xf32>
    %360 = arith.truncf %357 : vector<24x24xf32> to vector<24x24xbf16>
    %cst_126 = arith.constant dense<0.000000e+00> : vector<24x8xf32>
    %361 = tpu.matmul %360, %349, %cst_126 {dimension_numbers = #tpu.dot_dimension_numbers<[1], [0], [0], [1], [0, 0, 1, 1], [], []>} : vector<24x24xbf16>, vector<24x8xbf16>, vector<24x8xf32> -> vector<24x8xf32>
    %362 = tpu.reciprocal %359 {approx = true} : vector<24x1xf32> -> vector<24x1xf32>
    %363 = vector.broadcast %362 : vector<24x1xf32> to vector<24x8xf32>
    %364 = arith.mulf %361, %363 : vector<24x8xf32>
    %365 = vector.extract_strided_slice %322 {offsets = [0, 16], sizes = [24, 8], strides = [1, 1]} : vector<24x192xf32> to vector<24x8xf32>
    %366 = arith.truncf %365 : vector<24x8xf32> to vector<24x8xbf16>
    %367 = vector.extract_strided_slice %322 {offsets = [0, 80], sizes = [24, 8], strides = [1, 1]} : vector<24x192xf32> to vector<24x8xf32>
    %368 = arith.truncf %367 : vector<24x8xf32> to vector<24x8xbf16>
    %369 = vector.extract_strided_slice %322 {offsets = [0, 144], sizes = [24, 8], strides = [1, 1]} : vector<24x192xf32> to vector<24x8xf32>
    %370 = arith.truncf %369 : vector<24x8xf32> to vector<24x8xbf16>
    "tpu.trace_start"() <{level = 10 : i32, message = "qd,kd->qk"}> : () -> ()
    %cst_127 = arith.constant dense<0.000000e+00> : vector<24x24xf32>
    %371 = tpu.matmul %366, %368, %cst_127 {dimension_numbers = #tpu.dot_dimension_numbers<[1], [1], [0], [0], [0, 0, 1, 0], [], []>} : vector<24x8xbf16>, vector<24x8xbf16>, vector<24x24xf32> -> vector<24x24xf32>
    "tpu.trace_stop"() : () -> ()
    %372 = vector.broadcast %10 : vector<1x24xf32> to vector<24x24xf32>
    %373 = arith.addf %371, %372 : vector<24x24xf32>
    %cst_128 = arith.constant dense<0xFF800000> : vector<24xf32>
    %374 = vector.multi_reduction <maximumf>, %373, %cst_128 [1] : vector<24x24xf32> to vector<24xf32>
    %375 = vector.shape_cast %374 : vector<24xf32> to vector<24x1xf32>
    %376 = vector.broadcast %375 : vector<24x1xf32> to vector<24x24xf32>
    %377 = arith.subf %373, %376 : vector<24x24xf32>
    %378 = math.exp %377 : vector<24x24xf32>
    %cst_129 = arith.constant dense<0.000000e+00> : vector<24xf32>
    %379 = vector.multi_reduction <add>, %378, %cst_129 [1] : vector<24x24xf32> to vector<24xf32>
    %380 = vector.shape_cast %379 : vector<24xf32> to vector<24x1xf32>
    %381 = arith.truncf %378 : vector<24x24xf32> to vector<24x24xbf16>
    %cst_130 = arith.constant dense<0.000000e+00> : vector<24x8xf32>
    %382 = tpu.matmul %381, %370, %cst_130 {dimension_numbers = #tpu.dot_dimension_numbers<[1], [0], [0], [1], [0, 0, 1, 1], [], []>} : vector<24x24xbf16>, vector<24x8xbf16>, vector<24x8xf32> -> vector<24x8xf32>
    %383 = tpu.reciprocal %380 {approx = true} : vector<24x1xf32> -> vector<24x1xf32>
    %384 = vector.broadcast %383 : vector<24x1xf32> to vector<24x8xf32>
    %385 = arith.mulf %382, %384 : vector<24x8xf32>
    %386 = vector.extract_strided_slice %322 {offsets = [0, 24], sizes = [24, 8], strides = [1, 1]} : vector<24x192xf32> to vector<24x8xf32>
    %387 = arith.truncf %386 : vector<24x8xf32> to vector<24x8xbf16>
    %388 = vector.extract_strided_slice %322 {offsets = [0, 88], sizes = [24, 8], strides = [1, 1]} : vector<24x192xf32> to vector<24x8xf32>
    %389 = arith.truncf %388 : vector<24x8xf32> to vector<24x8xbf16>
    %390 = vector.extract_strided_slice %322 {offsets = [0, 152], sizes = [24, 8], strides = [1, 1]} : vector<24x192xf32> to vector<24x8xf32>
    %391 = arith.truncf %390 : vector<24x8xf32> to vector<24x8xbf16>
    "tpu.trace_start"() <{level = 10 : i32, message = "qd,kd->qk"}> : () -> ()
    %cst_131 = arith.constant dense<0.000000e+00> : vector<24x24xf32>
    %392 = tpu.matmul %387, %389, %cst_131 {dimension_numbers = #tpu.dot_dimension_numbers<[1], [1], [0], [0], [0, 0, 1, 0], [], []>} : vector<24x8xbf16>, vector<24x8xbf16>, vector<24x24xf32> -> vector<24x24xf32>
    "tpu.trace_stop"() : () -> ()
    %393 = vector.broadcast %10 : vector<1x24xf32> to vector<24x24xf32>
    %394 = arith.addf %392, %393 : vector<24x24xf32>
    %cst_132 = arith.constant dense<0xFF800000> : vector<24xf32>
    %395 = vector.multi_reduction <maximumf>, %394, %cst_132 [1] : vector<24x24xf32> to vector<24xf32>
    %396 = vector.shape_cast %395 : vector<24xf32> to vector<24x1xf32>
    %397 = vector.broadcast %396 : vector<24x1xf32> to vector<24x24xf32>
    %398 = arith.subf %394, %397 : vector<24x24xf32>
    %399 = math.exp %398 : vector<24x24xf32>
    %cst_133 = arith.constant dense<0.000000e+00> : vector<24xf32>
    %400 = vector.multi_reduction <add>, %399, %cst_133 [1] : vector<24x24xf32> to vector<24xf32>
    %401 = vector.shape_cast %400 : vector<24xf32> to vector<24x1xf32>
    %402 = arith.truncf %399 : vector<24x24xf32> to vector<24x24xbf16>
    %cst_134 = arith.constant dense<0.000000e+00> : vector<24x8xf32>
    %403 = tpu.matmul %402, %391, %cst_134 {dimension_numbers = #tpu.dot_dimension_numbers<[1], [0], [0], [1], [0, 0, 1, 1], [], []>} : vector<24x24xbf16>, vector<24x8xbf16>, vector<24x8xf32> -> vector<24x8xf32>
    %404 = tpu.reciprocal %401 {approx = true} : vector<24x1xf32> -> vector<24x1xf32>
    %405 = vector.broadcast %404 : vector<24x1xf32> to vector<24x8xf32>
    %406 = arith.mulf %403, %405 : vector<24x8xf32>
    %407 = vector.extract_strided_slice %322 {offsets = [0, 32], sizes = [24, 8], strides = [1, 1]} : vector<24x192xf32> to vector<24x8xf32>
    %408 = arith.truncf %407 : vector<24x8xf32> to vector<24x8xbf16>
    %409 = vector.extract_strided_slice %322 {offsets = [0, 96], sizes = [24, 8], strides = [1, 1]} : vector<24x192xf32> to vector<24x8xf32>
    %410 = arith.truncf %409 : vector<24x8xf32> to vector<24x8xbf16>
    %411 = vector.extract_strided_slice %322 {offsets = [0, 160], sizes = [24, 8], strides = [1, 1]} : vector<24x192xf32> to vector<24x8xf32>
    %412 = arith.truncf %411 : vector<24x8xf32> to vector<24x8xbf16>
    "tpu.trace_start"() <{level = 10 : i32, message = "qd,kd->qk"}> : () -> ()
    %cst_135 = arith.constant dense<0.000000e+00> : vector<24x24xf32>
    %413 = tpu.matmul %408, %410, %cst_135 {dimension_numbers = #tpu.dot_dimension_numbers<[1], [1], [0], [0], [0, 0, 1, 0], [], []>} : vector<24x8xbf16>, vector<24x8xbf16>, vector<24x24xf32> -> vector<24x24xf32>
    "tpu.trace_stop"() : () -> ()
    %414 = vector.broadcast %10 : vector<1x24xf32> to vector<24x24xf32>
    %415 = arith.addf %413, %414 : vector<24x24xf32>
    %cst_136 = arith.constant dense<0xFF800000> : vector<24xf32>
    %416 = vector.multi_reduction <maximumf>, %415, %cst_136 [1] : vector<24x24xf32> to vector<24xf32>
    %417 = vector.shape_cast %416 : vector<24xf32> to vector<24x1xf32>
    %418 = vector.broadcast %417 : vector<24x1xf32> to vector<24x24xf32>
    %419 = arith.subf %415, %418 : vector<24x24xf32>
    %420 = math.exp %419 : vector<24x24xf32>
    %cst_137 = arith.constant dense<0.000000e+00> : vector<24xf32>
    %421 = vector.multi_reduction <add>, %420, %cst_137 [1] : vector<24x24xf32> to vector<24xf32>
    %422 = vector.shape_cast %421 : vector<24xf32> to vector<24x1xf32>
    %423 = arith.truncf %420 : vector<24x24xf32> to vector<24x24xbf16>
    %cst_138 = arith.constant dense<0.000000e+00> : vector<24x8xf32>
    %424 = tpu.matmul %423, %412, %cst_138 {dimension_numbers = #tpu.dot_dimension_numbers<[1], [0], [0], [1], [0, 0, 1, 1], [], []>} : vector<24x24xbf16>, vector<24x8xbf16>, vector<24x8xf32> -> vector<24x8xf32>
    %425 = tpu.reciprocal %422 {approx = true} : vector<24x1xf32> -> vector<24x1xf32>
    %426 = vector.broadcast %425 : vector<24x1xf32> to vector<24x8xf32>
    %427 = arith.mulf %424, %426 : vector<24x8xf32>
    %428 = vector.extract_strided_slice %322 {offsets = [0, 40], sizes = [24, 8], strides = [1, 1]} : vector<24x192xf32> to vector<24x8xf32>
    %429 = arith.truncf %428 : vector<24x8xf32> to vector<24x8xbf16>
    %430 = vector.extract_strided_slice %322 {offsets = [0, 104], sizes = [24, 8], strides = [1, 1]} : vector<24x192xf32> to vector<24x8xf32>
    %431 = arith.truncf %430 : vector<24x8xf32> to vector<24x8xbf16>
    %432 = vector.extract_strided_slice %322 {offsets = [0, 168], sizes = [24, 8], strides = [1, 1]} : vector<24x192xf32> to vector<24x8xf32>
    %433 = arith.truncf %432 : vector<24x8xf32> to vector<24x8xbf16>
    "tpu.trace_start"() <{level = 10 : i32, message = "qd,kd->qk"}> : () -> ()
    %cst_139 = arith.constant dense<0.000000e+00> : vector<24x24xf32>
    %434 = tpu.matmul %429, %431, %cst_139 {dimension_numbers = #tpu.dot_dimension_numbers<[1], [1], [0], [0], [0, 0, 1, 0], [], []>} : vector<24x8xbf16>, vector<24x8xbf16>, vector<24x24xf32> -> vector<24x24xf32>
    "tpu.trace_stop"() : () -> ()
    %435 = vector.broadcast %10 : vector<1x24xf32> to vector<24x24xf32>
    %436 = arith.addf %434, %435 : vector<24x24xf32>
    %cst_140 = arith.constant dense<0xFF800000> : vector<24xf32>
    %437 = vector.multi_reduction <maximumf>, %436, %cst_140 [1] : vector<24x24xf32> to vector<24xf32>
    %438 = vector.shape_cast %437 : vector<24xf32> to vector<24x1xf32>
    %439 = vector.broadcast %438 : vector<24x1xf32> to vector<24x24xf32>
    %440 = arith.subf %436, %439 : vector<24x24xf32>
    %441 = math.exp %440 : vector<24x24xf32>
    %cst_141 = arith.constant dense<0.000000e+00> : vector<24xf32>
    %442 = vector.multi_reduction <add>, %441, %cst_141 [1] : vector<24x24xf32> to vector<24xf32>
    %443 = vector.shape_cast %442 : vector<24xf32> to vector<24x1xf32>
    %444 = arith.truncf %441 : vector<24x24xf32> to vector<24x24xbf16>
    %cst_142 = arith.constant dense<0.000000e+00> : vector<24x8xf32>
    %445 = tpu.matmul %444, %433, %cst_142 {dimension_numbers = #tpu.dot_dimension_numbers<[1], [0], [0], [1], [0, 0, 1, 1], [], []>} : vector<24x24xbf16>, vector<24x8xbf16>, vector<24x8xf32> -> vector<24x8xf32>
    %446 = tpu.reciprocal %443 {approx = true} : vector<24x1xf32> -> vector<24x1xf32>
    %447 = vector.broadcast %446 : vector<24x1xf32> to vector<24x8xf32>
    %448 = arith.mulf %445, %447 : vector<24x8xf32>
    %449 = vector.extract_strided_slice %322 {offsets = [0, 48], sizes = [24, 8], strides = [1, 1]} : vector<24x192xf32> to vector<24x8xf32>
    %450 = arith.truncf %449 : vector<24x8xf32> to vector<24x8xbf16>
    %451 = vector.extract_strided_slice %322 {offsets = [0, 112], sizes = [24, 8], strides = [1, 1]} : vector<24x192xf32> to vector<24x8xf32>
    %452 = arith.truncf %451 : vector<24x8xf32> to vector<24x8xbf16>
    %453 = vector.extract_strided_slice %322 {offsets = [0, 176], sizes = [24, 8], strides = [1, 1]} : vector<24x192xf32> to vector<24x8xf32>
    %454 = arith.truncf %453 : vector<24x8xf32> to vector<24x8xbf16>
    "tpu.trace_start"() <{level = 10 : i32, message = "qd,kd->qk"}> : () -> ()
    %cst_143 = arith.constant dense<0.000000e+00> : vector<24x24xf32>
    %455 = tpu.matmul %450, %452, %cst_143 {dimension_numbers = #tpu.dot_dimension_numbers<[1], [1], [0], [0], [0, 0, 1, 0], [], []>} : vector<24x8xbf16>, vector<24x8xbf16>, vector<24x24xf32> -> vector<24x24xf32>
    "tpu.trace_stop"() : () -> ()
    %456 = vector.broadcast %10 : vector<1x24xf32> to vector<24x24xf32>
    %457 = arith.addf %455, %456 : vector<24x24xf32>
    %cst_144 = arith.constant dense<0xFF800000> : vector<24xf32>
    %458 = vector.multi_reduction <maximumf>, %457, %cst_144 [1] : vector<24x24xf32> to vector<24xf32>
    %459 = vector.shape_cast %458 : vector<24xf32> to vector<24x1xf32>
    %460 = vector.broadcast %459 : vector<24x1xf32> to vector<24x24xf32>
    %461 = arith.subf %457, %460 : vector<24x24xf32>
    %462 = math.exp %461 : vector<24x24xf32>
    %cst_145 = arith.constant dense<0.000000e+00> : vector<24xf32>
    %463 = vector.multi_reduction <add>, %462, %cst_145 [1] : vector<24x24xf32> to vector<24xf32>
    %464 = vector.shape_cast %463 : vector<24xf32> to vector<24x1xf32>
    %465 = arith.truncf %462 : vector<24x24xf32> to vector<24x24xbf16>
    %cst_146 = arith.constant dense<0.000000e+00> : vector<24x8xf32>
    %466 = tpu.matmul %465, %454, %cst_146 {dimension_numbers = #tpu.dot_dimension_numbers<[1], [0], [0], [1], [0, 0, 1, 1], [], []>} : vector<24x24xbf16>, vector<24x8xbf16>, vector<24x8xf32> -> vector<24x8xf32>
    %467 = tpu.reciprocal %464 {approx = true} : vector<24x1xf32> -> vector<24x1xf32>
    %468 = vector.broadcast %467 : vector<24x1xf32> to vector<24x8xf32>
    %469 = arith.mulf %466, %468 : vector<24x8xf32>
    %470 = vector.extract_strided_slice %322 {offsets = [0, 56], sizes = [24, 8], strides = [1, 1]} : vector<24x192xf32> to vector<24x8xf32>
    %471 = arith.truncf %470 : vector<24x8xf32> to vector<24x8xbf16>
    %472 = vector.extract_strided_slice %322 {offsets = [0, 120], sizes = [24, 8], strides = [1, 1]} : vector<24x192xf32> to vector<24x8xf32>
    %473 = arith.truncf %472 : vector<24x8xf32> to vector<24x8xbf16>
    %474 = vector.extract_strided_slice %322 {offsets = [0, 184], sizes = [24, 8], strides = [1, 1]} : vector<24x192xf32> to vector<24x8xf32>
    %475 = arith.truncf %474 : vector<24x8xf32> to vector<24x8xbf16>
    "tpu.trace_start"() <{level = 10 : i32, message = "qd,kd->qk"}> : () -> ()
    %cst_147 = arith.constant dense<0.000000e+00> : vector<24x24xf32>
    %476 = tpu.matmul %471, %473, %cst_147 {dimension_numbers = #tpu.dot_dimension_numbers<[1], [1], [0], [0], [0, 0, 1, 0], [], []>} : vector<24x8xbf16>, vector<24x8xbf16>, vector<24x24xf32> -> vector<24x24xf32>
    "tpu.trace_stop"() : () -> ()
    %477 = vector.broadcast %10 : vector<1x24xf32> to vector<24x24xf32>
    %478 = arith.addf %476, %477 : vector<24x24xf32>
    %cst_148 = arith.constant dense<0xFF800000> : vector<24xf32>
    %479 = vector.multi_reduction <maximumf>, %478, %cst_148 [1] : vector<24x24xf32> to vector<24xf32>
    %480 = vector.shape_cast %479 : vector<24xf32> to vector<24x1xf32>
    %481 = vector.broadcast %480 : vector<24x1xf32> to vector<24x24xf32>
    %482 = arith.subf %478, %481 : vector<24x24xf32>
    %483 = math.exp %482 : vector<24x24xf32>
    %cst_149 = arith.constant dense<0.000000e+00> : vector<24xf32>
    %484 = vector.multi_reduction <add>, %483, %cst_149 [1] : vector<24x24xf32> to vector<24xf32>
    %485 = vector.shape_cast %484 : vector<24xf32> to vector<24x1xf32>
    %486 = arith.truncf %483 : vector<24x24xf32> to vector<24x24xbf16>
    %cst_150 = arith.constant dense<0.000000e+00> : vector<24x8xf32>
    %487 = tpu.matmul %486, %475, %cst_150 {dimension_numbers = #tpu.dot_dimension_numbers<[1], [0], [0], [1], [0, 0, 1, 1], [], []>} : vector<24x24xbf16>, vector<24x8xbf16>, vector<24x8xf32> -> vector<24x8xf32>
    %488 = tpu.reciprocal %485 {approx = true} : vector<24x1xf32> -> vector<24x1xf32>
    %489 = vector.broadcast %488 : vector<24x1xf32> to vector<24x8xf32>
    %490 = arith.mulf %487, %489 : vector<24x8xf32>
    %491 = tpu.concatenate %343, %364, %385, %406, %427, %448, %469, %490 in 1 : vector<24x8xf32>, vector<24x8xf32>, vector<24x8xf32>, vector<24x8xf32>, vector<24x8xf32>, vector<24x8xf32>, vector<24x8xf32>, vector<24x8xf32> -> vector<24x64xf32>
    %492 = arith.truncf %491 : vector<24x64xf32> to vector<24x64xbf16>
    %c1_151 = arith.constant 1 : index
    %c0_152 = arith.constant 0 : index
    %c0_153 = arith.constant 0 : index
    %493 = vector.load %arg5[%c1_151, %c0_152, %c0_153] : memref<2x64x64xbf16, #tpu.memory_space<vmem>>, vector<1x64x64xbf16>
    %494 = vector.shape_cast %493 : vector<1x64x64xbf16> to vector<64x64xbf16>
    %cst_154 = arith.constant dense<0.000000e+00> : vector<24x64xf32>
    %495 = tpu.matmul %492, %494, %cst_154 {dimension_numbers = #tpu.dot_dimension_numbers<[1], [0], [0], [1], [0, 0, 1, 1], [], []>} : vector<24x64xbf16>, vector<64x64xbf16>, vector<24x64xf32> -> vector<24x64xf32>
    %496 = arith.addf %278, %495 : vector<24x64xf32>
    %497 = vector.broadcast %292 : vector<1x64xf32> to vector<24x64xf32>
    %498 = arith.addf %496, %497 : vector<24x64xf32>
    %cst_155 = arith.constant dense<0.000000e+00> : vector<24xf32>
    %499 = vector.multi_reduction <add>, %498, %cst_155 [1] : vector<24x64xf32> to vector<24xf32>
    %500 = vector.shape_cast %499 : vector<24xf32> to vector<24x1xf32>
    %cst_156 = arith.constant 6.400000e+01 : f32
    %501 = vector.broadcast %cst_156 : f32 to vector<24x1xf32>
    %502 = arith.divf %500, %501 : vector<24x1xf32>
    %503 = vector.broadcast %502 : vector<24x1xf32> to vector<24x64xf32>
    %504 = arith.subf %498, %503 : vector<24x64xf32>
    %505 = arith.mulf %504, %504 : vector<24x64xf32>
    %cst_157 = arith.constant dense<0.000000e+00> : vector<24xf32>
    %506 = vector.multi_reduction <add>, %505, %cst_157 [1] : vector<24x64xf32> to vector<24xf32>
    %507 = vector.shape_cast %506 : vector<24xf32> to vector<24x1xf32>
    %cst_158 = arith.constant 6.400000e+01 : f32
    %508 = vector.broadcast %cst_158 : f32 to vector<24x1xf32>
    %509 = arith.divf %507, %508 : vector<24x1xf32>
    %510 = vector.broadcast %502 : vector<24x1xf32> to vector<24x64xf32>
    %511 = arith.subf %498, %510 : vector<24x64xf32>
    %cst_159 = arith.constant 9.99999974E-6 : f32
    %512 = vector.broadcast %cst_159 : f32 to vector<24x1xf32>
    %513 = arith.addf %509, %512 : vector<24x1xf32>
    %514 = math.rsqrt %513 : vector<24x1xf32>
    %515 = vector.broadcast %514 : vector<24x1xf32> to vector<24x64xf32>
    %516 = arith.mulf %511, %515 : vector<24x64xf32>
    %517 = vector.broadcast %288 : vector<1x64xf32> to vector<24x64xf32>
    %518 = arith.mulf %516, %517 : vector<24x64xf32>
    %519 = vector.broadcast %290 : vector<1x64xf32> to vector<24x64xf32>
    %520 = arith.addf %518, %519 : vector<24x64xf32>
    %521 = arith.truncf %520 : vector<24x64xf32> to vector<24x64xbf16>
    %c1_160 = arith.constant 1 : index
    %c0_161 = arith.constant 0 : index
    %c0_162 = arith.constant 0 : index
    %522 = vector.load %arg6[%c1_160, %c0_161, %c0_162] : memref<2x64x256xbf16, #tpu.memory_space<vmem>>, vector<1x64x256xbf16>
    %523 = vector.shape_cast %522 : vector<1x64x256xbf16> to vector<64x256xbf16>
    %cst_163 = arith.constant dense<0.000000e+00> : vector<24x256xf32>
    %524 = tpu.matmul %521, %523, %cst_163 {dimension_numbers = #tpu.dot_dimension_numbers<[1], [0], [0], [1], [0, 0, 1, 1], [], []>} : vector<24x64xbf16>, vector<64x256xbf16>, vector<24x256xf32> -> vector<24x256xf32>
    %525 = vector.broadcast %282 : vector<1x256xf32> to vector<24x256xf32>
    %526 = arith.addf %524, %525 : vector<24x256xf32>
    %527 = arith.mulf %526, %526 : vector<24x256xf32>
    %528 = arith.mulf %526, %527 : vector<24x256xf32>
    %cst_164 = arith.constant 4.471500e-02 : f32
    %529 = vector.broadcast %cst_164 : f32 to vector<24x256xf32>
    %530 = arith.mulf %529, %528 : vector<24x256xf32>
    %531 = arith.addf %526, %530 : vector<24x256xf32>
    %cst_165 = arith.constant 0.797884583 : f32
    %532 = vector.broadcast %cst_165 : f32 to vector<24x256xf32>
    %533 = arith.mulf %532, %531 : vector<24x256xf32>
    %534 = math.tanh %533 : vector<24x256xf32>
    %cst_166 = arith.constant 1.000000e+00 : f32
    %535 = vector.broadcast %cst_166 : f32 to vector<24x256xf32>
    %536 = arith.addf %535, %534 : vector<24x256xf32>
    %cst_167 = arith.constant 5.000000e-01 : f32
    %537 = vector.broadcast %cst_167 : f32 to vector<24x256xf32>
    %538 = arith.mulf %537, %536 : vector<24x256xf32>
    %539 = arith.mulf %526, %538 : vector<24x256xf32>
    %540 = arith.truncf %539 : vector<24x256xf32> to vector<24x256xbf16>
    %c1_168 = arith.constant 1 : index
    %c0_169 = arith.constant 0 : index
    %c0_170 = arith.constant 0 : index
    %541 = vector.load %arg7[%c1_168, %c0_169, %c0_170] : memref<2x256x64xbf16, #tpu.memory_space<vmem>>, vector<1x256x64xbf16>
    %542 = vector.shape_cast %541 : vector<1x256x64xbf16> to vector<256x64xbf16>
    %cst_171 = arith.constant dense<0.000000e+00> : vector<24x64xf32>
    %543 = tpu.matmul %540, %542, %cst_171 {dimension_numbers = #tpu.dot_dimension_numbers<[1], [0], [0], [1], [0, 0, 1, 1], [], []>} : vector<24x256xbf16>, vector<256x64xbf16>, vector<24x64xf32> -> vector<24x64xf32>
    %544 = arith.addf %498, %543 : vector<24x64xf32>
    %545 = vector.broadcast %294 : vector<1x64xf32> to vector<24x64xf32>
    %546 = arith.addf %544, %545 : vector<24x64xf32>
    %547 = vector.extract_strided_slice %546 {offsets = [0, 0], sizes = [8, 64], strides = [1, 1]} : vector<24x64xf32> to vector<8x64xf32>
    %548 = arith.truncf %547 : vector<8x64xf32> to vector<8x64xbf16>
    %c0_172 = arith.constant 0 : index
    %c0_173 = arith.constant 0 : index
    %549 = vector.load %arg9[%c0_172, %c0_173] : memref<64x128xbf16, #tpu.memory_space<vmem>>, vector<64x128xbf16>
    %cst_174 = arith.constant dense<0.000000e+00> : vector<8x128xf32>
    %550 = tpu.matmul %548, %549, %cst_174 {dimension_numbers = #tpu.dot_dimension_numbers<[1], [0], [0], [1], [0, 0, 1, 1], [], []>} : vector<8x64xbf16>, vector<64x128xbf16>, vector<8x128xf32> -> vector<8x128xf32>
    %c0_175 = arith.constant 0 : index
    %c0_176 = arith.constant 0 : index
    %551 = vector.load %arg10[%c0_175, %c0_176] : memref<1x128xf32, #tpu.memory_space<vmem>>, vector<1x128xf32>
    %552 = vector.broadcast %551 : vector<1x128xf32> to vector<8x128xf32>
    %553 = arith.addf %550, %552 : vector<8x128xf32>
    %c0_177 = arith.constant 0 : index
    %c0_178 = arith.constant 0 : index
    %554 = vector.load %arg11[%c0_177, %c0_178] : memref<8x128xf32, #tpu.memory_space<vmem>>, vector<8x128xf32>
    tpu.vector_store %arg11[%c0_177, %c0_178], %553 {strides = array<i32>} : memref<8x128xf32, #tpu.memory_space<vmem>>, vector<8x128xf32>,
    return
  }
  func.func @transform_0(%arg0: i32) -> (i32, i32) {
    %c0_i32 = arith.constant 0 : i32
    %c0_i32_0 = arith.constant 0 : i32
    return %arg0, %c0_i32 : i32, i32
  }
  func.func @transform_1(%arg0: i32) -> (i32, i32) {
    %c0_i32 = arith.constant 0 : i32
    %c0_i32_0 = arith.constant 0 : i32
    %c0_i32_1 = arith.constant 0 : i32
    return %c0_i32, %c0_i32_0 : i32, i32
  }
  func.func @transform_2(%arg0: i32) -> (i32, i32) {
    %c0_i32 = arith.constant 0 : i32
    %c0_i32_0 = arith.constant 0 : i32
    %c0_i32_1 = arith.constant 0 : i32
    return %c0_i32, %c0_i32_0 : i32, i32
  }
  func.func @transform_3(%arg0: i32) -> (i32, i32, i32) {
    %c0_i32 = arith.constant 0 : i32
    %c0_i32_0 = arith.constant 0 : i32
    %c0_i32_1 = arith.constant 0 : i32
    %c0_i32_2 = arith.constant 0 : i32
    return %c0_i32, %c0_i32_0, %c0_i32_1 : i32, i32, i32
  }
  func.func @transform_4(%arg0: i32) -> (i32, i32, i32) {
    %c0_i32 = arith.constant 0 : i32
    %c0_i32_0 = arith.constant 0 : i32
    %c0_i32_1 = arith.constant 0 : i32
    %c0_i32_2 = arith.constant 0 : i32
    return %c0_i32, %c0_i32_0, %c0_i32_1 : i32, i32, i32
  }
  func.func @transform_5(%arg0: i32) -> (i32, i32, i32) {
    %c0_i32 = arith.constant 0 : i32
    %c0_i32_0 = arith.constant 0 : i32
    %c0_i32_1 = arith.constant 0 : i32
    %c0_i32_2 = arith.constant 0 : i32
    return %c0_i32, %c0_i32_0, %c0_i32_1 : i32, i32, i32
  }
  func.func @transform_6(%arg0: i32) -> (i32, i32, i32) {
    %c0_i32 = arith.constant 0 : i32
    %c0_i32_0 = arith.constant 0 : i32
    %c0_i32_1 = arith.constant 0 : i32
    %c0_i32_2 = arith.constant 0 : i32
    return %c0_i32, %c0_i32_0, %c0_i32_1 : i32, i32, i32
  }
  func.func @transform_7(%arg0: i32) -> (i32, i32, i32) {
    %c0_i32 = arith.constant 0 : i32
    %c0_i32_0 = arith.constant 0 : i32
    %c0_i32_1 = arith.constant 0 : i32
    %c0_i32_2 = arith.constant 0 : i32
    return %c0_i32, %c0_i32_0, %c0_i32_1 : i32, i32, i32
  }
  func.func @transform_8(%arg0: i32) -> (i32, i32) {
    %c0_i32 = arith.constant 0 : i32
    %c0_i32_0 = arith.constant 0 : i32
    %c0_i32_1 = arith.constant 0 : i32
    return %c0_i32, %c0_i32_0 : i32, i32
  }
  func.func @transform_9(%arg0: i32) -> (i32, i32) {
    %c0_i32 = arith.constant 0 : i32
    %c0_i32_0 = arith.constant 0 : i32
    %c0_i32_1 = arith.constant 0 : i32
    return %c0_i32, %c0_i32_0 : i32, i32
  }
  func.func @transform_10(%arg0: i32) -> (i32, i32) {
    %c0_i32 = arith.constant 0 : i32
    %c0_i32_0 = arith.constant 0 : i32
    return %arg0, %c0_i32 : i32, i32
  }
}

</mosaic_0001>

<llo_original>
// kernel: trans_med_forward.1
$region0: #{trans_med_forward.1}
  #allocation0 [shape = 'u32[]', space=smem, size = 0x4, offset = 0x4, fixed_abs, tag = 'smem constant byte address 0x4 - core index']
  #allocation1 [shape = 'u32[144,128]{1,0:T(1,128)}', space=vmem, size = 0x12000, scoped, tag = 'internal scratch']
  %s0 = inlined_call_operand.vmem [shape: bf16[48,192], index: 0, kind: input, shape index: {}]
  %s1 = inlined_call_operand.vmem [shape: bf16[192,64], index: 1, kind: input, shape index: {}]
  %s2 = inlined_call_operand.vmem [shape: f32[24,64], index: 2, kind: input, shape index: {}]
  %s3 = inlined_call_operand.vmem [shape: bf16[2,64,192], index: 3, kind: input, shape index: {}]
  %s4 = inlined_call_operand.vmem [shape: bf16[2,64,64], index: 4, kind: input, shape index: {}]
  %s5 = inlined_call_operand.vmem [shape: bf16[2,64,256], index: 5, kind: input, shape index: {}]
  %s6 = inlined_call_operand.vmem [shape: bf16[2,256,64], index: 6, kind: input, shape index: {}]
  %s7 = inlined_call_operand.vmem [shape: f32[2,8,256], index: 7, kind: input, shape index: {}]
  %s8 = inlined_call_operand.vmem [shape: bf16[64,128], index: 8, kind: input, shape index: {}]
  %s9 = inlined_call_operand.vmem [shape: f32[1,128], index: 9, kind: input, shape index: {}]
  %s10 = inlined_call_operand.vmem [shape: f32[16,128], index: 10, kind: output, shape index: {}]
  %s11 = sld [smem:[#allocation0]]
  $region73: #{trans_med_forward.1} parent=0
    _
  %s13 = ssub.s32 1, %s11
  %s14 = scalar_select 0, %s13, %s11
  loop: start=0, step=1, limit=4
  $region2: #{trans_med_forward.1} parent=0 // loop_pre_header
    _
  $region3: #{trans_med_forward.1} parent=0 // loop_header
    %s16 = sphi 0, %s20
    %p17 = scmp.ge.s32.totalorder %s16, 4
    %s26 = sphi 0, %s28
    %s29 = sphi 0, %s26
    %s30 = sphi 0, %s29
    %s46 = sphi 0, %s30
    %s50 = sphi 0, %s50
    %s52 = sphi 0, %s50
    %s53 = sphi 0, %s52
    %s67 = sphi 0, %s53
    %s71 = sphi 0, %s71
    %s73 = sphi 0, %s71
    %s74 = sphi 0, %s73
    %s88 = sphi 0, %s74
    %s92 = sphi 0, %s92
    %s94 = sphi 0, %s92
    %s95 = sphi 0, %s94
    %s109 = sphi 0, %s95
    %s113 = sphi 0, %s113
    %s115 = sphi 0, %s113
    %s116 = sphi 0, %s115
    %s130 = sphi 0, %s116
    %s134 = sphi 0, %s134
    %s136 = sphi 0, %s134
    %s137 = sphi 0, %s136
    %s151 = sphi 0, %s137
    %s155 = sphi 0, %s155
    %s157 = sphi 0, %s155
    %s158 = sphi 0, %s157
    %s172 = sphi 0, %s158
    %s176 = sphi 0, %s176
    %s178 = sphi 0, %s176
    %s179 = sphi 0, %s178
    %s193 = sphi 0, %s179
    %s197 = sphi 0, %s197
    %s199 = sphi 0, %s197
    %s200 = sphi 0, %s199
    %s214 = sphi 0, %s200
    %s218 = sphi 0, %s218
    %s220 = sphi 0, %s218
    %s221 = sphi 0, %s220
    %s235 = sphi 0, %s221
    %s241 = sphi 0, %s243
    %s244 = sphi 0, %s241
    %s245 = sphi 0, %s244
    %s261 = sphi 0, %s245
  $region4: #{trans_med_forward.1} parent=0 // loop_header_branch
    %19 = sbr.rel (%p17) target = $region8
  $region5: #{trans_med_forward.1} parent=0 // loop_body
    %s21 = ssub.s32 %s16, 1
    %s22 = ssub.s32 %s16, 2
    %s23 = sadd.s32 %s16, 1
    %s24 = ssub.s32 %s16, %s23
    %p25 = scmp.eq.s32.totalorder %s24, 0
    %s27 = sadd.s32 %s26, 1
    %s28 = scalar_select %p25, %s26, %s27
    %p31 = pneg %p25
    %p32 = scmp.eq.s32.totalorder %s16, 1
    %p33 = por %p31, %p32
    %p34 = scmp.ne.s32.totalorder %s26, %s29
    %p35 = scmp.eq.s32.totalorder %s16, 0
    %p36 = por %p34, %p35
    %p37 = scmp.ne.s32.totalorder %s26, %s29
    %p38 = scmp.eq.s32.totalorder %s21, 1
    %p39 = por %p37, %p38
    %p40 = scmp.ne.s32.totalorder %s29, %s30
    %p41 = scmp.eq.s32.totalorder %s21, 0
    %p42 = por %p40, %p41
    %p43 = scmp.ne.s32.totalorder %s29, %s30
    %p44 = scmp.eq.s32.totalorder %s22, 1
    %p45 = por %p43, %p44
    %p47 = scmp.ne.s32.totalorder %s30, %s46
    %p48 = scmp.eq.s32.totalorder %s22, 0
    %p49 = por %p47, %p48
    %s51 = sadd.s32 %s50, 1
    %p54 = scmp.eq.s32.totalorder %s16, 1
    %p55 = scmp.ne.s32.totalorder %s50, %s52
    %p56 = scmp.eq.s32.totalorder %s16, 0
    %p57 = por %p55, %p56
    %p58 = scmp.ne.s32.totalorder %s50, %s52
    %p59 = scmp.eq.s32.totalorder %s21, 1
    %p60 = por %p58, %p59
    %p61 = scmp.ne.s32.totalorder %s52, %s53
    %p62 = scmp.eq.s32.totalorder %s21, 0
    %p63 = por %p61, %p62
    %p64 = scmp.ne.s32.totalorder %s52, %s53
    %p65 = scmp.eq.s32.totalorder %s22, 1
    %p66 = por %p64, %p65
    %p68 = scmp.ne.s32.totalorder %s53, %s67
    %p69 = scmp.eq.s32.totalorder %s22, 0
    %p70 = por %p68, %p69
    %s72 = sadd.s32 %s71, 1
    %p75 = scmp.eq.s32.totalorder %s16, 1
    %p76 = scmp.ne.s32.totalorder %s71, %s73
    %p77 = scmp.eq.s32.totalorder %s16, 0
    %p78 = por %p76, %p77
    %p79 = scmp.ne.s32.totalorder %s71, %s73
    %p80 = scmp.eq.s32.totalorder %s21, 1
    %p81 = por %p79, %p80
    %p82 = scmp.ne.s32.totalorder %s73, %s74
    %p83 = scmp.eq.s32.totalorder %s21, 0
    %p84 = por %p82, %p83
    %p85 = scmp.ne.s32.totalorder %s73, %s74
    %p86 = scmp.eq.s32.totalorder %s22, 1
    %p87 = por %p85, %p86
    %p89 = scmp.ne.s32.totalorder %s74, %s88
    %p90 = scmp.eq.s32.totalorder %s22, 0
    %p91 = por %p89, %p90
    %s93 = sadd.s32 %s92, 1
    %p96 = scmp.eq.s32.totalorder %s16, 1
    %p97 = scmp.ne.s32.totalorder %s92, %s94
    %p98 = scmp.eq.s32.totalorder %s16, 0
    %p99 = por %p97, %p98
    %p100 = scmp.ne.s32.totalorder %s92, %s94
    %p101 = scmp.eq.s32.totalorder %s21, 1
    %p102 = por %p100, %p101
    %p103 = scmp.ne.s32.totalorder %s94, %s95
    %p104 = scmp.eq.s32.totalorder %s21, 0
    %p105 = por %p103, %p104
    %p106 = scmp.ne.s32.totalorder %s94, %s95
    %p107 = scmp.eq.s32.totalorder %s22, 1
    %p108 = por %p106, %p107
    %p110 = scmp.ne.s32.totalorder %s95, %s109
    %p111 = scmp.eq.s32.totalorder %s22, 0
    %p112 = por %p110, %p111
    %s114 = sadd.s32 %s113, 1
    %p117 = scmp.eq.s32.totalorder %s16, 1
    %p118 = scmp.ne.s32.totalorder %s113, %s115
    %p119 = scmp.eq.s32.totalorder %s16, 0
    %p120 = por %p118, %p119
    %p121 = scmp.ne.s32.totalorder %s113, %s115
    %p122 = scmp.eq.s32.totalorder %s21, 1
    %p123 = por %p121, %p122
    %p124 = scmp.ne.s32.totalorder %s115, %s116
    %p125 = scmp.eq.s32.totalorder %s21, 0
    %p126 = por %p124, %p125
    %p127 = scmp.ne.s32.totalorder %s115, %s116
    %p128 = scmp.eq.s32.totalorder %s22, 1
    %p129 = por %p127, %p128
    %p131 = scmp.ne.s32.totalorder %s116, %s130
    %p132 = scmp.eq.s32.totalorder %s22, 0
    %p133 = por %p131, %p132
    %s135 = sadd.s32 %s134, 1
    %p138 = scmp.eq.s32.totalorder %s16, 1
    %p139 = scmp.ne.s32.totalorder %s134, %s136
    %p140 = scmp.eq.s32.totalorder %s16, 0
    %p141 = por %p139, %p140
    %p142 = scmp.ne.s32.totalorder %s134, %s136
    %p143 = scmp.eq.s32.totalorder %s21, 1
    %p144 = por %p142, %p143
    %p145 = scmp.ne.s32.totalorder %s136, %s137
    %p146 = scmp.eq.s32.totalorder %s21, 0
    %p147 = por %p145, %p146
    %p148 = scmp.ne.s32.totalorder %s136, %s137
    %p149 = scmp.eq.s32.totalorder %s22, 1
    %p150 = por %p148, %p149
    %p152 = scmp.ne.s32.totalorder %s137, %s151
    %p153 = scmp.eq.s32.totalorder %s22, 0
    %p154 = por %p152, %p153
    %s156 = sadd.s32 %s155, 1
    %p159 = scmp.eq.s32.totalorder %s16, 1
    %p160 = scmp.ne.s32.totalorder %s155, %s157
    %p161 = scmp.eq.s32.totalorder %s16, 0
    %p162 = por %p160, %p161
    %p163 = scmp.ne.s32.totalorder %s155, %s157
    %p164 = scmp.eq.s32.totalorder %s21, 1
    %p165 = por %p163, %p164
    %p166 = scmp.ne.s32.totalorder %s157, %s158
    %p167 = scmp.eq.s32.totalorder %s21, 0
    %p168 = por %p166, %p167
    %p169 = scmp.ne.s32.totalorder %s157, %s158
    %p170 = scmp.eq.s32.totalorder %s22, 1
    %p171 = por %p169, %p170
    %p173 = scmp.ne.s32.totalorder %s158, %s172
    %p174 = scmp.eq.s32.totalorder %s22, 0
    %p175 = por %p173, %p174
    %s177 = sadd.s32 %s176, 1
    %p180 = scmp.eq.s32.totalorder %s16, 1
    %p181 = scmp.ne.s32.totalorder %s176, %s178
    %p182 = scmp.eq.s32.totalorder %s16, 0
    %p183 = por %p181, %p182
    %p184 = scmp.ne.s32.totalorder %s176, %s178
    %p185 = scmp.eq.s32.totalorder %s21, 1
    %p186 = por %p184, %p185
    %p187 = scmp.ne.s32.totalorder %s178, %s179
    %p188 = scmp.eq.s32.totalorder %s21, 0
    %p189 = por %p187, %p188
    %p190 = scmp.ne.s32.totalorder %s178, %s179
    %p191 = scmp.eq.s32.totalorder %s22, 1
    %p192 = por %p190, %p191
    %p194 = scmp.ne.s32.totalorder %s179, %s193
    %p195 = scmp.eq.s32.totalorder %s22, 0
    %p196 = por %p194, %p195
    %s198 = sadd.s32 %s197, 1
    %p201 = scmp.eq.s32.totalorder %s16, 1
    %p202 = scmp.ne.s32.totalorder %s197, %s199
    %p203 = scmp.eq.s32.totalorder %s16, 0
    %p204 = por %p202, %p203
    %p205 = scmp.ne.s32.totalorder %s197, %s199
    %p206 = scmp.eq.s32.totalorder %s21, 1
    %p207 = por %p205, %p206
    %p208 = scmp.ne.s32.totalorder %s199, %s200
    %p209 = scmp.eq.s32.totalorder %s21, 0
    %p210 = por %p208, %p209
    %p211 = scmp.ne.s32.totalorder %s199, %s200
    %p212 = scmp.eq.s32.totalorder %s22, 1
    %p213 = por %p211, %p212
    %p215 = scmp.ne.s32.totalorder %s200, %s214
    %p216 = scmp.eq.s32.totalorder %s22, 0
    %p217 = por %p215, %p216
    %s219 = sadd.s32 %s218, 1
    %p222 = scmp.eq.s32.totalorder %s16, 1
    %p223 = scmp.ne.s32.totalorder %s218, %s220
    %p224 = scmp.eq.s32.totalorder %s16, 0
    %p225 = por %p223, %p224
    %p226 = scmp.ne.s32.totalorder %s218, %s220
    %p227 = scmp.eq.s32.totalorder %s21, 1
    %p228 = por %p226, %p227
    %p229 = scmp.ne.s32.totalorder %s220, %s221
    %p230 = scmp.eq.s32.totalorder %s21, 0
    %p231 = por %p229, %p230
    %p232 = scmp.ne.s32.totalorder %s220, %s221
    %p233 = scmp.eq.s32.totalorder %s22, 1
    %p234 = por %p232, %p233
    %p236 = scmp.ne.s32.totalorder %s221, %s235
    %p237 = scmp.eq.s32.totalorder %s22, 0
    %p238 = por %p236, %p237
    %s239 = ssub.s32 %s16, %s23
    %p240 = scmp.eq.s32.totalorder %s239, 0
    %s242 = sadd.s32 %s241, 1
    %s243 = scalar_select %p240, %s241, %s242
    %p246 = pneg %p240
    %p247 = scmp.eq.s32.totalorder %s16, 1
    %p248 = por %p246, %p247
    %p249 = scmp.ne.s32.totalorder %s241, %s244
    %p250 = scmp.eq.s32.totalorder %s16, 0
    %p251 = por %p249, %p250
    %p252 = scmp.ne.s32.totalorder %s241, %s244
    %p253 = scmp.eq.s32.totalorder %s21, 1
    %p254 = por %p252, %p253
    %p255 = scmp.ne.s32.totalorder %s244, %s245
    %p256 = scmp.eq.s32.totalorder %s21, 0
    %p257 = por %p255, %p256
    %p258 = scmp.ne.s32.totalorder %s244, %s245
    %p259 = scmp.eq.s32.totalorder %s22, 1
    %p260 = por %p258, %p259
    %p262 = scmp.ne.s32.totalorder %s245, %s261
    %p263 = scmp.eq.s32.totalorder %s22, 0
    %p264 = por %p262, %p263
    %p265 = scmp.le.s32.totalorder 1, %s16
    %p266 = scmp.lt.s32.totalorder %s16, 3
    %p267 = pnand %p265, %p266
    %p268 = pneg %p267
    // Predicated region
    $region9: #{trans_med_forward.1} parent=5 // pred_check
      _
    $region10: #{trans_med_forward.1} parent=5 // pred_check_branch
      %270 = sbr.rel (%p267) target = $region12
    $region11: #{trans_med_forward.1} parent=5 // pred_region
      %s271 = ssub.s32 %s16, 1
      // Predicated region
      $region13: #{trans_med_forward.1} parent=11 // pred_check
        %p272 = pneg %p63
      $region14: #{trans_med_forward.1} parent=11 // pred_check_branch
        %274 = sbr.rel (%p272) target = $region16
      $region15: #{trans_med_forward.1} parent=11 // pred_region
        _
      $region16: #{trans_med_forward.1} parent=11 // pred_fallthru
        _
      // Predicated region
      $region17: #{trans_med_forward.1} parent=11 // pred_check
        %p275 = pneg %p84
      $region18: #{trans_med_forward.1} parent=11 // pred_check_branch
        %277 = sbr.rel (%p275) target = $region20
      $region19: #{trans_med_forward.1} parent=11 // pred_region
        _
      $region20: #{trans_med_forward.1} parent=11 // pred_fallthru
        _
      // Predicated region
      $region21: #{trans_med_forward.1} parent=11 // pred_check
        %p278 = pneg %p105
      $region22: #{trans_med_forward.1} parent=11 // pred_check_branch
        %280 = sbr.rel (%p278) target = $region24
      $region23: #{trans_med_forward.1} parent=11 // pred_region
        _
      $region24: #{trans_med_forward.1} parent=11 // pred_fallthru
        _
      // Predicated region
      $region25: #{trans_med_forward.1} parent=11 // pred_check
        %p281 = pneg %p126
      $region26: #{trans_med_forward.1} parent=11 // pred_check_branch
        %283 = sbr.rel (%p281) target = $region28
      $region27: #{trans_med_forward.1} parent=11 // pred_region
        _
      $region28: #{trans_med_forward.1} parent=11 // pred_fallthru
        _
      // Predicated region
      $region29: #{trans_med_forward.1} parent=11 // pred_check
        %p284 = pneg %p147
      $region30: #{trans_med_forward.1} parent=11 // pred_check_branch
        %286 = sbr.rel (%p284) target = $region32
      $region31: #{trans_med_forward.1} parent=11 // pred_region
        _
      $region32: #{trans_med_forward.1} parent=11 // pred_fallthru
        _
      // Predicated region
      $region33: #{trans_med_forward.1} parent=11 // pred_check
        %p287 = pneg %p168
      $region34: #{trans_med_forward.1} parent=11 // pred_check_branch
        %289 = sbr.rel (%p287) target = $region36
      $region35: #{trans_med_forward.1} parent=11 // pred_region
        _
      $region36: #{trans_med_forward.1} parent=11 // pred_fallthru
        _
      // Predicated region
      $region37: #{trans_med_forward.1} parent=11 // pred_check
        %p290 = pneg %p189
      $region38: #{trans_med_forward.1} parent=11 // pred_check_branch
        %292 = sbr.rel (%p290) target = $region40
      $region39: #{trans_med_forward.1} parent=11 // pred_region
        _
      $region40: #{trans_med_forward.1} parent=11 // pred_fallthru
        _
      // Predicated region
      $region41: #{trans_med_forward.1} parent=11 // pred_check
        %p293 = pneg %p210
      $region42: #{trans_med_forward.1} parent=11 // pred_check_branch
        %295 = sbr.rel (%p293) target = $region44
      $region43: #{trans_med_forward.1} parent=11 // pred_region
        _
      $region44: #{trans_med_forward.1} parent=11 // pred_fallthru
        _
      // Predicated region
      $region45: #{trans_med_forward.1} parent=11 // pred_check
        %p296 = pneg %p231
      $region46: #{trans_med_forward.1} parent=11 // pred_check_branch
        %298 = sbr.rel (%p296) target = $region48
      $region47: #{trans_med_forward.1} parent=11 // pred_region
        _
      $region48: #{trans_med_forward.1} parent=11 // pred_fallthru
        _
    $region12: #{trans_med_forward.1} parent=5 // pred_fallthru
      _
    %p299 = scmp.lt.s32.totalorder %s16, 2
    // Predicated region
    $region49: #{trans_med_forward.1} parent=5 // pred_check
      %p300 = pneg %p299
    $region50: #{trans_med_forward.1} parent=5 // pred_check_branch
      %302 = sbr.rel (%p300) target = $region52
    $region51: #{trans_med_forward.1} parent=5 // pred_region
      // Predicated region
      $region53: #{trans_med_forward.1} parent=51 // pred_check
        %p303 = pneg %p36
      $region54: #{trans_med_forward.1} parent=51 // pred_check_branch
        %305 = sbr.rel (%p303) target = $region56
      $region55: #{trans_med_forward.1} parent=51 // pred_region
        %s306 = smul.u32 3, %s16
        %p307 = scmp.lt.s32.totalorder %s306, 5
        %s308 = scalar_select %p307, %s306, 5
        %s309 = smul.addr %s308, 2
        %s310 = smul.addr %s309, 4
        %s311 = scalar_lea.vmem %s0, %s310
        %s312 = smul.u32 3, %s16
      $region56: #{trans_med_forward.1} parent=51 // pred_fallthru
        _
    $region52: #{trans_med_forward.1} parent=5 // pred_fallthru
      _
    %p313 = scmp.le.s32.totalorder 1, %s16
    %p314 = scmp.lt.s32.totalorder %s16, 3
    %p315 = pnand %p313, %p314
    %p316 = pneg %p315
    // Predicated region
    $region57: #{trans_med_forward.1} parent=5 // pred_check
      _
    $region58: #{trans_med_forward.1} parent=5 // pred_check_branch
      %318 = sbr.rel (%p315) target = $region60
    $region59: #{trans_med_forward.1} parent=5 // pred_region
      %s319 = ssub.s32 %s16, 1
      %s320 = smul.u32 3, %s21
      %p321 = scmp.lt.s32.totalorder %s320, 5
      %s322 = scalar_select %p321, %s320, 5
      %s323 = smul.addr %s322, 2
      %s324 = smul.addr %s323, 4
      %s325 = scalar_lea.vmem %s0, %s324
      %p326 = pneg %p42
      %p327 = pneg %p39
      %p328 = pneg %p63
      %p329 = pneg %p60
      %p330 = pneg %p84
      %p331 = pneg %p81
      %p332 = pneg %p105
      %p333 = pneg %p102
      %p334 = pneg %p126
      %p335 = pneg %p123
      %p336 = pneg %p147
      %p337 = pneg %p144
      %p338 = pneg %p168
      %p339 = pneg %p165
      %p340 = pneg %p189
      %p341 = pneg %p186
      %p342 = pneg %p210
      %p343 = pneg %p207
      %p344 = pneg %p231
      %p345 = pneg %p228
      %p346 = pneg %p257
      %p347 = pneg %p254
      %p348 = scmp.lt.s32.totalorder %s21, 1
      %s349 = scalar_select %p348, %s21, 1
      %s350 = smul.addr %s349, 8
      %s351 = scalar_lea.vmem %s10, %s350
      %s352 = smul.u32 3, %s21
      %p353 = scmp.lt.s32.totalorder %s352, 5
      %s354 = scalar_select %p353, %s352, 5
      %s355 = smul.addr %s354, 2
      %s356 = smul.addr %s355, 4
      %s357 = scalar_lea.vmem %s0, %s356
      %s358 = smul.u32 3, %s21
      %p359 = scmp.lt.s32.totalorder %s21, 1
      %s360 = scalar_select %p359, %s21, 1
      %s361 = smul.addr %s360, 8
      %s362 = scalar_lea.vmem %s10, %s361
      %v364 = vld [vmem:[%s357] sm:$0xff]
      %v365 = vld [vmem:[%s357 + $0x8] sm:$0xff]
      %v366 = vld [vmem:[%s357 + $0x10] sm:$0xff]
      %v367 = vld [vmem:[%s1] sm:$0xf]
      %v368 = vld [vmem:[%s1 + $0x4] sm:$0xf]
      %v369 = vld [vmem:[%s1 + $0x8] sm:$0xf]
      %v370 = vld [vmem:[%s1 + $0xc] sm:$0xf]
      %v371 = vld [vmem:[%s1 + $0x10] sm:$0xf]
      %v372 = vld [vmem:[%s1 + $0x14] sm:$0xf]
      %v373 = vld [vmem:[%s1 + $0x18] sm:$0xf]
      %v374 = vld [vmem:[%s1 + $0x1c] sm:$0xf]
      %v375 = vld [vmem:[%s1 + $0x20] sm:$0xf]
      %v376 = vld [vmem:[%s1 + $0x24] sm:$0xf]
      %v377 = vld [vmem:[%s1 + $0x28] sm:$0xf]
      %v378 = vld [vmem:[%s1 + $0x2c] sm:$0xf]
      %v379 = vld [vmem:[%s1 + $0x30] sm:$0xf]
      %v380 = vld [vmem:[%s1 + $0x34] sm:$0xf]
      %v381 = vld [vmem:[%s1 + $0x38] sm:$0xf]
      %v382 = vld [vmem:[%s1 + $0x3c] sm:$0xf]
      %v383 = vld [vmem:[%s1 + $0x40] sm:$0xf]
      %v384 = vld [vmem:[%s1 + $0x44] sm:$0xf]
      %v385 = vld [vmem:[%s1 + $0x48] sm:$0xf]
      %v386 = vld [vmem:[%s1 + $0x4c] sm:$0xf]
      %v387 = vld [vmem:[%s1 + $0x50] sm:$0xf]
      %v388 = vld [vmem:[%s1 + $0x54] sm:$0xf]
      %v389 = vld [vmem:[%s1 + $0x58] sm:$0xf]
      %v390 = vld [vmem:[%s1 + $0x5c] sm:$0xf]
      %v391 = vld [vmem:[%s2] sm:$0xff]
      %v392 = vld [vmem:[%s2 + $0x8] sm:$0xff]
      %v393 = vld [vmem:[%s2 + $0x10] sm:$0xff]
      %v397 = vunpack.c.l.b16 %v364
      %v398 = vunpack.c.h.b16 %v364
      %v399 = vunpack.c.l.b16 %v365
      %v400 = vunpack.c.h.b16 %v365
      %v401 = vunpack.c.l.b16 %v366
      %v402 = vunpack.c.h.b16 %v366
      %v403 = vpack.c.b16 %v399, %v397
      %v404 = vpack.c.b16 %v400, %v398
      %v405 = vpack.c.b16 %v401, %v401
      %v406 = vpack.c.b16 %v402, %v402
      %v433 = vunpack.c.l.b16 %v367
      %v434 = vunpack.c.l.b16 %v368
      %v435 = vunpack.c.l.b16 %v369
      %v436 = vunpack.c.l.b16 %v370
      %v437 = vunpack.c.l.b16 %v371
      %v438 = vunpack.c.l.b16 %v372
      %v439 = vunpack.c.l.b16 %v373
      %v440 = vunpack.c.l.b16 %v374
      %v441 = vunpack.c.l.b16 %v375
      %v442 = vunpack.c.l.b16 %v376
      %v443 = vunpack.c.l.b16 %v377
      %v444 = vunpack.c.l.b16 %v378
      %v445 = vunpack.c.l.b16 %v379
      %v446 = vunpack.c.l.b16 %v380
      %v447 = vunpack.c.l.b16 %v381
      %v448 = vunpack.c.l.b16 %v382
      %v449 = vunpack.c.l.b16 %v383
      %v450 = vunpack.c.l.b16 %v384
      %v451 = vunpack.c.l.b16 %v385
      %v452 = vunpack.c.l.b16 %v386
      %v453 = vunpack.c.l.b16 %v387
      %v454 = vunpack.c.l.b16 %v388
      %v455 = vunpack.c.l.b16 %v389
      %v456 = vunpack.c.l.b16 %v390
      %v457 = vpack.c.b16 %v434, %v433
      %v458 = vpack.c.b16 %v436, %v435
      %v459 = vpack.c.b16 %v438, %v437
      %v460 = vpack.c.b16 %v440, %v439
      %v461 = vpack.c.b16 %v442, %v441
      %v462 = vpack.c.b16 %v444, %v443
      %v463 = vpack.c.b16 %v446, %v445
      %v464 = vpack.c.b16 %v448, %v447
      %v465 = vpack.c.b16 %v450, %v449
      %v466 = vpack.c.b16 %v452, %v451
      %v467 = vpack.c.b16 %v454, %v453
      %v468 = vpack.c.b16 %v456, %v455
      %vm481 = vcmask 523264
      %v483 = vsel %vm481, %v404, 0
      %v486 = vsel %vm481, %v406, 0
      %488 = vmatprep.subr.bf16.mxu0 0
      %489 = vmatpush1.bf16.msra.mxu0 %v464
      %490 = vmatprep.subr.bf16.mxu0 0
      %491 = vmatpush1.bf16.msra.mxu0 %v463
      %492 = vmatprep.subr.bf16.mxu0 0
      %493 = vmatpush1.bf16.msra.mxu0 %v462
      %494 = vmatprep.subr.bf16.mxu0 0
      %495 = vmatpush1.bf16.msra.mxu0 %v461
      %496 = vmatprep.subr.bf16.mxu0 0
      %497 = vmatpush1.bf16.msra.mxu0 %v460
      %498 = vmatprep.subr.bf16.mxu0 0
      %499 = vmatpush1.bf16.msra.mxu0 %v459
      %500 = vmatprep.subr.bf16.mxu0 0
      %501 = vmatpush1.bf16.msra.mxu0 %v458
      %502 = vmatprep.subr.bf16.mxu0 0
      %503 = vmatpush1.bf16.msra.mxu0 %v457
      %504 = vmatprep.subr.bf16.mxu0 0
      %505 = vmatpush2.bf16.msra.mxu0 0
      %506 = vmatprep.subr.bf16.mxu0 0
      %507 = vmatpush2.bf16.msra.mxu0 0
      %508 = vmatprep.subr.bf16.mxu0 0
      %509 = vmatpush2.bf16.msra.mxu0 0
      %510 = vmatprep.subr.bf16.mxu0 0
      %511 = vmatpush2.bf16.msra.mxu0 0
      %512 = vmatprep.subr.bf16.mxu0 0
      %513 = vmatpush2.bf16.msra.mxu0 %v468
      %514 = vmatprep.subr.bf16.mxu0 0
      %515 = vmatpush2.bf16.msra.mxu0 %v467
      %516 = vmatprep.subr.bf16.mxu0 0
      %517 = vmatpush2.bf16.msra.mxu0 %v466
      %518 = vmatprep.subr.bf16.mxu0 0
      %519 = vmatpush2.bf16.msra.mxu0 %v465
      %520 = vmatprep.mubr.bf16.mxu0 %v483
      %521 = vmatmul.mubr.bf16.gmra.mxu0 %v403
      %v522 = vpop.f32.mrf.mxu0
      %v523 = vadd.f32 %v391, %v522
      %v524 = vpop.f32.mrf.mxu0
      %v525 = vpop.f32.mrf.mxu0
      %v526 = vadd.f32 %v392, %v525
      %v527 = vpop.f32.mrf.mxu0
      %528 = vmatprep.mubr.bf16.mxu0 %v486
      %529 = vmatmul.mubr.bf16.gmra.mxu0 %v405
      %v530 = vpop.f32.mrf.mxu0
      %v531 = vadd.f32 %v393, %v530
      %v532 = vpop.f32.mrf.mxu0
      %v533 = vpop.f32.mrf.mxu0
      %v534 = vpop.f32.mrf.mxu0
      %535 = vdwg.mxu0
      %v536 = vlaneseq
      %v537 = vand.u32 %v536, 127
      %vm538 = vcmp.lt.s32.totalorder %v537, 17
      %v539 = vsel %vm538, 0.0, -1e+30
      %v540 = vld [vmem:[%s7] ss:$8 sm:$0x3]
      %s541 = scalar_lea.vmem %s7, 1
      %v542 = vld [vmem:[%s541] ss:$8 sm:$0x3]
      %v543 = vld [vmem:[%s7 + $0x2] ss:$0 sm:$0xff]
      %v544 = vld [vmem:[%s7 + $0x3] ss:$0 sm:$0xff]
      %v545 = vld [vmem:[%s7 + $0x4] ss:$0 sm:$0xff]
      %v546 = vld [vmem:[%s7 + $0x5] ss:$0 sm:$0xff]
      %v547 = vld [vmem:[%s7 + $0x6] ss:$0 sm:$0xff]
      %v548 = vld [vmem:[%s7 + $0x7] ss:$0 sm:$0xff]
      %v549 = vsel %vm481, %v523, 0.0
      %550 = vadd.xlane.f32.xlu0 %v549
      %v551 = vpop.xlane.xlu0 %550
      %v552 = vsel %vm481, %v526, 0.0
      %553 = vadd.xlane.f32.xlu0 %v552
      %v554 = vpop.xlane.xlu0 %553
      %v555 = vsel %vm481, %v531, 0.0
      %556 = vadd.xlane.f32.xlu0 %v555
      %v557 = vpop.xlane.xlu0 %556
      %v558 = vrcp.pop 64.0
      %v559 = vmul.f32 %v551, %v558
      %v560 = vmul.f32 %v554, %v558
      %v561 = vmul.f32 %v557, %v558
      %v562 = vsub.f32 %v523, %v559
      %v563 = vsub.f32 %v526, %v560
      %v564 = vsub.f32 %v531, %v561
      %v565 = vmul.f32 %v562, %v562
      %v566 = vmul.f32 %v563, %v563
      %v567 = vmul.f32 %v564, %v564
      %v568 = vsel %vm481, %v565, 0.0
      %569 = vadd.xlane.f32.xlu0 %v568
      %v570 = vpop.xlane.xlu0 %569
      %v571 = vsel %vm481, %v566, 0.0
      %572 = vadd.xlane.f32.xlu0 %v571
      %v573 = vpop.xlane.xlu0 %572
      %v574 = vsel %vm481, %v567, 0.0
      %575 = vadd.xlane.f32.xlu0 %v574
      %v576 = vpop.xlane.xlu0 %575
      %v577 = vmul.f32 %v570, %v558
      %v578 = vmul.f32 %v573, %v558
      %v579 = vmul.f32 %v576, %v558
      %v580 = vadd.f32 %v577, 1e-05
      %v581 = vadd.f32 %v578, 1e-05
      %v582 = vadd.f32 %v579, 1e-05
      %v583 = vrsqrt.pop %v580
      %v584 = vrsqrt.pop %v581
      %v585 = vrsqrt.pop %v582
      %v586 = vmul.f32 %v562, %v583
      %v587 = vmul.f32 %v563, %v584
      %v588 = vmul.f32 %v564, %v585
      %v589 = vmul.f32 %v586, %v543
      %v590 = vmul.f32 %v587, %v543
      %v591 = vmul.f32 %v588, %v543
      %v592 = vadd.f32 %v589, %v544
      %v593 = vadd.f32 %v590, %v544
      %v594 = vadd.f32 %v591, %v544
      %v595 = vpack.c.bf16 %v593, %v592
      %v596 = vpack.c.bf16 %v594, %v594
      %v597 = vld [vmem:[%s3] sm:$0xff]
      %v598 = vld [vmem:[%s3 + $0x8] sm:$0xff]
      %v599 = vld [vmem:[%s3 + $0x10] sm:$0xff]
      %v600 = vld [vmem:[%s3 + $0x18] sm:$0xff]
      %v601 = vld [vmem:[%s3 + $0x20] sm:$0xff]
      %v602 = vld [vmem:[%s3 + $0x28] sm:$0xff]
      %v603 = vld [vmem:[%s3 + $0x30] sm:$0xff]
      %v604 = vld [vmem:[%s3 + $0x38] sm:$0xff]
      %v606 = vlaneseq
      %v607 = vshrl.u32 %v606, 7
      %v608 = vsub.s32 0, %v607
      %v609 = vrot.slane %v540, %v608
      %v610 = vlaneseq
      %v611 = vshrl.u32 %v610, 7
      %v612 = vsub.s32 1, %v611
      %v613 = vrot.slane %v540, %v612
      %v624 = vunpack.c.l.b16 %v597
      %v625 = vunpack.c.h.b16 %v597
      %v626 = vunpack.c.l.b16 %v598
      %v627 = vunpack.c.h.b16 %v598
      %v628 = vunpack.c.l.b16 %v599
      %v629 = vunpack.c.h.b16 %v599
      %v630 = vunpack.c.l.b16 %v600
      %v631 = vunpack.c.h.b16 %v600
      %v632 = vunpack.c.l.b16 %v601
      %v633 = vunpack.c.h.b16 %v601
      %v634 = vunpack.c.l.b16 %v602
      %v635 = vunpack.c.h.b16 %v602
      %v636 = vunpack.c.l.b16 %v603
      %v637 = vunpack.c.h.b16 %v603
      %v638 = vunpack.c.l.b16 %v604
      %v639 = vunpack.c.h.b16 %v604
      %v640 = vpack.c.b16 %v626, %v624
      %v641 = vpack.c.b16 %v627, %v625
      %v642 = vpack.c.b16 %v630, %v628
      %v643 = vpack.c.b16 %v631, %v629
      %v644 = vpack.c.b16 %v634, %v632
      %v645 = vpack.c.b16 %v635, %v633
      %v646 = vpack.c.b16 %v638, %v636
      %v647 = vpack.c.b16 %v639, %v637
      %v657 = vsel %vm481, %v595, 0
      %v660 = vsel %vm481, %v596, 0
      %662 = vmatprep.subr.bf16.mxu0 0
      %663 = vmatpush1.bf16.msra.mxu0 0
      %664 = vmatprep.subr.bf16.mxu0 0
      %665 = vmatpush1.bf16.msra.mxu0 0
      %666 = vmatprep.subr.bf16.mxu0 0
      %667 = vmatpush1.bf16.msra.mxu0 0
      %668 = vmatprep.subr.bf16.mxu0 0
      %669 = vmatpush1.bf16.msra.mxu0 0
      %670 = vmatprep.subr.bf16.mxu0 %v647
      %671 = vmatpush1.bf16.msra.mxu0 %v646
      %672 = vmatprep.subr.bf16.mxu0 %v645
      %673 = vmatpush1.bf16.msra.mxu0 %v644
      %674 = vmatprep.subr.bf16.mxu0 %v643
      %675 = vmatpush1.bf16.msra.mxu0 %v642
      %676 = vmatprep.subr.bf16.mxu0 %v641
      %677 = vmatpush1.bf16.msra.mxu0 %v640
      %678 = vmatprep.subr.bf16.mxu0 0
      %679 = vmatpush2.bf16.msra.mxu0 0
      %680 = vmatprep.subr.bf16.mxu0 0
      %681 = vmatpush2.bf16.msra.mxu0 0
      %682 = vmatprep.subr.bf16.mxu0 0
      %683 = vmatpush2.bf16.msra.mxu0 0
      %684 = vmatprep.subr.bf16.mxu0 0
      %685 = vmatpush2.bf16.msra.mxu0 0
      %686 = vmatprep.subr.bf16.mxu0 0
      %687 = vmatpush2.bf16.msra.mxu0 0
      %688 = vmatprep.subr.bf16.mxu0 0
      %689 = vmatpush2.bf16.msra.mxu0 0
      %690 = vmatprep.subr.bf16.mxu0 0
      %691 = vmatpush2.bf16.msra.mxu0 0
      %692 = vmatprep.subr.bf16.mxu0 0
      %693 = vmatpush2.bf16.msra.mxu0 0
      %694 = vmatprep.mubr.bf16.mxu0 0
      %695 = vmatmul.mubr.bf16.gmra.mxu0 %v657
      %v696 = vpop.f32.mrf.mxu0
      %v697 = vadd.f32 %v609, %v696
      %v698 = vpop.f32.mrf.mxu0
      %v699 = vadd.f32 %v613, %v698
      %v700 = vpop.f32.mrf.mxu0
      %v701 = vadd.f32 %v609, %v700
      %v702 = vpop.f32.mrf.mxu0
      %v703 = vadd.f32 %v613, %v702
      %704 = vmatprep.mubr.bf16.mxu0 0
      %705 = vmatmul.mubr.bf16.gmra.mxu0 %v660
      %v706 = vpop.f32.mrf.mxu0
      %v707 = vadd.f32 %v609, %v706
      %v708 = vpop.f32.mrf.mxu0
      %v709 = vadd.f32 %v613, %v708
      %v710 = vpop.f32.mrf.mxu0
      %v711 = vpop.f32.mrf.mxu0
      %712 = vdwg.mxu0
      %v713 = vpack.c.bf16 %v701, %v697
      %v714 = vpack.c.bf16 %v707, %v707
      %v715 = vpack.c.bf16 %v703, %v699
      %v716 = vpack.c.bf16 %v709, %v709
      %719 = vrot.lane.b32.xlu0 %v713, 64
      %v720 = vpop.permute.xlu0 %719
      %721 = vrot.lane.b32.xlu0 %v714, 64
      %v722 = vpop.permute.xlu0 %721
      %vm723 = vcmask 64512
      %v725 = vsel %vm723, %v713, 0
      %v728 = vsel %vm723, %v714, 0
      %v731 = vsel %vm723, %v720, 0
      %v734 = vsel %vm723, %v722, 0
      %736 = vmatprep.subr.bf16.mxu0 0
      %737 = vmatpush1.bf16.xpose.msra.mxu0 0
      %738 = vmatprep.subr.bf16.mxu0 0
      %739 = vmatpush1.bf16.xpose.msra.mxu0 0
      %740 = vmatprep.subr.bf16.mxu0 0
      %741 = vmatpush1.bf16.xpose.msra.mxu0 0
      %742 = vmatprep.subr.bf16.mxu0 0
      %743 = vmatpush1.bf16.xpose.msra.mxu0 0
      %744 = vmatprep.subr.bf16.mxu0 0
      %745 = vmatpush1.bf16.xpose.msra.mxu0 0
      %746 = vmatprep.subr.bf16.mxu0 0
      %747 = vmatpush1.bf16.xpose.msra.mxu0 0
      %748 = vmatprep.subr.bf16.mxu0 0
      %749 = vmatpush1.bf16.xpose.msra.mxu0 %v734
      %750 = vmatprep.subr.bf16.mxu0 0
      %751 = vmatpush1.bf16.xpose.msra.mxu0 %v731
      %752 = vmatprep.subr.bf16.mxu0 0
      %753 = vmatpush2.bf16.xpose.msra.mxu0 0
      %754 = vmatprep.subr.bf16.mxu0 0
      %755 = vmatpush2.bf16.xpose.msra.mxu0 0
      %756 = vmatprep.subr.bf16.mxu0 0
      %757 = vmatpush2.bf16.xpose.msra.mxu0 0
      %758 = vmatprep.subr.bf16.mxu0 0
      %759 = vmatpush2.bf16.xpose.msra.mxu0 0
      %760 = vmatprep.subr.bf16.mxu0 0
      %761 = vmatpush2.bf16.xpose.msra.mxu0 0
      %762 = vmatprep.subr.bf16.mxu0 0
      %763 = vmatpush2.bf16.xpose.msra.mxu0 0
      %764 = vmatprep.subr.bf16.mxu0 0
      %765 = vmatpush2.bf16.xpose.msra.mxu0 0
      %766 = vmatprep.subr.bf16.mxu0 0
      %767 = vmatpush2.bf16.xpose.msra.mxu0 0
      %768 = vmatprep.mubr.bf16.mxu0 0
      %769 = vmatmul.mubr.bf16.gmra.mxu0 %v725
      %v770 = vpop.f32.mrf.mxu0
      %v771 = vadd.f32 %v539, %v770
      %v772 = vpop.f32.mrf.mxu0
      %v773 = vpop.f32.mrf.mxu0
      %v774 = vadd.f32 %v539, %v773
      %v775 = vpop.f32.mrf.mxu0
      %776 = vmatprep.mubr.bf16.mxu0 0
      %777 = vmatmul.mubr.bf16.gmra.mxu0 %v728
      %v778 = vpop.f32.mrf.mxu0
      %v779 = vadd.f32 %v539, %v778
      %v780 = vpop.f32.mrf.mxu0
      %v781 = vpop.f32.mrf.mxu0
      %v782 = vpop.f32.mrf.mxu0
      %783 = vdwg.mxu0
      %vm784 = vcmask 195584
      %v785 = vsel %vm784, %v771, -inf
      %786 = vmax.xlane.f32.xlu0 %v785
      %v787 = vpop.xlane.xlu0 %786
      %v788 = vsel %vm784, %v774, -inf
      %789 = vmax.xlane.f32.xlu0 %v788
      %v790 = vpop.xlane.xlu0 %789
      %v791 = vsel %vm784, %v779, -inf
      %792 = vmax.xlane.f32.xlu0 %v791
      %v793 = vpop.xlane.xlu0 %792
      %v794 = vsub.f32 %v771, %v787
      %v795 = vsub.f32 %v774, %v790
      %v796 = vsub.f32 %v779, %v793
      %v797 = vmul.f32 %v794, 1.442695
      %v798 = vpow.pop %v797
      %v799 = vmul.f32 %v795, 1.442695
      %v800 = vpow.pop %v799
      %v801 = vmul.f32 %v796, 1.442695
      %v802 = vpow.pop %v801
      %v803 = vsel %vm784, %v798, 0.0
      %804 = vadd.xlane.f32.xlu0 %v803
      %v805 = vpop.xlane.xlu0 %804
      %v806 = vsel %vm784, %v800, 0.0
      %807 = vadd.xlane.f32.xlu0 %v806
      %v808 = vpop.xlane.xlu0 %807
      %v809 = vsel %vm784, %v802, 0.0
      %810 = vadd.xlane.f32.xlu0 %v809
      %v811 = vpop.xlane.xlu0 %810
      %v812 = vpack.c.bf16 %v800, %v798
      %v813 = vpack.c.bf16 %v802, %v802
      %v815 = vsel %vm784, %v812, 0
      %v818 = vsel %vm784, %v813, 0
      %vm820 = vcmask 1043456
      %v822 = vsel %vm820, %v716, 0
      %824 = vmatprep.subr.bf16.mxu0 0
      %825 = vmatpush1.bf16.msra.mxu0 0
      %826 = vmatprep.subr.bf16.mxu0 0
      %827 = vmatpush1.bf16.msra.mxu0 0
      %828 = vmatprep.subr.bf16.mxu0 0
      %829 = vmatpush1.bf16.msra.mxu0 0
      %830 = vmatprep.subr.bf16.mxu0 0
      %831 = vmatpush1.bf16.msra.mxu0 0
      %832 = vmatprep.subr.bf16.mxu0 0
      %833 = vmatpush1.bf16.msra.mxu0 0
      %834 = vmatprep.subr.bf16.mxu0 0
      %835 = vmatpush1.bf16.msra.mxu0 0
      %836 = vmatprep.subr.bf16.mxu0 0
      %837 = vmatpush1.bf16.msra.mxu0 %v822
      %838 = vmatprep.subr.bf16.mxu0 0
      %839 = vmatpush1.bf16.msra.mxu0 %v715
      %840 = vmatprep.subr.bf16.mxu0 0
      %841 = vmatpush2.bf16.msra.mxu0 0
      %842 = vmatprep.subr.bf16.mxu0 0
      %843 = vmatpush2.bf16.msra.mxu0 0
      %844 = vmatprep.subr.bf16.mxu0 0
      %845 = vmatpush2.bf16.msra.mxu0 0
      %846 = vmatprep.subr.bf16.mxu0 0
      %847 = vmatpush2.bf16.msra.mxu0 0
      %848 = vmatprep.subr.bf16.mxu0 0
      %849 = vmatpush2.bf16.msra.mxu0 0
      %850 = vmatprep.subr.bf16.mxu0 0
      %851 = vmatpush2.bf16.msra.mxu0 0
      %852 = vmatprep.subr.bf16.mxu0 0
      %853 = vmatpush2.bf16.msra.mxu0 0
      %854 = vmatprep.subr.bf16.mxu0 0
      %855 = vmatpush2.bf16.msra.mxu0 0
      %856 = vmatprep.mubr.bf16.mxu0 0
      %857 = vmatmul.mubr.bf16.gmra.mxu0 %v815
      %v858 = vpop.f32.mrf.mxu0
      %v859 = vadd.f32 0.0, %v858
      %v860 = vpop.f32.mrf.mxu0
      %v861 = vpop.f32.mrf.mxu0
      %v862 = vadd.f32 0.0, %v861
      %v863 = vpop.f32.mrf.mxu0
      %864 = vmatprep.mubr.bf16.mxu0 0
      %865 = vmatmul.mubr.bf16.gmra.mxu0 %v818
      %v866 = vpop.f32.mrf.mxu0
      %v867 = vadd.f32 0.0, %v866
      %v868 = vpop.f32.mrf.mxu0
      %v869 = vpop.f32.mrf.mxu0
      %v870 = vpop.f32.mrf.mxu0
      %871 = vdwg.mxu0
      %v872 = vrcp.pop %v805
      %v873 = vrcp.pop %v808
      %v874 = vrcp.pop %v811
      %v875 = vmul.f32 %v859, %v872
      %v876 = vmul.f32 %v862, %v873
      %v877 = vmul.f32 %v867, %v874
      %878 = vrot.lane.b32.xlu0 %v713, 120
      %v879 = vpop.permute.xlu0 %878
      %880 = vrot.lane.b32.xlu0 %v714, 120
      %v881 = vpop.permute.xlu0 %880
      %882 = vrot.lane.b32.xlu0 %v713, 56
      %v883 = vpop.permute.xlu0 %882
      %884 = vrot.lane.b32.xlu0 %v714, 56
      %v885 = vpop.permute.xlu0 %884
      %v887 = vsel %vm723, %v879, 0
      %v890 = vsel %vm723, %v881, 0
      %v893 = vsel %vm723, %v883, 0
      %v896 = vsel %vm723, %v885, 0
      %898 = vmatprep.subr.bf16.mxu0 0
      %899 = vmatpush1.bf16.xpose.msra.mxu0 0
      %900 = vmatprep.subr.bf16.mxu0 0
      %901 = vmatpush1.bf16.xpose.msra.mxu0 0
      %902 = vmatprep.subr.bf16.mxu0 0
      %903 = vmatpush1.bf16.xpose.msra.mxu0 0
      %904 = vmatprep.subr.bf16.mxu0 0
      %905 = vmatpush1.bf16.xpose.msra.mxu0 0
      %906 = vmatprep.subr.bf16.mxu0 0
      %907 = vmatpush1.bf16.xpose.msra.mxu0 0
      %908 = vmatprep.subr.bf16.mxu0 0
      %909 = vmatpush1.bf16.xpose.msra.mxu0 0
      %910 = vmatprep.subr.bf16.mxu0 0
      %911 = vmatpush1.bf16.xpose.msra.mxu0 %v896
      %912 = vmatprep.subr.bf16.mxu0 0
      %913 = vmatpush1.bf16.xpose.msra.mxu0 %v893
      %914 = vmatprep.subr.bf16.mxu0 0
      %915 = vmatpush2.bf16.xpose.msra.mxu0 0
      %916 = vmatprep.subr.bf16.mxu0 0
      %917 = vmatpush2.bf16.xpose.msra.mxu0 0
      %918 = vmatprep.subr.bf16.mxu0 0
      %919 = vmatpush2.bf16.xpose.msra.mxu0 0
      %920 = vmatprep.subr.bf16.mxu0 0
      %921 = vmatpush2.bf16.xpose.msra.mxu0 0
      %922 = vmatprep.subr.bf16.mxu0 0
      %923 = vmatpush2.bf16.xpose.msra.mxu0 0
      %924 = vmatprep.subr.bf16.mxu0 0
      %925 = vmatpush2.bf16.xpose.msra.mxu0 0
      %926 = vmatprep.subr.bf16.mxu0 0
      %927 = vmatpush2.bf16.xpose.msra.mxu0 0
      %928 = vmatprep.subr.bf16.mxu0 0
      %929 = vmatpush2.bf16.xpose.msra.mxu0 0
      %930 = vmatprep.mubr.bf16.mxu0 0
      %931 = vmatmul.mubr.bf16.gmra.mxu0 %v887
      %v932 = vpop.f32.mrf.mxu0
      %v933 = vadd.f32 %v539, %v932
      %v934 = vpop.f32.mrf.mxu0
      %v935 = vpop.f32.mrf.mxu0
      %v936 = vadd.f32 %v539, %v935
      %v937 = vpop.f32.mrf.mxu0
      %938 = vmatprep.mubr.bf16.mxu0 0
      %939 = vmatmul.mubr.bf16.gmra.mxu0 %v890
      %v940 = vpop.f32.mrf.mxu0
      %v941 = vadd.f32 %v539, %v940
      %v942 = vpop.f32.mrf.mxu0
      %v943 = vpop.f32.mrf.mxu0
      %v944 = vpop.f32.mrf.mxu0
      %945 = vdwg.mxu0
      %v946 = vsel %vm784, %v933, -inf
      %947 = vmax.xlane.f32.xlu0 %v946
      %v948 = vpop.xlane.xlu0 %947
      %v949 = vsel %vm784, %v936, -inf
      %950 = vmax.xlane.f32.xlu0 %v949
      %v951 = vpop.xlane.xlu0 %950
      %v952 = vsel %vm784, %v941, -inf
      %953 = vmax.xlane.f32.xlu0 %v952
      %v954 = vpop.xlane.xlu0 %953
      %v955 = vsub.f32 %v933, %v948
      %v956 = vsub.f32 %v936, %v951
      %v957 = vsub.f32 %v941, %v954
      %v958 = vmul.f32 %v955, 1.442695
      %v959 = vpow.pop %v958
      %v960 = vmul.f32 %v956, 1.442695
      %v961 = vpow.pop %v960
      %v962 = vmul.f32 %v957, 1.442695
      %v963 = vpow.pop %v962
      %v964 = vsel %vm784, %v959, 0.0
      %965 = vadd.xlane.f32.xlu0 %v964
      %v966 = vpop.xlane.xlu0 %965
      %v967 = vsel %vm784, %v961, 0.0
      %968 = vadd.xlane.f32.xlu0 %v967
      %v969 = vpop.xlane.xlu0 %968
      %v970 = vsel %vm784, %v963, 0.0
      %971 = vadd.xlane.f32.xlu0 %v970
      %v972 = vpop.xlane.xlu0 %971
      %v973 = vpack.c.bf16 %v961, %v959
      %v974 = vpack.c.bf16 %v963, %v963
      %977 = vrot.lane.b32.xlu0 %v715, 120
      %v978 = vpop.permute.xlu0 %977
      %979 = vrot.lane.b32.xlu0 %v716, 120
      %v980 = vpop.permute.xlu0 %979
      %v983 = vsel %vm784, %v973, 0
      %v986 = vsel %vm784, %v974, 0
      %v989 = vsel %vm820, %v980, 0
      %991 = vmatprep.subr.bf16.mxu0 0
      %992 = vmatpush1.bf16.msra.mxu0 0
      %993 = vmatprep.subr.bf16.mxu0 0
      %994 = vmatpush1.bf16.msra.mxu0 0
      %995 = vmatprep.subr.bf16.mxu0 0
      %996 = vmatpush1.bf16.msra.mxu0 0
      %997 = vmatprep.subr.bf16.mxu0 0
      %998 = vmatpush1.bf16.msra.mxu0 0
      %999 = vmatprep.subr.bf16.mxu0 0
      %1000 = vmatpush1.bf16.msra.mxu0 0
      %1001 = vmatprep.subr.bf16.mxu0 0
      %1002 = vmatpush1.bf16.msra.mxu0 0
      %1003 = vmatprep.subr.bf16.mxu0 0
      %1004 = vmatpush1.bf16.msra.mxu0 %v989
      %1005 = vmatprep.subr.bf16.mxu0 0
      %1006 = vmatpush1.bf16.msra.mxu0 %v978
      %1007 = vmatprep.subr.bf16.mxu0 0
      %1008 = vmatpush2.bf16.msra.mxu0 0
      %1009 = vmatprep.subr.bf16.mxu0 0
      %1010 = vmatpush2.bf16.msra.mxu0 0
      %1011 = vmatprep.subr.bf16.mxu0 0
      %1012 = vmatpush2.bf16.msra.mxu0 0
      %1013 = vmatprep.subr.bf16.mxu0 0
      %1014 = vmatpush2.bf16.msra.mxu0 0
      %1015 = vmatprep.subr.bf16.mxu0 0
      %1016 = vmatpush2.bf16.msra.mxu0 0
      %1017 = vmatprep.subr.bf16.mxu0 0
      %1018 = vmatpush2.bf16.msra.mxu0 0
      %1019 = vmatprep.subr.bf16.mxu0 0
      %1020 = vmatpush2.bf16.msra.mxu0 0
      %1021 = vmatprep.subr.bf16.mxu0 0
      %1022 = vmatpush2.bf16.msra.mxu0 0
      %1023 = vmatprep.mubr.bf16.mxu0 0
      %1024 = vmatmul.mubr.bf16.gmra.mxu0 %v983
      %v1025 = vpop.f32.mrf.mxu0
      %v1026 = vadd.f32 0.0, %v1025
      %v1027 = vpop.f32.mrf.mxu0
      %v1028 = vpop.f32.mrf.mxu0
      %v1029 = vadd.f32 0.0, %v1028
      %v1030 = vpop.f32.mrf.mxu0
      %1031 = vmatprep.mubr.bf16.mxu0 0
      %1032 = vmatmul.mubr.bf16.gmra.mxu0 %v986
      %v1033 = vpop.f32.mrf.mxu0
      %v1034 = vadd.f32 0.0, %v1033
      %v1035 = vpop.f32.mrf.mxu0
      %v1036 = vpop.f32.mrf.mxu0
      %v1037 = vpop.f32.mrf.mxu0
      %1038 = vdwg.mxu0
      %v1039 = vrcp.pop %v966
      %v1040 = vrcp.pop %v969
      %v1041 = vrcp.pop %v972
      %v1042 = vmul.f32 %v1026, %v1039
      %v1043 = vmul.f32 %v1029, %v1040
      %v1044 = vmul.f32 %v1034, %v1041
      %1045 = vrot.lane.b32.xlu0 %v713, 112
      %v1046 = vpop.permute.xlu0 %1045
      %1047 = vrot.lane.b32.xlu0 %v714, 112
      %v1048 = vpop.permute.xlu0 %1047
      %1049 = vrot.lane.b32.xlu0 %v713, 48
      %v1050 = vpop.permute.xlu0 %1049
      %1051 = vrot.lane.b32.xlu0 %v714, 48
      %v1052 = vpop.permute.xlu0 %1051
      %v1054 = vsel %vm723, %v1046, 0
      %v1057 = vsel %vm723, %v1048, 0
      %v1060 = vsel %vm723, %v1050, 0
      %v1063 = vsel %vm723, %v1052, 0
      %1065 = vmatprep.subr.bf16.mxu0 0
      %1066 = vmatpush1.bf16.xpose.msra.mxu0 0
      %1067 = vmatprep.subr.bf16.mxu0 0
      %1068 = vmatpush1.bf16.xpose.msra.mxu0 0
      %1069 = vmatprep.subr.bf16.mxu0 0
      %1070 = vmatpush1.bf16.xpose.msra.mxu0 0
      %1071 = vmatprep.subr.bf16.mxu0 0
      %1072 = vmatpush1.bf16.xpose.msra.mxu0 0
      %1073 = vmatprep.subr.bf16.mxu0 0
      %1074 = vmatpush1.bf16.xpose.msra.mxu0 0
      %1075 = vmatprep.subr.bf16.mxu0 0
      %1076 = vmatpush1.bf16.xpose.msra.mxu0 0
      %1077 = vmatprep.subr.bf16.mxu0 0
      %1078 = vmatpush1.bf16.xpose.msra.mxu0 %v1063
      %1079 = vmatprep.subr.bf16.mxu0 0
      %1080 = vmatpush1.bf16.xpose.msra.mxu0 %v1060
      %1081 = vmatprep.subr.bf16.mxu0 0
      %1082 = vmatpush2.bf16.xpose.msra.mxu0 0
      %1083 = vmatprep.subr.bf16.mxu0 0
      %1084 = vmatpush2.bf16.xpose.msra.mxu0 0
      %1085 = vmatprep.subr.bf16.mxu0 0
      %1086 = vmatpush2.bf16.xpose.msra.mxu0 0
      %1087 = vmatprep.subr.bf16.mxu0 0
      %1088 = vmatpush2.bf16.xpose.msra.mxu0 0
      %1089 = vmatprep.subr.bf16.mxu0 0
      %1090 = vmatpush2.bf16.xpose.msra.mxu0 0
      %1091 = vmatprep.subr.bf16.mxu0 0
      %1092 = vmatpush2.bf16.xpose.msra.mxu0 0
      %1093 = vmatprep.subr.bf16.mxu0 0
      %1094 = vmatpush2.bf16.xpose.msra.mxu0 0
      %1095 = vmatprep.subr.bf16.mxu0 0
      %1096 = vmatpush2.bf16.xpose.msra.mxu0 0
      %1097 = vmatprep.mubr.bf16.mxu0 0
      %1098 = vmatmul.mubr.bf16.gmra.mxu0 %v1054
      %v1099 = vpop.f32.mrf.mxu0
      %v1100 = vadd.f32 %v539, %v1099
      %v1101 = vpop.f32.mrf.mxu0
      %v1102 = vpop.f32.mrf.mxu0
      %v1103 = vadd.f32 %v539, %v1102
      %v1104 = vpop.f32.mrf.mxu0
      %1105 = vmatprep.mubr.bf16.mxu0 0
      %1106 = vmatmul.mubr.bf16.gmra.mxu0 %v1057
      %v1107 = vpop.f32.mrf.mxu0
      %v1108 = vadd.f32 %v539, %v1107
      %v1109 = vpop.f32.mrf.mxu0
      %v1110 = vpop.f32.mrf.mxu0
      %v1111 = vpop.f32.mrf.mxu0
      %1112 = vdwg.mxu0
      %v1113 = vsel %vm784, %v1100, -inf
      %1114 = vmax.xlane.f32.xlu0 %v1113
      %v1115 = vpop.xlane.xlu0 %1114
      %v1116 = vsel %vm784, %v1103, -inf
      %1117 = vmax.xlane.f32.xlu0 %v1116
      %v1118 = vpop.xlane.xlu0 %1117
      %v1119 = vsel %vm784, %v1108, -inf
      %1120 = vmax.xlane.f32.xlu0 %v1119
      %v1121 = vpop.xlane.xlu0 %1120
      %v1122 = vsub.f32 %v1100, %v1115
      %v1123 = vsub.f32 %v1103, %v1118
      %v1124 = vsub.f32 %v1108, %v1121
      %v1125 = vmul.f32 %v1122, 1.442695
      %v1126 = vpow.pop %v1125
      %v1127 = vmul.f32 %v1123, 1.442695
      %v1128 = vpow.pop %v1127
      %v1129 = vmul.f32 %v1124, 1.442695
      %v1130 = vpow.pop %v1129
      %v1131 = vsel %vm784, %v1126, 0.0
      %1132 = vadd.xlane.f32.xlu0 %v1131
      %v1133 = vpop.xlane.xlu0 %1132
      %v1134 = vsel %vm784, %v1128, 0.0
      %1135 = vadd.xlane.f32.xlu0 %v1134
      %v1136 = vpop.xlane.xlu0 %1135
      %v1137 = vsel %vm784, %v1130, 0.0
      %1138 = vadd.xlane.f32.xlu0 %v1137
      %v1139 = vpop.xlane.xlu0 %1138
      %v1140 = vpack.c.bf16 %v1128, %v1126
      %v1141 = vpack.c.bf16 %v1130, %v1130
      %1142 = vrot.lane.b32.xlu0 %v715, 112
      %v1143 = vpop.permute.xlu0 %1142
      %1144 = vrot.lane.b32.xlu0 %v716, 112
      %v1145 = vpop.permute.xlu0 %1144
      %v1148 = vsel %vm784, %v1140, 0
      %v1151 = vsel %vm784, %v1141, 0
      %v1154 = vsel %vm820, %v1145, 0
      %1156 = vmatprep.subr.bf16.mxu0 0
      %1157 = vmatpush1.bf16.msra.mxu0 0
      %1158 = vmatprep.subr.bf16.mxu0 0
      %1159 = vmatpush1.bf16.msra.mxu0 0
      %1160 = vmatprep.subr.bf16.mxu0 0
      %1161 = vmatpush1.bf16.msra.mxu0 0
      %1162 = vmatprep.subr.bf16.mxu0 0
      %1163 = vmatpush1.bf16.msra.mxu0 0
      %1164 = vmatprep.subr.bf16.mxu0 0
      %1165 = vmatpush1.bf16.msra.mxu0 0
      %1166 = vmatprep.subr.bf16.mxu0 0
      %1167 = vmatpush1.bf16.msra.mxu0 0
      %1168 = vmatprep.subr.bf16.mxu0 0
      %1169 = vmatpush1.bf16.msra.mxu0 %v1154
      %1170 = vmatprep.subr.bf16.mxu0 0
      %1171 = vmatpush1.bf16.msra.mxu0 %v1143
      %1172 = vmatprep.subr.bf16.mxu0 0
      %1173 = vmatpush2.bf16.msra.mxu0 0
      %1174 = vmatprep.subr.bf16.mxu0 0
      %1175 = vmatpush2.bf16.msra.mxu0 0
      %1176 = vmatprep.subr.bf16.mxu0 0
      %1177 = vmatpush2.bf16.msra.mxu0 0
      %1178 = vmatprep.subr.bf16.mxu0 0
      %1179 = vmatpush2.bf16.msra.mxu0 0
      %1180 = vmatprep.subr.bf16.mxu0 0
      %1181 = vmatpush2.bf16.msra.mxu0 0
      %1182 = vmatprep.subr.bf16.mxu0 0
      %1183 = vmatpush2.bf16.msra.mxu0 0
      %1184 = vmatprep.subr.bf16.mxu0 0
      %1185 = vmatpush2.bf16.msra.mxu0 0
      %1186 = vmatprep.subr.bf16.mxu0 0
      %1187 = vmatpush2.bf16.msra.mxu0 0
      %1188 = vmatprep.mubr.bf16.mxu0 0
      %1189 = vmatmul.mubr.bf16.gmra.mxu0 %v1148
      %v1190 = vpop.f32.mrf.mxu0
      %v1191 = vadd.f32 0.0, %v1190
      %v1192 = vpop.f32.mrf.mxu0
      %v1193 = vpop.f32.mrf.mxu0
      %v1194 = vadd.f32 0.0, %v1193
      %v1195 = vpop.f32.mrf.mxu0
      %1196 = vmatprep.mubr.bf16.mxu0 0
      %1197 = vmatmul.mubr.bf16.gmra.mxu0 %v1151
      %v1198 = vpop.f32.mrf.mxu0
      %v1199 = vadd.f32 0.0, %v1198
      %v1200 = vpop.f32.mrf.mxu0
      %v1201 = vpop.f32.mrf.mxu0
      %v1202 = vpop.f32.mrf.mxu0
      %1203 = vdwg.mxu0
      %v1204 = vrcp.pop %v1133
      %v1205 = vrcp.pop %v1136
      %v1206 = vrcp.pop %v1139
      %v1207 = vmul.f32 %v1191, %v1204
      %v1208 = vmul.f32 %v1194, %v1205
      %v1209 = vmul.f32 %v1199, %v1206
      %1210 = vrot.lane.b32.xlu0 %v713, 104
      %v1211 = vpop.permute.xlu0 %1210
      %1212 = vrot.lane.b32.xlu0 %v714, 104
      %v1213 = vpop.permute.xlu0 %1212
      %1214 = vrot.lane.b32.xlu0 %v713, 40
      %v1215 = vpop.permute.xlu0 %1214
      %1216 = vrot.lane.b32.xlu0 %v714, 40
      %v1217 = vpop.permute.xlu0 %1216
      %v1219 = vsel %vm723, %v1211, 0
      %v1222 = vsel %vm723, %v1213, 0
      %v1225 = vsel %vm723, %v1215, 0
      %v1228 = vsel %vm723, %v1217, 0
      %1230 = vmatprep.subr.bf16.mxu0 0
      %1231 = vmatpush1.bf16.xpose.msra.mxu0 0
      %1232 = vmatprep.subr.bf16.mxu0 0
      %1233 = vmatpush1.bf16.xpose.msra.mxu0 0
      %1234 = vmatprep.subr.bf16.mxu0 0
      %1235 = vmatpush1.bf16.xpose.msra.mxu0 0
      %1236 = vmatprep.subr.bf16.mxu0 0
      %1237 = vmatpush1.bf16.xpose.msra.mxu0 0
      %1238 = vmatprep.subr.bf16.mxu0 0
      %1239 = vmatpush1.bf16.xpose.msra.mxu0 0
      %1240 = vmatprep.subr.bf16.mxu0 0
      %1241 = vmatpush1.bf16.xpose.msra.mxu0 0
      %1242 = vmatprep.subr.bf16.mxu0 0
      %1243 = vmatpush1.bf16.xpose.msra.mxu0 %v1228
      %1244 = vmatprep.subr.bf16.mxu0 0
      %1245 = vmatpush1.bf16.xpose.msra.mxu0 %v1225
      %1246 = vmatprep.subr.bf16.mxu0 0
      %1247 = vmatpush2.bf16.xpose.msra.mxu0 0
      %1248 = vmatprep.subr.bf16.mxu0 0
      %1249 = vmatpush2.bf16.xpose.msra.mxu0 0
      %1250 = vmatprep.subr.bf16.mxu0 0
      %1251 = vmatpush2.bf16.xpose.msra.mxu0 0
      %1252 = vmatprep.subr.bf16.mxu0 0
      %1253 = vmatpush2.bf16.xpose.msra.mxu0 0
      %1254 = vmatprep.subr.bf16.mxu0 0
      %1255 = vmatpush2.bf16.xpose.msra.mxu0 0
      %1256 = vmatprep.subr.bf16.mxu0 0
      %1257 = vmatpush2.bf16.xpose.msra.mxu0 0
      %1258 = vmatprep.subr.bf16.mxu0 0
      %1259 = vmatpush2.bf16.xpose.msra.mxu0 0
      %1260 = vmatprep.subr.bf16.mxu0 0
      %1261 = vmatpush2.bf16.xpose.msra.mxu0 0
      %1262 = vmatprep.mubr.bf16.mxu0 0
      %1263 = vmatmul.mubr.bf16.gmra.mxu0 %v1219
      %v1264 = vpop.f32.mrf.mxu0
      %v1265 = vadd.f32 %v539, %v1264
      %v1266 = vpop.f32.mrf.mxu0
      %v1267 = vpop.f32.mrf.mxu0
      %v1268 = vadd.f32 %v539, %v1267
      %v1269 = vpop.f32.mrf.mxu0
      %1270 = vmatprep.mubr.bf16.mxu0 0
      %1271 = vmatmul.mubr.bf16.gmra.mxu0 %v1222
      %v1272 = vpop.f32.mrf.mxu0
      %v1273 = vadd.f32 %v539, %v1272
      %v1274 = vpop.f32.mrf.mxu0
      %v1275 = vpop.f32.mrf.mxu0
      %v1276 = vpop.f32.mrf.mxu0
      %1277 = vdwg.mxu0
      %v1278 = vsel %vm784, %v1265, -inf
      %1279 = vmax.xlane.f32.xlu0 %v1278
      %v1280 = vpop.xlane.xlu0 %1279
      %v1281 = vsel %vm784, %v1268, -inf
      %1282 = vmax.xlane.f32.xlu0 %v1281
      %v1283 = vpop.xlane.xlu0 %1282
      %v1284 = vsel %vm784, %v1273, -inf
      %1285 = vmax.xlane.f32.xlu0 %v1284
      %v1286 = vpop.xlane.xlu0 %1285
      %v1287 = vsub.f32 %v1265, %v1280
      %v1288 = vsub.f32 %v1268, %v1283
      %v1289 = vsub.f32 %v1273, %v1286
      %v1290 = vmul.f32 %v1287, 1.442695
      %v1291 = vpow.pop %v1290
      %v1292 = vmul.f32 %v1288, 1.442695
      %v1293 = vpow.pop %v1292
      %v1294 = vmul.f32 %v1289, 1.442695
      %v1295 = vpow.pop %v1294
      %v1296 = vsel %vm784, %v1291, 0.0
      %1297 = vadd.xlane.f32.xlu0 %v1296
      %v1298 = vpop.xlane.xlu0 %1297
      %v1299 = vsel %vm784, %v1293, 0.0
      %1300 = vadd.xlane.f32.xlu0 %v1299
      %v1301 = vpop.xlane.xlu0 %1300
      %v1302 = vsel %vm784, %v1295, 0.0
      %1303 = vadd.xlane.f32.xlu0 %v1302
      %v1304 = vpop.xlane.xlu0 %1303
      %v1305 = vpack.c.bf16 %v1293, %v1291
      %v1306 = vpack.c.bf16 %v1295, %v1295
      %1307 = vrot.lane.b32.xlu0 %v715, 104
      %v1308 = vpop.permute.xlu0 %1307
      %1309 = vrot.lane.b32.xlu0 %v716, 104
      %v1310 = vpop.permute.xlu0 %1309
      %v1313 = vsel %vm784, %v1305, 0
      %v1316 = vsel %vm784, %v1306, 0
      %v1319 = vsel %vm820, %v1310, 0
      %1321 = vmatprep.subr.bf16.mxu0 0
      %1322 = vmatpush1.bf16.msra.mxu0 0
      %1323 = vmatprep.subr.bf16.mxu0 0
      %1324 = vmatpush1.bf16.msra.mxu0 0
      %1325 = vmatprep.subr.bf16.mxu0 0
      %1326 = vmatpush1.bf16.msra.mxu0 0
      %1327 = vmatprep.subr.bf16.mxu0 0
      %1328 = vmatpush1.bf16.msra.mxu0 0
      %1329 = vmatprep.subr.bf16.mxu0 0
      %1330 = vmatpush1.bf16.msra.mxu0 0
      %1331 = vmatprep.subr.bf16.mxu0 0
      %1332 = vmatpush1.bf16.msra.mxu0 0
      %1333 = vmatprep.subr.bf16.mxu0 0
      %1334 = vmatpush1.bf16.msra.mxu0 %v1319
      %1335 = vmatprep.subr.bf16.mxu0 0
      %1336 = vmatpush1.bf16.msra.mxu0 %v1308
      %1337 = vmatprep.subr.bf16.mxu0 0
      %1338 = vmatpush2.bf16.msra.mxu0 0
      %1339 = vmatprep.subr.bf16.mxu0 0
      %1340 = vmatpush2.bf16.msra.mxu0 0
      %1341 = vmatprep.subr.bf16.mxu0 0
      %1342 = vmatpush2.bf16.msra.mxu0 0
      %1343 = vmatprep.subr.bf16.mxu0 0
      %1344 = vmatpush2.bf16.msra.mxu0 0
      %1345 = vmatprep.subr.bf16.mxu0 0
      %1346 = vmatpush2.bf16.msra.mxu0 0
      %1347 = vmatprep.subr.bf16.mxu0 0
      %1348 = vmatpush2.bf16.msra.mxu0 0
      %1349 = vmatprep.subr.bf16.mxu0 0
      %1350 = vmatpush2.bf16.msra.mxu0 0
      %1351 = vmatprep.subr.bf16.mxu0 0
      %1352 = vmatpush2.bf16.msra.mxu0 0
      %1353 = vmatprep.mubr.bf16.mxu0 0
      %1354 = vmatmul.mubr.bf16.gmra.mxu0 %v1313
      %v1355 = vpop.f32.mrf.mxu0
      %v1356 = vadd.f32 0.0, %v1355
      %v1357 = vpop.f32.mrf.mxu0
      %v1358 = vpop.f32.mrf.mxu0
      %v1359 = vadd.f32 0.0, %v1358
      %v1360 = vpop.f32.mrf.mxu0
      %1361 = vmatprep.mubr.bf16.mxu0 0
      %1362 = vmatmul.mubr.bf16.gmra.mxu0 %v1316
      %v1363 = vpop.f32.mrf.mxu0
      %v1364 = vadd.f32 0.0, %v1363
      %v1365 = vpop.f32.mrf.mxu0
      %v1366 = vpop.f32.mrf.mxu0
      %v1367 = vpop.f32.mrf.mxu0
      %1368 = vdwg.mxu0
      %v1369 = vrcp.pop %v1298
      %v1370 = vrcp.pop %v1301
      %v1371 = vrcp.pop %v1304
      %v1372 = vmul.f32 %v1356, %v1369
      %v1373 = vmul.f32 %v1359, %v1370
      %v1374 = vmul.f32 %v1364, %v1371
      %1375 = vrot.lane.b32.xlu0 %v713, 96
      %v1376 = vpop.permute.xlu0 %1375
      %1377 = vrot.lane.b32.xlu0 %v714, 96
      %v1378 = vpop.permute.xlu0 %1377
      %1379 = vrot.lane.b32.xlu0 %v713, 32
      %v1380 = vpop.permute.xlu0 %1379
      %1381 = vrot.lane.b32.xlu0 %v714, 32
      %v1382 = vpop.permute.xlu0 %1381
      %v1384 = vsel %vm723, %v1376, 0
      %v1387 = vsel %vm723, %v1378, 0
      %v1390 = vsel %vm723, %v1380, 0
      %v1393 = vsel %vm723, %v1382, 0
      %1395 = vmatprep.subr.bf16.mxu0 0
      %1396 = vmatpush1.bf16.xpose.msra.mxu0 0
      %1397 = vmatprep.subr.bf16.mxu0 0
      %1398 = vmatpush1.bf16.xpose.msra.mxu0 0
      %1399 = vmatprep.subr.bf16.mxu0 0
      %1400 = vmatpush1.bf16.xpose.msra.mxu0 0
      %1401 = vmatprep.subr.bf16.mxu0 0
      %1402 = vmatpush1.bf16.xpose.msra.mxu0 0
      %1403 = vmatprep.subr.bf16.mxu0 0
      %1404 = vmatpush1.bf16.xpose.msra.mxu0 0
      %1405 = vmatprep.subr.bf16.mxu0 0
      %1406 = vmatpush1.bf16.xpose.msra.mxu0 0
      %1407 = vmatprep.subr.bf16.mxu0 0
      %1408 = vmatpush1.bf16.xpose.msra.mxu0 %v1393
      %1409 = vmatprep.subr.bf16.mxu0 0
      %1410 = vmatpush1.bf16.xpose.msra.mxu0 %v1390
      %1411 = vmatprep.subr.bf16.mxu0 0
      %1412 = vmatpush2.bf16.xpose.msra.mxu0 0
      %1413 = vmatprep.subr.bf16.mxu0 0
      %1414 = vmatpush2.bf16.xpose.msra.mxu0 0
      %1415 = vmatprep.subr.bf16.mxu0 0
      %1416 = vmatpush2.bf16.xpose.msra.mxu0 0
      %1417 = vmatprep.subr.bf16.mxu0 0
      %1418 = vmatpush2.bf16.xpose.msra.mxu0 0
      %1419 = vmatprep.subr.bf16.mxu0 0
      %1420 = vmatpush2.bf16.xpose.msra.mxu0 0
      %1421 = vmatprep.subr.bf16.mxu0 0
      %1422 = vmatpush2.bf16.xpose.msra.mxu0 0
      %1423 = vmatprep.subr.bf16.mxu0 0
      %1424 = vmatpush2.bf16.xpose.msra.mxu0 0
      %1425 = vmatprep.subr.bf16.mxu0 0
      %1426 = vmatpush2.bf16.xpose.msra.mxu0 0
      %1427 = vmatprep.mubr.bf16.mxu0 0
      %1428 = vmatmul.mubr.bf16.gmra.mxu0 %v1384
      %v1429 = vpop.f32.mrf.mxu0
      %v1430 = vadd.f32 %v539, %v1429
      %v1431 = vpop.f32.mrf.mxu0
      %v1432 = vpop.f32.mrf.mxu0
      %v1433 = vadd.f32 %v539, %v1432
      %v1434 = vpop.f32.mrf.mxu0
      %1435 = vmatprep.mubr.bf16.mxu0 0
      %1436 = vmatmul.mubr.bf16.gmra.mxu0 %v1387
      %v1437 = vpop.f32.mrf.mxu0
      %v1438 = vadd.f32 %v539, %v1437
      %v1439 = vpop.f32.mrf.mxu0
      %v1440 = vpop.f32.mrf.mxu0
      %v1441 = vpop.f32.mrf.mxu0
      %1442 = vdwg.mxu0
      %v1443 = vsel %vm784, %v1430, -inf
      %1444 = vmax.xlane.f32.xlu0 %v1443
      %v1445 = vpop.xlane.xlu0 %1444
      %v1446 = vsel %vm784, %v1433, -inf
      %1447 = vmax.xlane.f32.xlu0 %v1446
      %v1448 = vpop.xlane.xlu0 %1447
      %v1449 = vsel %vm784, %v1438, -inf
      %1450 = vmax.xlane.f32.xlu0 %v1449
      %v1451 = vpop.xlane.xlu0 %1450
      %v1452 = vsub.f32 %v1430, %v1445
      %v1453 = vsub.f32 %v1433, %v1448
      %v1454 = vsub.f32 %v1438, %v1451
      %v1455 = vmul.f32 %v1452, 1.442695
      %v1456 = vpow.pop %v1455
      %v1457 = vmul.f32 %v1453, 1.442695
      %v1458 = vpow.pop %v1457
      %v1459 = vmul.f32 %v1454, 1.442695
      %v1460 = vpow.pop %v1459
      %v1461 = vsel %vm784, %v1456, 0.0
      %1462 = vadd.xlane.f32.xlu0 %v1461
      %v1463 = vpop.xlane.xlu0 %1462
      %v1464 = vsel %vm784, %v1458, 0.0
      %1465 = vadd.xlane.f32.xlu0 %v1464
      %v1466 = vpop.xlane.xlu0 %1465
      %v1467 = vsel %vm784, %v1460, 0.0
      %1468 = vadd.xlane.f32.xlu0 %v1467
      %v1469 = vpop.xlane.xlu0 %1468
      %v1470 = vpack.c.bf16 %v1458, %v1456
      %v1471 = vpack.c.bf16 %v1460, %v1460
      %1472 = vrot.lane.b32.xlu0 %v715, 96
      %v1473 = vpop.permute.xlu0 %1472
      %1474 = vrot.lane.b32.xlu0 %v716, 96
      %v1475 = vpop.permute.xlu0 %1474
      %v1478 = vsel %vm784, %v1470, 0
      %v1481 = vsel %vm784, %v1471, 0
      %v1484 = vsel %vm820, %v1475, 0
      %1486 = vmatprep.subr.bf16.mxu0 0
      %1487 = vmatpush1.bf16.msra.mxu0 0
      %1488 = vmatprep.subr.bf16.mxu0 0
      %1489 = vmatpush1.bf16.msra.mxu0 0
      %1490 = vmatprep.subr.bf16.mxu0 0
      %1491 = vmatpush1.bf16.msra.mxu0 0
      %1492 = vmatprep.subr.bf16.mxu0 0
      %1493 = vmatpush1.bf16.msra.mxu0 0
      %1494 = vmatprep.subr.bf16.mxu0 0
      %1495 = vmatpush1.bf16.msra.mxu0 0
      %1496 = vmatprep.subr.bf16.mxu0 0
      %1497 = vmatpush1.bf16.msra.mxu0 0
      %1498 = vmatprep.subr.bf16.mxu0 0
      %1499 = vmatpush1.bf16.msra.mxu0 %v1484
      %1500 = vmatprep.subr.bf16.mxu0 0
      %1501 = vmatpush1.bf16.msra.mxu0 %v1473
      %1502 = vmatprep.subr.bf16.mxu0 0
      %1503 = vmatpush2.bf16.msra.mxu0 0
      %1504 = vmatprep.subr.bf16.mxu0 0
      %1505 = vmatpush2.bf16.msra.mxu0 0
      %1506 = vmatprep.subr.bf16.mxu0 0
      %1507 = vmatpush2.bf16.msra.mxu0 0
      %1508 = vmatprep.subr.bf16.mxu0 0
      %1509 = vmatpush2.bf16.msra.mxu0 0
      %1510 = vmatprep.subr.bf16.mxu0 0
      %1511 = vmatpush2.bf16.msra.mxu0 0
      %1512 = vmatprep.subr.bf16.mxu0 0
      %1513 = vmatpush2.bf16.msra.mxu0 0
      %1514 = vmatprep.subr.bf16.mxu0 0
      %1515 = vmatpush2.bf16.msra.mxu0 0
      %1516 = vmatprep.subr.bf16.mxu0 0
      %1517 = vmatpush2.bf16.msra.mxu0 0
      %1518 = vmatprep.mubr.bf16.mxu0 0
      %1519 = vmatmul.mubr.bf16.gmra.mxu0 %v1478
      %v1520 = vpop.f32.mrf.mxu0
      %v1521 = vadd.f32 0.0, %v1520
      %v1522 = vpop.f32.mrf.mxu0
      %v1523 = vpop.f32.mrf.mxu0
      %v1524 = vadd.f32 0.0, %v1523
      %v1525 = vpop.f32.mrf.mxu0
      %1526 = vmatprep.mubr.bf16.mxu0 0
      %1527 = vmatmul.mubr.bf16.gmra.mxu0 %v1481
      %v1528 = vpop.f32.mrf.mxu0
      %v1529 = vadd.f32 0.0, %v1528
      %v1530 = vpop.f32.mrf.mxu0
      %v1531 = vpop.f32.mrf.mxu0
      %v1532 = vpop.f32.mrf.mxu0
      %1533 = vdwg.mxu0
      %v1534 = vrcp.pop %v1463
      %v1535 = vrcp.pop %v1466
      %v1536 = vrcp.pop %v1469
      %v1537 = vmul.f32 %v1521, %v1534
      %v1538 = vmul.f32 %v1524, %v1535
      %v1539 = vmul.f32 %v1529, %v1536
      %1540 = vrot.lane.b32.xlu0 %v713, 88
      %v1541 = vpop.permute.xlu0 %1540
      %1542 = vrot.lane.b32.xlu0 %v714, 88
      %v1543 = vpop.permute.xlu0 %1542
      %1544 = vrot.lane.b32.xlu0 %v713, 24
      %v1545 = vpop.permute.xlu0 %1544
      %1546 = vrot.lane.b32.xlu0 %v714, 24
      %v1547 = vpop.permute.xlu0 %1546
      %v1549 = vsel %vm723, %v1541, 0
      %v1552 = vsel %vm723, %v1543, 0
      %v1555 = vsel %vm723, %v1545, 0
      %v1558 = vsel %vm723, %v1547, 0
      %1560 = vmatprep.subr.bf16.mxu0 0
      %1561 = vmatpush1.bf16.xpose.msra.mxu0 0
      %1562 = vmatprep.subr.bf16.mxu0 0
      %1563 = vmatpush1.bf16.xpose.msra.mxu0 0
      %1564 = vmatprep.subr.bf16.mxu0 0
      %1565 = vmatpush1.bf16.xpose.msra.mxu0 0
      %1566 = vmatprep.subr.bf16.mxu0 0
      %1567 = vmatpush1.bf16.xpose.msra.mxu0 0
      %1568 = vmatprep.subr.bf16.mxu0 0
      %1569 = vmatpush1.bf16.xpose.msra.mxu0 0
      %1570 = vmatprep.subr.bf16.mxu0 0
      %1571 = vmatpush1.bf16.xpose.msra.mxu0 0
      %1572 = vmatprep.subr.bf16.mxu0 0
      %1573 = vmatpush1.bf16.xpose.msra.mxu0 %v1558
      %1574 = vmatprep.subr.bf16.mxu0 0
      %1575 = vmatpush1.bf16.xpose.msra.mxu0 %v1555
      %1576 = vmatprep.subr.bf16.mxu0 0
      %1577 = vmatpush2.bf16.xpose.msra.mxu0 0
      %1578 = vmatprep.subr.bf16.mxu0 0
      %1579 = vmatpush2.bf16.xpose.msra.mxu0 0
      %1580 = vmatprep.subr.bf16.mxu0 0
      %1581 = vmatpush2.bf16.xpose.msra.mxu0 0
      %1582 = vmatprep.subr.bf16.mxu0 0
      %1583 = vmatpush2.bf16.xpose.msra.mxu0 0
      %1584 = vmatprep.subr.bf16.mxu0 0
      %1585 = vmatpush2.bf16.xpose.msra.mxu0 0
      %1586 = vmatprep.subr.bf16.mxu0 0
      %1587 = vmatpush2.bf16.xpose.msra.mxu0 0
      %1588 = vmatprep.subr.bf16.mxu0 0
      %1589 = vmatpush2.bf16.xpose.msra.mxu0 0
      %1590 = vmatprep.subr.bf16.mxu0 0
      %1591 = vmatpush2.bf16.xpose.msra.mxu0 0
      %1592 = vmatprep.mubr.bf16.mxu0 0
      %1593 = vmatmul.mubr.bf16.gmra.mxu0 %v1549
      %v1594 = vpop.f32.mrf.mxu0
      %v1595 = vadd.f32 %v539, %v1594
      %v1596 = vpop.f32.mrf.mxu0
      %v1597 = vpop.f32.mrf.mxu0
      %v1598 = vadd.f32 %v539, %v1597
      %v1599 = vpop.f32.mrf.mxu0
      %1600 = vmatprep.mubr.bf16.mxu0 0
      %1601 = vmatmul.mubr.bf16.gmra.mxu0 %v1552
      %v1602 = vpop.f32.mrf.mxu0
      %v1603 = vadd.f32 %v539, %v1602
      %v1604 = vpop.f32.mrf.mxu0
      %v1605 = vpop.f32.mrf.mxu0
      %v1606 = vpop.f32.mrf.mxu0
      %1607 = vdwg.mxu0
      %v1608 = vsel %vm784, %v1595, -inf
      %1609 = vmax.xlane.f32.xlu0 %v1608
      %v1610 = vpop.xlane.xlu0 %1609
      %v1611 = vsel %vm784, %v1598, -inf
      %1612 = vmax.xlane.f32.xlu0 %v1611
      %v1613 = vpop.xlane.xlu0 %1612
      %v1614 = vsel %vm784, %v1603, -inf
      %1615 = vmax.xlane.f32.xlu0 %v1614
      %v1616 = vpop.xlane.xlu0 %1615
      %v1617 = vsub.f32 %v1595, %v1610
      %v1618 = vsub.f32 %v1598, %v1613
      %v1619 = vsub.f32 %v1603, %v1616
      %v1620 = vmul.f32 %v1617, 1.442695
      %v1621 = vpow.pop %v1620
      %v1622 = vmul.f32 %v1618, 1.442695
      %v1623 = vpow.pop %v1622
      %v1624 = vmul.f32 %v1619, 1.442695
      %v1625 = vpow.pop %v1624
      %v1626 = vsel %vm784, %v1621, 0.0
      %1627 = vadd.xlane.f32.xlu0 %v1626
      %v1628 = vpop.xlane.xlu0 %1627
      %v1629 = vsel %vm784, %v1623, 0.0
      %1630 = vadd.xlane.f32.xlu0 %v1629
      %v1631 = vpop.xlane.xlu0 %1630
      %v1632 = vsel %vm784, %v1625, 0.0
      %1633 = vadd.xlane.f32.xlu0 %v1632
      %v1634 = vpop.xlane.xlu0 %1633
      %v1635 = vpack.c.bf16 %v1623, %v1621
      %v1636 = vpack.c.bf16 %v1625, %v1625
      %1637 = vrot.lane.b32.xlu0 %v715, 88
      %v1638 = vpop.permute.xlu0 %1637
      %1639 = vrot.lane.b32.xlu0 %v716, 88
      %v1640 = vpop.permute.xlu0 %1639
      %v1643 = vsel %vm784, %v1635, 0
      %v1646 = vsel %vm784, %v1636, 0
      %v1649 = vsel %vm820, %v1640, 0
      %1651 = vmatprep.subr.bf16.mxu0 0
      %1652 = vmatpush1.bf16.msra.mxu0 0
      %1653 = vmatprep.subr.bf16.mxu0 0
      %1654 = vmatpush1.bf16.msra.mxu0 0
      %1655 = vmatprep.subr.bf16.mxu0 0
      %1656 = vmatpush1.bf16.msra.mxu0 0
      %1657 = vmatprep.subr.bf16.mxu0 0
      %1658 = vmatpush1.bf16.msra.mxu0 0
      %1659 = vmatprep.subr.bf16.mxu0 0
      %1660 = vmatpush1.bf16.msra.mxu0 0
      %1661 = vmatprep.subr.bf16.mxu0 0
      %1662 = vmatpush1.bf16.msra.mxu0 0
      %1663 = vmatprep.subr.bf16.mxu0 0
      %1664 = vmatpush1.bf16.msra.mxu0 %v1649
      %1665 = vmatprep.subr.bf16.mxu0 0
      %1666 = vmatpush1.bf16.msra.mxu0 %v1638
      %1667 = vmatprep.subr.bf16.mxu0 0
      %1668 = vmatpush2.bf16.msra.mxu0 0
      %1669 = vmatprep.subr.bf16.mxu0 0
      %1670 = vmatpush2.bf16.msra.mxu0 0
      %1671 = vmatprep.subr.bf16.mxu0 0
      %1672 = vmatpush2.bf16.msra.mxu0 0
      %1673 = vmatprep.subr.bf16.mxu0 0
      %1674 = vmatpush2.bf16.msra.mxu0 0
      %1675 = vmatprep.subr.bf16.mxu0 0
      %1676 = vmatpush2.bf16.msra.mxu0 0
      %1677 = vmatprep.subr.bf16.mxu0 0
      %1678 = vmatpush2.bf16.msra.mxu0 0
      %1679 = vmatprep.subr.bf16.mxu0 0
      %1680 = vmatpush2.bf16.msra.mxu0 0
      %1681 = vmatprep.subr.bf16.mxu0 0
      %1682 = vmatpush2.bf16.msra.mxu0 0
      %1683 = vmatprep.mubr.bf16.mxu0 0
      %1684 = vmatmul.mubr.bf16.gmra.mxu0 %v1643
      %v1685 = vpop.f32.mrf.mxu0
      %v1686 = vadd.f32 0.0, %v1685
      %v1687 = vpop.f32.mrf.mxu0
      %v1688 = vpop.f32.mrf.mxu0
      %v1689 = vadd.f32 0.0, %v1688
      %v1690 = vpop.f32.mrf.mxu0
      %1691 = vmatprep.mubr.bf16.mxu0 0
      %1692 = vmatmul.mubr.bf16.gmra.mxu0 %v1646
      %v1693 = vpop.f32.mrf.mxu0
      %v1694 = vadd.f32 0.0, %v1693
      %v1695 = vpop.f32.mrf.mxu0
      %v1696 = vpop.f32.mrf.mxu0
      %v1697 = vpop.f32.mrf.mxu0
      %1698 = vdwg.mxu0
      %v1699 = vrcp.pop %v1628
      %v1700 = vrcp.pop %v1631
      %v1701 = vrcp.pop %v1634
      %v1702 = vmul.f32 %v1686, %v1699
      %v1703 = vmul.f32 %v1689, %v1700
      %v1704 = vmul.f32 %v1694, %v1701
      %1705 = vrot.lane.b32.xlu0 %v713, 80
      %v1706 = vpop.permute.xlu0 %1705
      %1707 = vrot.lane.b32.xlu0 %v714, 80
      %v1708 = vpop.permute.xlu0 %1707
      %1709 = vrot.lane.b32.xlu0 %v713, 16
      %v1710 = vpop.permute.xlu0 %1709
      %1711 = vrot.lane.b32.xlu0 %v714, 16
      %v1712 = vpop.permute.xlu0 %1711
      %v1714 = vsel %vm723, %v1706, 0
      %v1717 = vsel %vm723, %v1708, 0
      %v1720 = vsel %vm723, %v1710, 0
      %v1723 = vsel %vm723, %v1712, 0
      %1725 = vmatprep.subr.bf16.mxu0 0
      %1726 = vmatpush1.bf16.xpose.msra.mxu0 0
      %1727 = vmatprep.subr.bf16.mxu0 0
      %1728 = vmatpush1.bf16.xpose.msra.mxu0 0
      %1729 = vmatprep.subr.bf16.mxu0 0
      %1730 = vmatpush1.bf16.xpose.msra.mxu0 0
      %1731 = vmatprep.subr.bf16.mxu0 0
      %1732 = vmatpush1.bf16.xpose.msra.mxu0 0
      %1733 = vmatprep.subr.bf16.mxu0 0
      %1734 = vmatpush1.bf16.xpose.msra.mxu0 0
      %1735 = vmatprep.subr.bf16.mxu0 0
      %1736 = vmatpush1.bf16.xpose.msra.mxu0 0
      %1737 = vmatprep.subr.bf16.mxu0 0
      %1738 = vmatpush1.bf16.xpose.msra.mxu0 %v1723
      %1739 = vmatprep.subr.bf16.mxu0 0
      %1740 = vmatpush1.bf16.xpose.msra.mxu0 %v1720
      %1741 = vmatprep.subr.bf16.mxu0 0
      %1742 = vmatpush2.bf16.xpose.msra.mxu0 0
      %1743 = vmatprep.subr.bf16.mxu0 0
      %1744 = vmatpush2.bf16.xpose.msra.mxu0 0
      %1745 = vmatprep.subr.bf16.mxu0 0
      %1746 = vmatpush2.bf16.xpose.msra.mxu0 0
      %1747 = vmatprep.subr.bf16.mxu0 0
      %1748 = vmatpush2.bf16.xpose.msra.mxu0 0
      %1749 = vmatprep.subr.bf16.mxu0 0
      %1750 = vmatpush2.bf16.xpose.msra.mxu0 0
      %1751 = vmatprep.subr.bf16.mxu0 0
      %1752 = vmatpush2.bf16.xpose.msra.mxu0 0
      %1753 = vmatprep.subr.bf16.mxu0 0
      %1754 = vmatpush2.bf16.xpose.msra.mxu0 0
      %1755 = vmatprep.subr.bf16.mxu0 0
      %1756 = vmatpush2.bf16.xpose.msra.mxu0 0
      %1757 = vmatprep.mubr.bf16.mxu0 0
      %1758 = vmatmul.mubr.bf16.gmra.mxu0 %v1714
      %v1759 = vpop.f32.mrf.mxu0
      %v1760 = vadd.f32 %v539, %v1759
      %v1761 = vpop.f32.mrf.mxu0
      %v1762 = vpop.f32.mrf.mxu0
      %v1763 = vadd.f32 %v539, %v1762
      %v1764 = vpop.f32.mrf.mxu0
      %1765 = vmatprep.mubr.bf16.mxu0 0
      %1766 = vmatmul.mubr.bf16.gmra.mxu0 %v1717
      %v1767 = vpop.f32.mrf.mxu0
      %v1768 = vadd.f32 %v539, %v1767
      %v1769 = vpop.f32.mrf.mxu0
      %v1770 = vpop.f32.mrf.mxu0
      %v1771 = vpop.f32.mrf.mxu0
      %1772 = vdwg.mxu0
      %v1773 = vsel %vm784, %v1760, -inf
      %1774 = vmax.xlane.f32.xlu0 %v1773
      %v1775 = vpop.xlane.xlu0 %1774
      %v1776 = vsel %vm784, %v1763, -inf
      %1777 = vmax.xlane.f32.xlu0 %v1776
      %v1778 = vpop.xlane.xlu0 %1777
      %v1779 = vsel %vm784, %v1768, -inf
      %1780 = vmax.xlane.f32.xlu0 %v1779
      %v1781 = vpop.xlane.xlu0 %1780
      %v1782 = vsub.f32 %v1760, %v1775
      %v1783 = vsub.f32 %v1763, %v1778
      %v1784 = vsub.f32 %v1768, %v1781
      %v1785 = vmul.f32 %v1782, 1.442695
      %v1786 = vpow.pop %v1785
      %v1787 = vmul.f32 %v1783, 1.442695
      %v1788 = vpow.pop %v1787
      %v1789 = vmul.f32 %v1784, 1.442695
      %v1790 = vpow.pop %v1789
      %v1791 = vsel %vm784, %v1786, 0.0
      %1792 = vadd.xlane.f32.xlu0 %v1791
      %v1793 = vpop.xlane.xlu0 %1792
      %v1794 = vsel %vm784, %v1788, 0.0
      %1795 = vadd.xlane.f32.xlu0 %v1794
      %v1796 = vpop.xlane.xlu0 %1795
      %v1797 = vsel %vm784, %v1790, 0.0
      %1798 = vadd.xlane.f32.xlu0 %v1797
      %v1799 = vpop.xlane.xlu0 %1798
      %v1800 = vpack.c.bf16 %v1788, %v1786
      %v1801 = vpack.c.bf16 %v1790, %v1790
      %1802 = vrot.lane.b32.xlu0 %v715, 80
      %v1803 = vpop.permute.xlu0 %1802
      %1804 = vrot.lane.b32.xlu0 %v716, 80
      %v1805 = vpop.permute.xlu0 %1804
      %v1808 = vsel %vm784, %v1800, 0
      %v1811 = vsel %vm784, %v1801, 0
      %v1814 = vsel %vm820, %v1805, 0
      %1816 = vmatprep.subr.bf16.mxu0 0
      %1817 = vmatpush1.bf16.msra.mxu0 0
      %1818 = vmatprep.subr.bf16.mxu0 0
      %1819 = vmatpush1.bf16.msra.mxu0 0
      %1820 = vmatprep.subr.bf16.mxu0 0
      %1821 = vmatpush1.bf16.msra.mxu0 0
      %1822 = vmatprep.subr.bf16.mxu0 0
      %1823 = vmatpush1.bf16.msra.mxu0 0
      %1824 = vmatprep.subr.bf16.mxu0 0
      %1825 = vmatpush1.bf16.msra.mxu0 0
      %1826 = vmatprep.subr.bf16.mxu0 0
      %1827 = vmatpush1.bf16.msra.mxu0 0
      %1828 = vmatprep.subr.bf16.mxu0 0
      %1829 = vmatpush1.bf16.msra.mxu0 %v1814
      %1830 = vmatprep.subr.bf16.mxu0 0
      %1831 = vmatpush1.bf16.msra.mxu0 %v1803
      %1832 = vmatprep.subr.bf16.mxu0 0
      %1833 = vmatpush2.bf16.msra.mxu0 0
      %1834 = vmatprep.subr.bf16.mxu0 0
      %1835 = vmatpush2.bf16.msra.mxu0 0
      %1836 = vmatprep.subr.bf16.mxu0 0
      %1837 = vmatpush2.bf16.msra.mxu0 0
      %1838 = vmatprep.subr.bf16.mxu0 0
      %1839 = vmatpush2.bf16.msra.mxu0 0
      %1840 = vmatprep.subr.bf16.mxu0 0
      %1841 = vmatpush2.bf16.msra.mxu0 0
      %1842 = vmatprep.subr.bf16.mxu0 0
      %1843 = vmatpush2.bf16.msra.mxu0 0
      %1844 = vmatprep.subr.bf16.mxu0 0
      %1845 = vmatpush2.bf16.msra.mxu0 0
      %1846 = vmatprep.subr.bf16.mxu0 0
      %1847 = vmatpush2.bf16.msra.mxu0 0
      %1848 = vmatprep.mubr.bf16.mxu0 0
      %1849 = vmatmul.mubr.bf16.gmra.mxu0 %v1808
      %v1850 = vpop.f32.mrf.mxu0
      %v1851 = vadd.f32 0.0, %v1850
      %v1852 = vpop.f32.mrf.mxu0
      %v1853 = vpop.f32.mrf.mxu0
      %v1854 = vadd.f32 0.0, %v1853
      %v1855 = vpop.f32.mrf.mxu0
      %1856 = vmatprep.mubr.bf16.mxu0 0
      %1857 = vmatmul.mubr.bf16.gmra.mxu0 %v1811
      %v1858 = vpop.f32.mrf.mxu0
      %v1859 = vadd.f32 0.0, %v1858
      %v1860 = vpop.f32.mrf.mxu0
      %v1861 = vpop.f32.mrf.mxu0
      %v1862 = vpop.f32.mrf.mxu0
      %1863 = vdwg.mxu0
      %v1864 = vrcp.pop %v1793
      %v1865 = vrcp.pop %v1796
      %v1866 = vrcp.pop %v1799
      %v1867 = vmul.f32 %v1851, %v1864
      %v1868 = vmul.f32 %v1854, %v1865
      %v1869 = vmul.f32 %v1859, %v1866
      %1870 = vrot.lane.b32.xlu0 %v713, 72
      %v1871 = vpop.permute.xlu0 %1870
      %1872 = vrot.lane.b32.xlu0 %v714, 72
      %v1873 = vpop.permute.xlu0 %1872
      %1874 = vrot.lane.b32.xlu0 %v713, 8
      %v1875 = vpop.permute.xlu0 %1874
      %1876 = vrot.lane.b32.xlu0 %v714, 8
      %v1877 = vpop.permute.xlu0 %1876
      %v1879 = vsel %vm723, %v1871, 0
      %v1882 = vsel %vm723, %v1873, 0
      %v1885 = vsel %vm723, %v1875, 0
      %v1888 = vsel %vm723, %v1877, 0
      %1890 = vmatprep.subr.bf16.mxu0 0
      %1891 = vmatpush1.bf16.xpose.msra.mxu0 0
      %1892 = vmatprep.subr.bf16.mxu0 0
      %1893 = vmatpush1.bf16.xpose.msra.mxu0 0
      %1894 = vmatprep.subr.bf16.mxu0 0
      %1895 = vmatpush1.bf16.xpose.msra.mxu0 0
      %1896 = vmatprep.subr.bf16.mxu0 0
      %1897 = vmatpush1.bf16.xpose.msra.mxu0 0
      %1898 = vmatprep.subr.bf16.mxu0 0
      %1899 = vmatpush1.bf16.xpose.msra.mxu0 0
      %1900 = vmatprep.subr.bf16.mxu0 0
      %1901 = vmatpush1.bf16.xpose.msra.mxu0 0
      %1902 = vmatprep.subr.bf16.mxu0 0
      %1903 = vmatpush1.bf16.xpose.msra.mxu0 %v1888
      %1904 = vmatprep.subr.bf16.mxu0 0
      %1905 = vmatpush1.bf16.xpose.msra.mxu0 %v1885
      %1906 = vmatprep.subr.bf16.mxu0 0
      %1907 = vmatpush2.bf16.xpose.msra.mxu0 0
      %1908 = vmatprep.subr.bf16.mxu0 0
      %1909 = vmatpush2.bf16.xpose.msra.mxu0 0
      %1910 = vmatprep.subr.bf16.mxu0 0
      %1911 = vmatpush2.bf16.xpose.msra.mxu0 0
      %1912 = vmatprep.subr.bf16.mxu0 0
      %1913 = vmatpush2.bf16.xpose.msra.mxu0 0
      %1914 = vmatprep.subr.bf16.mxu0 0
      %1915 = vmatpush2.bf16.xpose.msra.mxu0 0
      %1916 = vmatprep.subr.bf16.mxu0 0
      %1917 = vmatpush2.bf16.xpose.msra.mxu0 0
      %1918 = vmatprep.subr.bf16.mxu0 0
      %1919 = vmatpush2.bf16.xpose.msra.mxu0 0
      %1920 = vmatprep.subr.bf16.mxu0 0
      %1921 = vmatpush2.bf16.xpose.msra.mxu0 0
      %1922 = vmatprep.mubr.bf16.mxu0 0
      %1923 = vmatmul.mubr.bf16.gmra.mxu0 %v1879
      %v1924 = vpop.f32.mrf.mxu0
      %v1925 = vadd.f32 %v539, %v1924
      %v1926 = vpop.f32.mrf.mxu0
      %v1927 = vpop.f32.mrf.mxu0
      %v1928 = vadd.f32 %v539, %v1927
      %v1929 = vpop.f32.mrf.mxu0
      %1930 = vmatprep.mubr.bf16.mxu0 0
      %1931 = vmatmul.mubr.bf16.gmra.mxu0 %v1882
      %v1932 = vpop.f32.mrf.mxu0
      %v1933 = vadd.f32 %v539, %v1932
      %v1934 = vpop.f32.mrf.mxu0
      %v1935 = vpop.f32.mrf.mxu0
      %v1936 = vpop.f32.mrf.mxu0
      %1937 = vdwg.mxu0
      %v1938 = vsel %vm784, %v1925, -inf
      %1939 = vmax.xlane.f32.xlu0 %v1938
      %v1940 = vpop.xlane.xlu0 %1939
      %v1941 = vsel %vm784, %v1928, -inf
      %1942 = vmax.xlane.f32.xlu0 %v1941
      %v1943 = vpop.xlane.xlu0 %1942
      %v1944 = vsel %vm784, %v1933, -inf
      %1945 = vmax.xlane.f32.xlu0 %v1944
      %v1946 = vpop.xlane.xlu0 %1945
      %v1947 = vsub.f32 %v1925, %v1940
      %v1948 = vsub.f32 %v1928, %v1943
      %v1949 = vsub.f32 %v1933, %v1946
      %v1950 = vmul.f32 %v1947, 1.442695
      %v1951 = vpow.pop %v1950
      %v1952 = vmul.f32 %v1948, 1.442695
      %v1953 = vpow.pop %v1952
      %v1954 = vmul.f32 %v1949, 1.442695
      %v1955 = vpow.pop %v1954
      %v1956 = vsel %vm784, %v1951, 0.0
      %1957 = vadd.xlane.f32.xlu0 %v1956
      %v1958 = vpop.xlane.xlu0 %1957
      %v1959 = vsel %vm784, %v1953, 0.0
      %1960 = vadd.xlane.f32.xlu0 %v1959
      %v1961 = vpop.xlane.xlu0 %1960
      %v1962 = vsel %vm784, %v1955, 0.0
      %1963 = vadd.xlane.f32.xlu0 %v1962
      %v1964 = vpop.xlane.xlu0 %1963
      %v1965 = vpack.c.bf16 %v1953, %v1951
      %v1966 = vpack.c.bf16 %v1955, %v1955
      %1967 = vrot.lane.b32.xlu0 %v715, 72
      %v1968 = vpop.permute.xlu0 %1967
      %1969 = vrot.lane.b32.xlu0 %v716, 72
      %v1970 = vpop.permute.xlu0 %1969
      %v1973 = vsel %vm784, %v1965, 0
      %v1976 = vsel %vm784, %v1966, 0
      %v1979 = vsel %vm820, %v1970, 0
      %1981 = vmatprep.subr.bf16.mxu0 0
      %1982 = vmatpush1.bf16.msra.mxu0 0
      %1983 = vmatprep.subr.bf16.mxu0 0
      %1984 = vmatpush1.bf16.msra.mxu0 0
      %1985 = vmatprep.subr.bf16.mxu0 0
      %1986 = vmatpush1.bf16.msra.mxu0 0
      %1987 = vmatprep.subr.bf16.mxu0 0
      %1988 = vmatpush1.bf16.msra.mxu0 0
      %1989 = vmatprep.subr.bf16.mxu0 0
      %1990 = vmatpush1.bf16.msra.mxu0 0
      %1991 = vmatprep.subr.bf16.mxu0 0
      %1992 = vmatpush1.bf16.msra.mxu0 0
      %1993 = vmatprep.subr.bf16.mxu0 0
      %1994 = vmatpush1.bf16.msra.mxu0 %v1979
      %1995 = vmatprep.subr.bf16.mxu0 0
      %1996 = vmatpush1.bf16.msra.mxu0 %v1968
      %1997 = vmatprep.subr.bf16.mxu0 0
      %1998 = vmatpush2.bf16.msra.mxu0 0
      %1999 = vmatprep.subr.bf16.mxu0 0
      %2000 = vmatpush2.bf16.msra.mxu0 0
      %2001 = vmatprep.subr.bf16.mxu0 0
      %2002 = vmatpush2.bf16.msra.mxu0 0
      %2003 = vmatprep.subr.bf16.mxu0 0
      %2004 = vmatpush2.bf16.msra.mxu0 0
      %2005 = vmatprep.subr.bf16.mxu0 0
      %2006 = vmatpush2.bf16.msra.mxu0 0
      %2007 = vmatprep.subr.bf16.mxu0 0
      %2008 = vmatpush2.bf16.msra.mxu0 0
      %2009 = vmatprep.subr.bf16.mxu0 0
      %2010 = vmatpush2.bf16.msra.mxu0 0
      %2011 = vmatprep.subr.bf16.mxu0 0
      %2012 = vmatpush2.bf16.msra.mxu0 0
      %2013 = vmatprep.mubr.bf16.mxu0 0
      %2014 = vmatmul.mubr.bf16.gmra.mxu0 %v1973
      %v2015 = vpop.f32.mrf.mxu0
      %v2016 = vadd.f32 0.0, %v2015
      %v2017 = vpop.f32.mrf.mxu0
      %v2018 = vpop.f32.mrf.mxu0
      %v2019 = vadd.f32 0.0, %v2018
      %v2020 = vpop.f32.mrf.mxu0
      %2021 = vmatprep.mubr.bf16.mxu0 0
      %2022 = vmatmul.mubr.bf16.gmra.mxu0 %v1976
      %v2023 = vpop.f32.mrf.mxu0
      %v2024 = vadd.f32 0.0, %v2023
      %v2025 = vpop.f32.mrf.mxu0
      %v2026 = vpop.f32.mrf.mxu0
      %v2027 = vpop.f32.mrf.mxu0
      %2028 = vdwg.mxu0
      %v2029 = vrcp.pop %v1958
      %v2030 = vrcp.pop %v1961
      %v2031 = vrcp.pop %v1964
      %v2032 = vmul.f32 %v2016, %v2029
      %v2033 = vmul.f32 %v2019, %v2030
      %v2034 = vmul.f32 %v2024, %v2031
      %2038 = vrot.lane.b32.xlu0 %v1042, 8
      %v2039 = vpop.permute.xlu0 %2038
      %2040 = vrot.lane.b32.xlu0 %v1043, 8
      %v2041 = vpop.permute.xlu0 %2040
      %2042 = vrot.lane.b32.xlu0 %v1044, 8
      %v2043 = vpop.permute.xlu0 %2042
      %2050 = vrot.lane.b32.xlu0 %v1207, 16
      %v2051 = vpop.permute.xlu0 %2050
      %2052 = vrot.lane.b32.xlu0 %v1208, 16
      %v2053 = vpop.permute.xlu0 %2052
      %2054 = vrot.lane.b32.xlu0 %v1209, 16
      %v2055 = vpop.permute.xlu0 %2054
      %2062 = vrot.lane.b32.xlu0 %v1372, 24
      %v2063 = vpop.permute.xlu0 %2062
      %2064 = vrot.lane.b32.xlu0 %v1373, 24
      %v2065 = vpop.permute.xlu0 %2064
      %2066 = vrot.lane.b32.xlu0 %v1374, 24
      %v2067 = vpop.permute.xlu0 %2066
      %2074 = vrot.lane.b32.xlu0 %v1537, 32
      %v2075 = vpop.permute.xlu0 %2074
      %2076 = vrot.lane.b32.xlu0 %v1538, 32
      %v2077 = vpop.permute.xlu0 %2076
      %2078 = vrot.lane.b32.xlu0 %v1539, 32
      %v2079 = vpop.permute.xlu0 %2078
      %2086 = vrot.lane.b32.xlu0 %v1702, 40
      %v2087 = vpop.permute.xlu0 %2086
      %2088 = vrot.lane.b32.xlu0 %v1703, 40
      %v2089 = vpop.permute.xlu0 %2088
      %2090 = vrot.lane.b32.xlu0 %v1704, 40
      %v2091 = vpop.permute.xlu0 %2090
      %2098 = vrot.lane.b32.xlu0 %v1867, 48
      %v2099 = vpop.permute.xlu0 %2098
      %2100 = vrot.lane.b32.xlu0 %v1868, 48
      %v2101 = vpop.permute.xlu0 %2100
      %2102 = vrot.lane.b32.xlu0 %v1869, 48
      %v2103 = vpop.permute.xlu0 %2102
      %2110 = vrot.lane.b32.xlu0 %v2032, 56
      %v2111 = vpop.permute.xlu0 %2110
      %2112 = vrot.lane.b32.xlu0 %v2033, 56
      %v2113 = vpop.permute.xlu0 %2112
      %2114 = vrot.lane.b32.xlu0 %v2034, 56
      %v2115 = vpop.permute.xlu0 %2114
      %v2119 = vsel %vm723, %v875, %v2039
      %v2120 = vsel %vm723, %v876, %v2041
      %v2121 = vsel %vm723, %v877, %v2043
      %vm2122 = vcmask 130048
      %v2123 = vsel %vm2122, %v2119, %v2051
      %v2124 = vsel %vm2122, %v2120, %v2053
      %v2125 = vsel %vm2122, %v2121, %v2055
      %v2126 = vsel %vm784, %v2123, %v2063
      %v2127 = vsel %vm784, %v2124, %v2065
      %v2128 = vsel %vm784, %v2125, %v2067
      %vm2129 = vcmask 261120
      %v2130 = vsel %vm2129, %v2126, %v2075
      %v2131 = vsel %vm2129, %v2127, %v2077
      %v2132 = vsel %vm2129, %v2128, %v2079
      %vm2133 = vcmask 326656
      %v2134 = vsel %vm2133, %v2130, %v2087
      %v2135 = vsel %vm2133, %v2131, %v2089
      %v2136 = vsel %vm2133, %v2132, %v2091
      %vm2137 = vcmask 392192
      %v2138 = vsel %vm2137, %v2134, %v2099
      %v2139 = vsel %vm2137, %v2135, %v2101
      %v2140 = vsel %vm2137, %v2136, %v2103
      %vm2141 = vcmask 457728
      %v2142 = vsel %vm2141, %v2138, %v2111
      %v2143 = vsel %vm2141, %v2139, %v2113
      %v2144 = vsel %vm2141, %v2140, %v2115
      %v2145 = vpack.c.bf16 %v2143, %v2142
      %v2146 = vpack.c.bf16 %v2144, %v2144
      %v2147 = vld [vmem:[%s4] sm:$0xf]
      %v2148 = vld [vmem:[%s4 + $0x4] sm:$0xf]
      %v2149 = vld [vmem:[%s4 + $0x8] sm:$0xf]
      %v2150 = vld [vmem:[%s4 + $0xc] sm:$0xf]
      %v2151 = vld [vmem:[%s4 + $0x10] sm:$0xf]
      %v2152 = vld [vmem:[%s4 + $0x14] sm:$0xf]
      %v2153 = vld [vmem:[%s4 + $0x18] sm:$0xf]
      %v2154 = vld [vmem:[%s4 + $0x1c] sm:$0xf]
      %v2163 = vunpack.c.l.b16 %v2147
      %v2164 = vunpack.c.l.b16 %v2148
      %v2165 = vunpack.c.l.b16 %v2149
      %v2166 = vunpack.c.l.b16 %v2150
      %v2167 = vunpack.c.l.b16 %v2151
      %v2168 = vunpack.c.l.b16 %v2152
      %v2169 = vunpack.c.l.b16 %v2153
      %v2170 = vunpack.c.l.b16 %v2154
      %v2171 = vpack.c.b16 %v2164, %v2163
      %v2172 = vpack.c.b16 %v2166, %v2165
      %v2173 = vpack.c.b16 %v2168, %v2167
      %v2174 = vpack.c.b16 %v2170, %v2169
      %v2180 = vsel %vm481, %v2145, 0
      %v2183 = vsel %vm481, %v2146, 0
      %2185 = vmatprep.subr.bf16.mxu0 0
      %2186 = vmatpush1.bf16.msra.mxu0 0
      %2187 = vmatprep.subr.bf16.mxu0 0
      %2188 = vmatpush1.bf16.msra.mxu0 0
      %2189 = vmatprep.subr.bf16.mxu0 0
      %2190 = vmatpush1.bf16.msra.mxu0 0
      %2191 = vmatprep.subr.bf16.mxu0 0
      %2192 = vmatpush1.bf16.msra.mxu0 0
      %2193 = vmatprep.subr.bf16.mxu0 0
      %2194 = vmatpush1.bf16.msra.mxu0 %v2174
      %2195 = vmatprep.subr.bf16.mxu0 0
      %2196 = vmatpush1.bf16.msra.mxu0 %v2173
      %2197 = vmatprep.subr.bf16.mxu0 0
      %2198 = vmatpush1.bf16.msra.mxu0 %v2172
      %2199 = vmatprep.subr.bf16.mxu0 0
      %2200 = vmatpush1.bf16.msra.mxu0 %v2171
      %2201 = vmatprep.subr.bf16.mxu0 0
      %2202 = vmatpush2.bf16.msra.mxu0 0
      %2203 = vmatprep.subr.bf16.mxu0 0
      %2204 = vmatpush2.bf16.msra.mxu0 0
      %2205 = vmatprep.subr.bf16.mxu0 0
      %2206 = vmatpush2.bf16.msra.mxu0 0
      %2207 = vmatprep.subr.bf16.mxu0 0
      %2208 = vmatpush2.bf16.msra.mxu0 0
      %2209 = vmatprep.subr.bf16.mxu0 0
      %2210 = vmatpush2.bf16.msra.mxu0 0
      %2211 = vmatprep.subr.bf16.mxu0 0
      %2212 = vmatpush2.bf16.msra.mxu0 0
      %2213 = vmatprep.subr.bf16.mxu0 0
      %2214 = vmatpush2.bf16.msra.mxu0 0
      %2215 = vmatprep.subr.bf16.mxu0 0
      %2216 = vmatpush2.bf16.msra.mxu0 0
      %2217 = vmatprep.mubr.bf16.mxu0 0
      %2218 = vmatmul.mubr.bf16.gmra.mxu0 %v2180
      %v2219 = vpop.f32.mrf.mxu0
      %v2220 = vadd.f32 0.0, %v2219
      %v2221 = vpop.f32.mrf.mxu0
      %v2222 = vpop.f32.mrf.mxu0
      %v2223 = vadd.f32 0.0, %v2222
      %v2224 = vpop.f32.mrf.mxu0
      %2225 = vmatprep.mubr.bf16.mxu0 0
      %2226 = vmatmul.mubr.bf16.gmra.mxu0 %v2183
      %v2227 = vpop.f32.mrf.mxu0
      %v2228 = vadd.f32 0.0, %v2227
      %v2229 = vpop.f32.mrf.mxu0
      %v2230 = vpop.f32.mrf.mxu0
      %v2231 = vpop.f32.mrf.mxu0
      %2232 = vdwg.mxu0
      %v2233 = vadd.f32 %v523, %v2220
      %v2234 = vadd.f32 %v526, %v2223
      %v2235 = vadd.f32 %v531, %v2228
      %v2236 = vadd.f32 %v2233, %v547
      %v2237 = vadd.f32 %v2234, %v547
      %v2238 = vadd.f32 %v2235, %v547
      %v2239 = vsel %vm481, %v2236, 0.0
      %2240 = vadd.xlane.f32.xlu0 %v2239
      %v2241 = vpop.xlane.xlu0 %2240
      %v2242 = vsel %vm481, %v2237, 0.0
      %2243 = vadd.xlane.f32.xlu0 %v2242
      %v2244 = vpop.xlane.xlu0 %2243
      %v2245 = vsel %vm481, %v2238, 0.0
      %2246 = vadd.xlane.f32.xlu0 %v2245
      %v2247 = vpop.xlane.xlu0 %2246
      %v2248 = vmul.f32 %v2241, %v558
      %v2249 = vmul.f32 %v2244, %v558
      %v2250 = vmul.f32 %v2247, %v558
      %v2251 = vsub.f32 %v2236, %v2248
      %v2252 = vsub.f32 %v2237, %v2249
      %v2253 = vsub.f32 %v2238, %v2250
      %v2254 = vmul.f32 %v2251, %v2251
      %v2255 = vmul.f32 %v2252, %v2252
      %v2256 = vmul.f32 %v2253, %v2253
      %v2257 = vsel %vm481, %v2254, 0.0
      %2258 = vadd.xlane.f32.xlu0 %v2257
      %v2259 = vpop.xlane.xlu0 %2258
      %v2260 = vsel %vm481, %v2255, 0.0
      %2261 = vadd.xlane.f32.xlu0 %v2260
      %v2262 = vpop.xlane.xlu0 %2261
      %v2263 = vsel %vm481, %v2256, 0.0
      %2264 = vadd.xlane.f32.xlu0 %v2263
      %v2265 = vpop.xlane.xlu0 %2264
      %v2266 = vmul.f32 %v2259, %v558
      %v2267 = vmul.f32 %v2262, %v558
      %v2268 = vmul.f32 %v2265, %v558
      %v2269 = vadd.f32 %v2266, 1e-05
      %v2270 = vadd.f32 %v2267, 1e-05
      %v2271 = vadd.f32 %v2268, 1e-05
      %v2272 = vrsqrt.pop %v2269
      %v2273 = vrsqrt.pop %v2270
      %v2274 = vrsqrt.pop %v2271
      %v2275 = vmul.f32 %v2251, %v2272
      %v2276 = vmul.f32 %v2252, %v2273
      %v2277 = vmul.f32 %v2253, %v2274
      %v2278 = vmul.f32 %v2275, %v545
      %v2279 = vmul.f32 %v2276, %v545
      %v2280 = vmul.f32 %v2277, %v545
      %v2281 = vadd.f32 %v2278, %v546
      %v2282 = vadd.f32 %v2279, %v546
      %v2283 = vadd.f32 %v2280, %v546
      %v2284 = vpack.c.bf16 %v2282, %v2281
      %v2285 = vpack.c.bf16 %v2283, %v2283
      %v2286 = vld [vmem:[%s5] sm:$0xff]
      %v2287 = vld [vmem:[%s5 + $0x8] sm:$0xff]
      %v2288 = vld [vmem:[%s5 + $0x10] sm:$0xff]
      %v2289 = vld [vmem:[%s5 + $0x18] sm:$0xff]
      %v2290 = vld [vmem:[%s5 + $0x20] sm:$0xff]
      %v2291 = vld [vmem:[%s5 + $0x28] sm:$0xff]
      %v2292 = vld [vmem:[%s5 + $0x30] sm:$0xff]
      %v2293 = vld [vmem:[%s5 + $0x38] sm:$0xff]
      %v2295 = vlaneseq
      %v2296 = vshrl.u32 %v2295, 7
      %v2297 = vsub.s32 0, %v2296
      %v2298 = vrot.slane %v542, %v2297
      %v2299 = vlaneseq
      %v2300 = vshrl.u32 %v2299, 7
      %v2301 = vsub.s32 1, %v2300
      %v2302 = vrot.slane %v542, %v2301
      %v2313 = vunpack.c.l.b16 %v2286
      %v2314 = vunpack.c.h.b16 %v2286
      %v2315 = vunpack.c.l.b16 %v2287
      %v2316 = vunpack.c.h.b16 %v2287
      %v2317 = vunpack.c.l.b16 %v2288
      %v2318 = vunpack.c.h.b16 %v2288
      %v2319 = vunpack.c.l.b16 %v2289
      %v2320 = vunpack.c.h.b16 %v2289
      %v2321 = vunpack.c.l.b16 %v2290
      %v2322 = vunpack.c.h.b16 %v2290
      %v2323 = vunpack.c.l.b16 %v2291
      %v2324 = vunpack.c.h.b16 %v2291
      %v2325 = vunpack.c.l.b16 %v2292
      %v2326 = vunpack.c.h.b16 %v2292
      %v2327 = vunpack.c.l.b16 %v2293
      %v2328 = vunpack.c.h.b16 %v2293
      %v2329 = vpack.c.b16 %v2315, %v2313
      %v2330 = vpack.c.b16 %v2316, %v2314
      %v2331 = vpack.c.b16 %v2319, %v2317
      %v2332 = vpack.c.b16 %v2320, %v2318
      %v2333 = vpack.c.b16 %v2323, %v2321
      %v2334 = vpack.c.b16 %v2324, %v2322
      %v2335 = vpack.c.b16 %v2327, %v2325
      %v2336 = vpack.c.b16 %v2328, %v2326
      %v2346 = vsel %vm481, %v2284, 0
      %v2349 = vsel %vm481, %v2285, 0
      %2351 = vmatprep.subr.bf16.mxu0 0
      %2352 = vmatpush1.bf16.msra.mxu0 0
      %2353 = vmatprep.subr.bf16.mxu0 0
      %2354 = vmatpush1.bf16.msra.mxu0 0
      %2355 = vmatprep.subr.bf16.mxu0 0
      %2356 = vmatpush1.bf16.msra.mxu0 0
      %2357 = vmatprep.subr.bf16.mxu0 0
      %2358 = vmatpush1.bf16.msra.mxu0 0
      %2359 = vmatprep.subr.bf16.mxu0 %v2336
      %2360 = vmatpush1.bf16.msra.mxu0 %v2335
      %2361 = vmatprep.subr.bf16.mxu0 %v2334
      %2362 = vmatpush1.bf16.msra.mxu0 %v2333
      %2363 = vmatprep.subr.bf16.mxu0 %v2332
      %2364 = vmatpush1.bf16.msra.mxu0 %v2331
      %2365 = vmatprep.subr.bf16.mxu0 %v2330
      %2366 = vmatpush1.bf16.msra.mxu0 %v2329
      %2367 = vmatprep.subr.bf16.mxu0 0
      %2368 = vmatpush2.bf16.msra.mxu0 0
      %2369 = vmatprep.subr.bf16.mxu0 0
      %2370 = vmatpush2.bf16.msra.mxu0 0
      %2371 = vmatprep.subr.bf16.mxu0 0
      %2372 = vmatpush2.bf16.msra.mxu0 0
      %2373 = vmatprep.subr.bf16.mxu0 0
      %2374 = vmatpush2.bf16.msra.mxu0 0
      %2375 = vmatprep.subr.bf16.mxu0 0
      %2376 = vmatpush2.bf16.msra.mxu0 0
      %2377 = vmatprep.subr.bf16.mxu0 0
      %2378 = vmatpush2.bf16.msra.mxu0 0
      %2379 = vmatprep.subr.bf16.mxu0 0
      %2380 = vmatpush2.bf16.msra.mxu0 0
      %2381 = vmatprep.subr.bf16.mxu0 0
      %2382 = vmatpush2.bf16.msra.mxu0 0
      %2383 = vmatprep.mubr.bf16.mxu0 0
      %2384 = vmatmul.mubr.bf16.gmra.mxu0 %v2346
      %v2385 = vpop.f32.mrf.mxu0
      %v2386 = vadd.f32 %v2298, %v2385
      %v2387 = vpop.f32.mrf.mxu0
      %v2388 = vadd.f32 %v2302, %v2387
      %v2389 = vpop.f32.mrf.mxu0
      %v2390 = vadd.f32 %v2298, %v2389
      %v2391 = vpop.f32.mrf.mxu0
      %v2392 = vadd.f32 %v2302, %v2391
      %2393 = vmatprep.mubr.bf16.mxu0 0
      %2394 = vmatmul.mubr.bf16.gmra.mxu0 %v2349
      %v2395 = vpop.f32.mrf.mxu0
      %v2396 = vadd.f32 %v2298, %v2395
      %v2397 = vpop.f32.mrf.mxu0
      %v2398 = vadd.f32 %v2302, %v2397
      %v2399 = vpop.f32.mrf.mxu0
      %v2400 = vpop.f32.mrf.mxu0
      %2401 = vdwg.mxu0
      %v2402 = vmul.f32 %v2386, %v2386
      %v2403 = vmul.f32 %v2388, %v2388
      %v2404 = vmul.f32 %v2390, %v2390
      %v2405 = vmul.f32 %v2392, %v2392
      %v2406 = vmul.f32 %v2396, %v2396
      %v2407 = vmul.f32 %v2398, %v2398
      %v2408 = vmul.f32 %v2386, %v2402
      %v2409 = vmul.f32 %v2388, %v2403
      %v2410 = vmul.f32 %v2390, %v2404
      %v2411 = vmul.f32 %v2392, %v2405
      %v2412 = vmul.f32 %v2396, %v2406
      %v2413 = vmul.f32 %v2398, %v2407
      %v2414 = vmul.f32 %v2408, 0.044715
      %v2415 = vmul.f32 %v2409, 0.044715
      %v2416 = vmul.f32 %v2410, 0.044715
      %v2417 = vmul.f32 %v2411, 0.044715
      %v2418 = vmul.f32 %v2412, 0.044715
      %v2419 = vmul.f32 %v2413, 0.044715
      %v2420 = vadd.f32 %v2386, %v2414
      %v2421 = vadd.f32 %v2388, %v2415
      %v2422 = vadd.f32 %v2390, %v2416
      %v2423 = vadd.f32 %v2392, %v2417
      %v2424 = vadd.f32 %v2396, %v2418
      %v2425 = vadd.f32 %v2398, %v2419
      %v2426 = vmul.f32 %v2420, 0.7978846
      %v2427 = vmul.f32 %v2421, 0.7978846
      %v2428 = vmul.f32 %v2422, 0.7978846
      %v2429 = vmul.f32 %v2423, 0.7978846
      %v2430 = vmul.f32 %v2424, 0.7978846
      %v2431 = vmul.f32 %v2425, 0.7978846
      %v2432 = vtanh.pop %v2426
      %v2433 = vtanh.pop %v2427
      %v2434 = vtanh.pop %v2428
      %v2435 = vtanh.pop %v2429
      %v2436 = vtanh.pop %v2430
      %v2437 = vtanh.pop %v2431
      %v2438 = vadd.f32 %v2432, 1.0
      %v2439 = vadd.f32 %v2433, 1.0
      %v2440 = vadd.f32 %v2434, 1.0
      %v2441 = vadd.f32 %v2435, 1.0
      %v2442 = vadd.f32 %v2436, 1.0
      %v2443 = vadd.f32 %v2437, 1.0
      %v2444 = vmul.f32 %v2438, 0.5
      %v2445 = vmul.f32 %v2439, 0.5
      %v2446 = vmul.f32 %v2440, 0.5
      %v2447 = vmul.f32 %v2441, 0.5
      %v2448 = vmul.f32 %v2442, 0.5
      %v2449 = vmul.f32 %v2443, 0.5
      %v2450 = vmul.f32 %v2386, %v2444
      %v2451 = vmul.f32 %v2388, %v2445
      %v2452 = vmul.f32 %v2390, %v2446
      %v2453 = vmul.f32 %v2392, %v2447
      %v2454 = vmul.f32 %v2396, %v2448
      %v2455 = vmul.f32 %v2398, %v2449
      %v2456 = vpack.c.bf16 %v2452, %v2450
      %v2457 = vpack.c.bf16 %v2453, %v2451
      %v2458 = vpack.c.bf16 %v2454, %v2454
      %v2459 = vpack.c.bf16 %v2455, %v2455
      %v2460 = vld [vmem:[%s6] sm:$0xf]
      %v2461 = vld [vmem:[%s6 + $0x4] sm:$0xf]
      %v2462 = vld [vmem:[%s6 + $0x8] sm:$0xf]
      %v2463 = vld [vmem:[%s6 + $0xc] sm:$0xf]
      %v2464 = vld [vmem:[%s6 + $0x10] sm:$0xf]
      %v2465 = vld [vmem:[%s6 + $0x14] sm:$0xf]
      %v2466 = vld [vmem:[%s6 + $0x18] sm:$0xf]
      %v2467 = vld [vmem:[%s6 + $0x1c] sm:$0xf]
      %v2468 = vld [vmem:[%s6 + $0x20] sm:$0xf]
      %v2469 = vld [vmem:[%s6 + $0x24] sm:$0xf]
      %v2470 = vld [vmem:[%s6 + $0x28] sm:$0xf]
      %v2471 = vld [vmem:[%s6 + $0x2c] sm:$0xf]
      %v2472 = vld [vmem:[%s6 + $0x30] sm:$0xf]
      %v2473 = vld [vmem:[%s6 + $0x34] sm:$0xf]
      %v2474 = vld [vmem:[%s6 + $0x38] sm:$0xf]
      %v2475 = vld [vmem:[%s6 + $0x3c] sm:$0xf]
      %v2476 = vld [vmem:[%s6 + $0x40] sm:$0xf]
      %v2477 = vld [vmem:[%s6 + $0x44] sm:$0xf]
      %v2478 = vld [vmem:[%s6 + $0x48] sm:$0xf]
      %v2479 = vld [vmem:[%s6 + $0x4c] sm:$0xf]
      %v2480 = vld [vmem:[%s6 + $0x50] sm:$0xf]
      %v2481 = vld [vmem:[%s6 + $0x54] sm:$0xf]
      %v2482 = vld [vmem:[%s6 + $0x58] sm:$0xf]
      %v2483 = vld [vmem:[%s6 + $0x5c] sm:$0xf]
      %v2484 = vld [vmem:[%s6 + $0x60] sm:$0xf]
      %v2485 = vld [vmem:[%s6 + $0x64] sm:$0xf]
      %v2486 = vld [vmem:[%s6 + $0x68] sm:$0xf]
      %v2487 = vld [vmem:[%s6 + $0x6c] sm:$0xf]
      %v2488 = vld [vmem:[%s6 + $0x70] sm:$0xf]
      %v2489 = vld [vmem:[%s6 + $0x74] sm:$0xf]
      %v2490 = vld [vmem:[%s6 + $0x78] sm:$0xf]
      %v2491 = vld [vmem:[%s6 + $0x7c] sm:$0xf]
      %v2524 = vunpack.c.l.b16 %v2460
      %v2525 = vunpack.c.l.b16 %v2461
      %v2526 = vunpack.c.l.b16 %v2462
      %v2527 = vunpack.c.l.b16 %v2463
      %v2528 = vunpack.c.l.b16 %v2464
      %v2529 = vunpack.c.l.b16 %v2465
      %v2530 = vunpack.c.l.b16 %v2466
      %v2531 = vunpack.c.l.b16 %v2467
      %v2532 = vunpack.c.l.b16 %v2468
      %v2533 = vunpack.c.l.b16 %v2469
      %v2534 = vunpack.c.l.b16 %v2470
      %v2535 = vunpack.c.l.b16 %v2471
      %v2536 = vunpack.c.l.b16 %v2472
      %v2537 = vunpack.c.l.b16 %v2473
      %v2538 = vunpack.c.l.b16 %v2474
      %v2539 = vunpack.c.l.b16 %v2475
      %v2540 = vunpack.c.l.b16 %v2476
      %v2541 = vunpack.c.l.b16 %v2477
      %v2542 = vunpack.c.l.b16 %v2478
      %v2543 = vunpack.c.l.b16 %v2479
      %v2544 = vunpack.c.l.b16 %v2480
      %v2545 = vunpack.c.l.b16 %v2481
      %v2546 = vunpack.c.l.b16 %v2482
      %v2547 = vunpack.c.l.b16 %v2483
      %v2548 = vunpack.c.l.b16 %v2484
      %v2549 = vunpack.c.l.b16 %v2485
      %v2550 = vunpack.c.l.b16 %v2486
      %v2551 = vunpack.c.l.b16 %v2487
      %v2552 = vunpack.c.l.b16 %v2488
      %v2553 = vunpack.c.l.b16 %v2489
      %v2554 = vunpack.c.l.b16 %v2490
      %v2555 = vunpack.c.l.b16 %v2491
      %v2556 = vpack.c.b16 %v2525, %v2524
      %v2557 = vpack.c.b16 %v2527, %v2526
      %v2558 = vpack.c.b16 %v2529, %v2528
      %v2559 = vpack.c.b16 %v2531, %v2530
      %v2560 = vpack.c.b16 %v2533, %v2532
      %v2561 = vpack.c.b16 %v2535, %v2534
      %v2562 = vpack.c.b16 %v2537, %v2536
      %v2563 = vpack.c.b16 %v2539, %v2538
      %v2564 = vpack.c.b16 %v2541, %v2540
      %v2565 = vpack.c.b16 %v2543, %v2542
      %v2566 = vpack.c.b16 %v2545, %v2544
      %v2567 = vpack.c.b16 %v2547, %v2546
      %v2568 = vpack.c.b16 %v2549, %v2548
      %v2569 = vpack.c.b16 %v2551, %v2550
      %v2570 = vpack.c.b16 %v2553, %v2552
      %v2571 = vpack.c.b16 %v2555, %v2554
      %2588 = vmatprep.subr.bf16.mxu0 0
      %2589 = vmatpush1.bf16.msra.mxu0 %v2563
      %2590 = vmatprep.subr.bf16.mxu0 0
      %2591 = vmatpush1.bf16.msra.mxu0 %v2562
      %2592 = vmatprep.subr.bf16.mxu0 0
      %2593 = vmatpush1.bf16.msra.mxu0 %v2561
      %2594 = vmatprep.subr.bf16.mxu0 0
      %2595 = vmatpush1.bf16.msra.mxu0 %v2560
      %2596 = vmatprep.subr.bf16.mxu0 0
      %2597 = vmatpush1.bf16.msra.mxu0 %v2559
      %2598 = vmatprep.subr.bf16.mxu0 0
      %2599 = vmatpush1.bf16.msra.mxu0 %v2558
      %2600 = vmatprep.subr.bf16.mxu0 0
      %2601 = vmatpush1.bf16.msra.mxu0 %v2557
      %2602 = vmatprep.subr.bf16.mxu0 0
      %2603 = vmatpush1.bf16.msra.mxu0 %v2556
      %2604 = vmatprep.subr.bf16.mxu0 0
      %2605 = vmatpush2.bf16.msra.mxu0 %v2571
      %2606 = vmatprep.subr.bf16.mxu0 0
      %2607 = vmatpush2.bf16.msra.mxu0 %v2570
      %2608 = vmatprep.subr.bf16.mxu0 0
      %2609 = vmatpush2.bf16.msra.mxu0 %v2569
      %2610 = vmatprep.subr.bf16.mxu0 0
      %2611 = vmatpush2.bf16.msra.mxu0 %v2568
      %2612 = vmatprep.subr.bf16.mxu0 0
      %2613 = vmatpush2.bf16.msra.mxu0 %v2567
      %2614 = vmatprep.subr.bf16.mxu0 0
      %2615 = vmatpush2.bf16.msra.mxu0 %v2566
      %2616 = vmatprep.subr.bf16.mxu0 0
      %2617 = vmatpush2.bf16.msra.mxu0 %v2565
      %2618 = vmatprep.subr.bf16.mxu0 0
      %2619 = vmatpush2.bf16.msra.mxu0 %v2564
      %2620 = vmatprep.mubr.bf16.mxu0 %v2457
      %2621 = vmatmul.mubr.bf16.gmra.mxu0 %v2456
      %v2622 = vpop.f32.mrf.mxu0
      %v2623 = vadd.f32 0.0, %v2622
      %v2624 = vpop.f32.mrf.mxu0
      %v2625 = vpop.f32.mrf.mxu0
      %v2626 = vadd.f32 0.0, %v2625
      %v2627 = vpop.f32.mrf.mxu0
      %2628 = vmatprep.mubr.bf16.mxu0 %v2459
      %2629 = vmatmul.mubr.bf16.gmra.mxu0 %v2458
      %v2630 = vpop.f32.mrf.mxu0
      %v2631 = vadd.f32 0.0, %v2630
      %v2632 = vpop.f32.mrf.mxu0
      %v2633 = vpop.f32.mrf.mxu0
      %v2634 = vpop.f32.mrf.mxu0
      %2635 = vdwg.mxu0
      %v2636 = vadd.f32 %v2236, %v2623
      %v2637 = vadd.f32 %v2237, %v2626
      %v2638 = vadd.f32 %v2238, %v2631
      %v2639 = vadd.f32 %v2636, %v548
      %v2640 = vadd.f32 %v2637, %v548
      %v2641 = vadd.f32 %v2638, %v548
      %s2642 = scalar_lea.vmem %s7, 16
      %v2643 = vld [vmem:[%s2642] ss:$8 sm:$0x3]
      %s2644 = scalar_lea.vmem %s2642, 1
      %v2645 = vld [vmem:[%s2644] ss:$8 sm:$0x3]
      %v2646 = vld [vmem:[%s2642 + $0x2] ss:$0 sm:$0xff]
      %v2647 = vld [vmem:[%s2642 + $0x3] ss:$0 sm:$0xff]
      %v2648 = vld [vmem:[%s2642 + $0x4] ss:$0 sm:$0xff]
      %v2649 = vld [vmem:[%s2642 + $0x5] ss:$0 sm:$0xff]
      %v2650 = vld [vmem:[%s2642 + $0x6] ss:$0 sm:$0xff]
      %v2651 = vld [vmem:[%s2642 + $0x7] ss:$0 sm:$0xff]
      %v2652 = vsel %vm481, %v2639, 0.0
      %2653 = vadd.xlane.f32.xlu0 %v2652
      %v2654 = vpop.xlane.xlu0 %2653
      %v2655 = vsel %vm481, %v2640, 0.0
      %2656 = vadd.xlane.f32.xlu0 %v2655
      %v2657 = vpop.xlane.xlu0 %2656
      %v2658 = vsel %vm481, %v2641, 0.0
      %2659 = vadd.xlane.f32.xlu0 %v2658
      %v2660 = vpop.xlane.xlu0 %2659
      %v2661 = vmul.f32 %v2654, %v558
      %v2662 = vmul.f32 %v2657, %v558
      %v2663 = vmul.f32 %v2660, %v558
      %v2664 = vsub.f32 %v2639, %v2661
      %v2665 = vsub.f32 %v2640, %v2662
      %v2666 = vsub.f32 %v2641, %v2663
      %v2667 = vmul.f32 %v2664, %v2664
      %v2668 = vmul.f32 %v2665, %v2665
      %v2669 = vmul.f32 %v2666, %v2666
      %v2670 = vsel %vm481, %v2667, 0.0
      %2671 = vadd.xlane.f32.xlu0 %v2670
      %v2672 = vpop.xlane.xlu0 %2671
      %v2673 = vsel %vm481, %v2668, 0.0
      %2674 = vadd.xlane.f32.xlu0 %v2673
      %v2675 = vpop.xlane.xlu0 %2674
      %v2676 = vsel %vm481, %v2669, 0.0
      %2677 = vadd.xlane.f32.xlu0 %v2676
      %v2678 = vpop.xlane.xlu0 %2677
      %v2679 = vmul.f32 %v2672, %v558
      %v2680 = vmul.f32 %v2675, %v558
      %v2681 = vmul.f32 %v2678, %v558
      %v2682 = vadd.f32 %v2679, 1e-05
      %v2683 = vadd.f32 %v2680, 1e-05
      %v2684 = vadd.f32 %v2681, 1e-05
      %v2685 = vrsqrt.pop %v2682
      %v2686 = vrsqrt.pop %v2683
      %v2687 = vrsqrt.pop %v2684
      %v2688 = vmul.f32 %v2664, %v2685
      %v2689 = vmul.f32 %v2665, %v2686
      %v2690 = vmul.f32 %v2666, %v2687
      %v2691 = vmul.f32 %v2688, %v2646
      %v2692 = vmul.f32 %v2689, %v2646
      %v2693 = vmul.f32 %v2690, %v2646
      %v2694 = vadd.f32 %v2691, %v2647
      %v2695 = vadd.f32 %v2692, %v2647
      %v2696 = vadd.f32 %v2693, %v2647
      %v2697 = vpack.c.bf16 %v2695, %v2694
      %v2698 = vpack.c.bf16 %v2696, %v2696
      %s2699 = scalar_lea.vmem %s3, 64
      %v2700 = vld [vmem:[%s2699] sm:$0xff]
      %v2701 = vld [vmem:[%s2699 + $0x8] sm:$0xff]
      %v2702 = vld [vmem:[%s2699 + $0x10] sm:$0xff]
      %v2703 = vld [vmem:[%s2699 + $0x18] sm:$0xff]
      %v2704 = vld [vmem:[%s2699 + $0x20] sm:$0xff]
      %v2705 = vld [vmem:[%s2699 + $0x28] sm:$0xff]
      %v2706 = vld [vmem:[%s2699 + $0x30] sm:$0xff]
      %v2707 = vld [vmem:[%s2699 + $0x38] sm:$0xff]
      %v2709 = vlaneseq
      %v2710 = vshrl.u32 %v2709, 7
      %v2711 = vsub.s32 0, %v2710
      %v2712 = vrot.slane %v2643, %v2711
      %v2713 = vlaneseq
      %v2714 = vshrl.u32 %v2713, 7
      %v2715 = vsub.s32 1, %v2714
      %v2716 = vrot.slane %v2643, %v2715
      %v2727 = vunpack.c.l.b16 %v2700
      %v2728 = vunpack.c.h.b16 %v2700
      %v2729 = vunpack.c.l.b16 %v2701
      %v2730 = vunpack.c.h.b16 %v2701
      %v2731 = vunpack.c.l.b16 %v2702
      %v2732 = vunpack.c.h.b16 %v2702
      %v2733 = vunpack.c.l.b16 %v2703
      %v2734 = vunpack.c.h.b16 %v2703
      %v2735 = vunpack.c.l.b16 %v2704
      %v2736 = vunpack.c.h.b16 %v2704
      %v2737 = vunpack.c.l.b16 %v2705
      %v2738 = vunpack.c.h.b16 %v2705
      %v2739 = vunpack.c.l.b16 %v2706
      %v2740 = vunpack.c.h.b16 %v2706
      %v2741 = vunpack.c.l.b16 %v2707
      %v2742 = vunpack.c.h.b16 %v2707
      %v2743 = vpack.c.b16 %v2729, %v2727
      %v2744 = vpack.c.b16 %v2730, %v2728
      %v2745 = vpack.c.b16 %v2733, %v2731
      %v2746 = vpack.c.b16 %v2734, %v2732
      %v2747 = vpack.c.b16 %v2737, %v2735
      %v2748 = vpack.c.b16 %v2738, %v2736
      %v2749 = vpack.c.b16 %v2741, %v2739
      %v2750 = vpack.c.b16 %v2742, %v2740
      %v2760 = vsel %vm481, %v2697, 0
      %v2763 = vsel %vm481, %v2698, 0
      %2765 = vmatprep.subr.bf16.mxu0 0
      %2766 = vmatpush1.bf16.msra.mxu0 0
      %2767 = vmatprep.subr.bf16.mxu0 0
      %2768 = vmatpush1.bf16.msra.mxu0 0
      %2769 = vmatprep.subr.bf16.mxu0 0
      %2770 = vmatpush1.bf16.msra.mxu0 0
      %2771 = vmatprep.subr.bf16.mxu0 0
      %2772 = vmatpush1.bf16.msra.mxu0 0
      %2773 = vmatprep.subr.bf16.mxu0 %v2750
      %2774 = vmatpush1.bf16.msra.mxu0 %v2749
      %2775 = vmatprep.subr.bf16.mxu0 %v2748
      %2776 = vmatpush1.bf16.msra.mxu0 %v2747
      %2777 = vmatprep.subr.bf16.mxu0 %v2746
      %2778 = vmatpush1.bf16.msra.mxu0 %v2745
      %2779 = vmatprep.subr.bf16.mxu0 %v2744
      %2780 = vmatpush1.bf16.msra.mxu0 %v2743
      %2781 = vmatprep.subr.bf16.mxu0 0
      %2782 = vmatpush2.bf16.msra.mxu0 0
      %2783 = vmatprep.subr.bf16.mxu0 0
      %2784 = vmatpush2.bf16.msra.mxu0 0
      %2785 = vmatprep.subr.bf16.mxu0 0
      %2786 = vmatpush2.bf16.msra.mxu0 0
      %2787 = vmatprep.subr.bf16.mxu0 0
      %2788 = vmatpush2.bf16.msra.mxu0 0
      %2789 = vmatprep.subr.bf16.mxu0 0
      %2790 = vmatpush2.bf16.msra.mxu0 0
      %2791 = vmatprep.subr.bf16.mxu0 0
      %2792 = vmatpush2.bf16.msra.mxu0 0
      %2793 = vmatprep.subr.bf16.mxu0 0
      %2794 = vmatpush2.bf16.msra.mxu0 0
      %2795 = vmatprep.subr.bf16.mxu0 0
      %2796 = vmatpush2.bf16.msra.mxu0 0
      %2797 = vmatprep.mubr.bf16.mxu0 0
      %2798 = vmatmul.mubr.bf16.gmra.mxu0 %v2760
      %v2799 = vpop.f32.mrf.mxu0
      %v2800 = vadd.f32 %v2712, %v2799
      %v2801 = vpop.f32.mrf.mxu0
      %v2802 = vadd.f32 %v2716, %v2801
      %v2803 = vpop.f32.mrf.mxu0
      %v2804 = vadd.f32 %v2712, %v2803
      %v2805 = vpop.f32.mrf.mxu0
      %v2806 = vadd.f32 %v2716, %v2805
      %2807 = vmatprep.mubr.bf16.mxu0 0
      %2808 = vmatmul.mubr.bf16.gmra.mxu0 %v2763
      %v2809 = vpop.f32.mrf.mxu0
      %v2810 = vadd.f32 %v2712, %v2809
      %v2811 = vpop.f32.mrf.mxu0
      %v2812 = vadd.f32 %v2716, %v2811
      %v2813 = vpop.f32.mrf.mxu0
      %v2814 = vpop.f32.mrf.mxu0
      %2815 = vdwg.mxu0
      %v2816 = vpack.c.bf16 %v2804, %v2800
      %v2817 = vpack.c.bf16 %v2810, %v2810
      %v2818 = vpack.c.bf16 %v2806, %v2802
      %v2819 = vpack.c.bf16 %v2812, %v2812
      %2822 = vrot.lane.b32.xlu0 %v2816, 64
      %v2823 = vpop.permute.xlu0 %2822
      %2824 = vrot.lane.b32.xlu0 %v2817, 64
      %v2825 = vpop.permute.xlu0 %2824
      %v2827 = vsel %vm723, %v2816, 0
      %v2830 = vsel %vm723, %v2817, 0
      %v2833 = vsel %vm723, %v2823, 0
      %v2836 = vsel %vm723, %v2825, 0
      %2838 = vmatprep.subr.bf16.mxu0 0
      %2839 = vmatpush1.bf16.xpose.msra.mxu0 0
      %2840 = vmatprep.subr.bf16.mxu0 0
      %2841 = vmatpush1.bf16.xpose.msra.mxu0 0
      %2842 = vmatprep.subr.bf16.mxu0 0
      %2843 = vmatpush1.bf16.xpose.msra.mxu0 0
      %2844 = vmatprep.subr.bf16.mxu0 0
      %2845 = vmatpush1.bf16.xpose.msra.mxu0 0
      %2846 = vmatprep.subr.bf16.mxu0 0
      %2847 = vmatpush1.bf16.xpose.msra.mxu0 0
      %2848 = vmatprep.subr.bf16.mxu0 0
      %2849 = vmatpush1.bf16.xpose.msra.mxu0 0
      %2850 = vmatprep.subr.bf16.mxu0 0
      %2851 = vmatpush1.bf16.xpose.msra.mxu0 %v2836
      %2852 = vmatprep.subr.bf16.mxu0 0
      %2853 = vmatpush1.bf16.xpose.msra.mxu0 %v2833
      %2854 = vmatprep.subr.bf16.mxu0 0
      %2855 = vmatpush2.bf16.xpose.msra.mxu0 0
      %2856 = vmatprep.subr.bf16.mxu0 0
      %2857 = vmatpush2.bf16.xpose.msra.mxu0 0
      %2858 = vmatprep.subr.bf16.mxu0 0
      %2859 = vmatpush2.bf16.xpose.msra.mxu0 0
      %2860 = vmatprep.subr.bf16.mxu0 0
      %2861 = vmatpush2.bf16.xpose.msra.mxu0 0
      %2862 = vmatprep.subr.bf16.mxu0 0
      %2863 = vmatpush2.bf16.xpose.msra.mxu0 0
      %2864 = vmatprep.subr.bf16.mxu0 0
      %2865 = vmatpush2.bf16.xpose.msra.mxu0 0
      %2866 = vmatprep.subr.bf16.mxu0 0
      %2867 = vmatpush2.bf16.xpose.msra.mxu0 0
      %2868 = vmatprep.subr.bf16.mxu0 0
      %2869 = vmatpush2.bf16.xpose.msra.mxu0 0
      %2870 = vmatprep.mubr.bf16.mxu0 0
      %2871 = vmatmul.mubr.bf16.gmra.mxu0 %v2827
      %v2872 = vpop.f32.mrf.mxu0
      %v2873 = vadd.f32 %v539, %v2872
      %v2874 = vpop.f32.mrf.mxu0
      %v2875 = vpop.f32.mrf.mxu0
      %v2876 = vadd.f32 %v539, %v2875
      %v2877 = vpop.f32.mrf.mxu0
      %2878 = vmatprep.mubr.bf16.mxu0 0
      %2879 = vmatmul.mubr.bf16.gmra.mxu0 %v2830
      %v2880 = vpop.f32.mrf.mxu0
      %v2881 = vadd.f32 %v539, %v2880
      %v2882 = vpop.f32.mrf.mxu0
      %v2883 = vpop.f32.mrf.mxu0
      %v2884 = vpop.f32.mrf.mxu0
      %2885 = vdwg.mxu0
      %v2886 = vsel %vm784, %v2873, -inf
      %2887 = vmax.xlane.f32.xlu0 %v2886
      %v2888 = vpop.xlane.xlu0 %2887
      %v2889 = vsel %vm784, %v2876, -inf
      %2890 = vmax.xlane.f32.xlu0 %v2889
      %v2891 = vpop.xlane.xlu0 %2890
      %v2892 = vsel %vm784, %v2881, -inf
      %2893 = vmax.xlane.f32.xlu0 %v2892
      %v2894 = vpop.xlane.xlu0 %2893
      %v2895 = vsub.f32 %v2873, %v2888
      %v2896 = vsub.f32 %v2876, %v2891
      %v2897 = vsub.f32 %v2881, %v2894
      %v2898 = vmul.f32 %v2895, 1.442695
      %v2899 = vpow.pop %v2898
      %v2900 = vmul.f32 %v2896, 1.442695
      %v2901 = vpow.pop %v2900
      %v2902 = vmul.f32 %v2897, 1.442695
      %v2903 = vpow.pop %v2902
      %v2904 = vsel %vm784, %v2899, 0.0
      %2905 = vadd.xlane.f32.xlu0 %v2904
      %v2906 = vpop.xlane.xlu0 %2905
      %v2907 = vsel %vm784, %v2901, 0.0
      %2908 = vadd.xlane.f32.xlu0 %v2907
      %v2909 = vpop.xlane.xlu0 %2908
      %v2910 = vsel %vm784, %v2903, 0.0
      %2911 = vadd.xlane.f32.xlu0 %v2910
      %v2912 = vpop.xlane.xlu0 %2911
      %v2913 = vpack.c.bf16 %v2901, %v2899
      %v2914 = vpack.c.bf16 %v2903, %v2903
      %v2916 = vsel %vm784, %v2913, 0
      %v2919 = vsel %vm784, %v2914, 0
      %v2922 = vsel %vm820, %v2819, 0
      %2924 = vmatprep.subr.bf16.mxu0 0
      %2925 = vmatpush1.bf16.msra.mxu0 0
      %2926 = vmatprep.subr.bf16.mxu0 0
      %2927 = vmatpush1.bf16.msra.mxu0 0
      %2928 = vmatprep.subr.bf16.mxu0 0
      %2929 = vmatpush1.bf16.msra.mxu0 0
      %2930 = vmatprep.subr.bf16.mxu0 0
      %2931 = vmatpush1.bf16.msra.mxu0 0
      %2932 = vmatprep.subr.bf16.mxu0 0
      %2933 = vmatpush1.bf16.msra.mxu0 0
      %2934 = vmatprep.subr.bf16.mxu0 0
      %2935 = vmatpush1.bf16.msra.mxu0 0
      %2936 = vmatprep.subr.bf16.mxu0 0
      %2937 = vmatpush1.bf16.msra.mxu0 %v2922
      %2938 = vmatprep.subr.bf16.mxu0 0
      %2939 = vmatpush1.bf16.msra.mxu0 %v2818
      %2940 = vmatprep.subr.bf16.mxu0 0
      %2941 = vmatpush2.bf16.msra.mxu0 0
      %2942 = vmatprep.subr.bf16.mxu0 0
      %2943 = vmatpush2.bf16.msra.mxu0 0
      %2944 = vmatprep.subr.bf16.mxu0 0
      %2945 = vmatpush2.bf16.msra.mxu0 0
      %2946 = vmatprep.subr.bf16.mxu0 0
      %2947 = vmatpush2.bf16.msra.mxu0 0
      %2948 = vmatprep.subr.bf16.mxu0 0
      %2949 = vmatpush2.bf16.msra.mxu0 0
      %2950 = vmatprep.subr.bf16.mxu0 0
      %2951 = vmatpush2.bf16.msra.mxu0 0
      %2952 = vmatprep.subr.bf16.mxu0 0
      %2953 = vmatpush2.bf16.msra.mxu0 0
      %2954 = vmatprep.subr.bf16.mxu0 0
      %2955 = vmatpush2.bf16.msra.mxu0 0
      %2956 = vmatprep.mubr.bf16.mxu0 0
      %2957 = vmatmul.mubr.bf16.gmra.mxu0 %v2916
      %v2958 = vpop.f32.mrf.mxu0
      %v2959 = vadd.f32 0.0, %v2958
      %v2960 = vpop.f32.mrf.mxu0
      %v2961 = vpop.f32.mrf.mxu0
      %v2962 = vadd.f32 0.0, %v2961
      %v2963 = vpop.f32.mrf.mxu0
      %2964 = vmatprep.mubr.bf16.mxu0 0
      %2965 = vmatmul.mubr.bf16.gmra.mxu0 %v2919
      %v2966 = vpop.f32.mrf.mxu0
      %v2967 = vadd.f32 0.0, %v2966
      %v2968 = vpop.f32.mrf.mxu0
      %v2969 = vpop.f32.mrf.mxu0
      %v2970 = vpop.f32.mrf.mxu0
      %2971 = vdwg.mxu0
      %v2972 = vrcp.pop %v2906
      %v2973 = vrcp.pop %v2909
      %v2974 = vrcp.pop %v2912
      %v2975 = vmul.f32 %v2959, %v2972
      %v2976 = vmul.f32 %v2962, %v2973
      %v2977 = vmul.f32 %v2967, %v2974
      %2978 = vrot.lane.b32.xlu0 %v2816, 120
      %v2979 = vpop.permute.xlu0 %2978
      %2980 = vrot.lane.b32.xlu0 %v2817, 120
      %v2981 = vpop.permute.xlu0 %2980
      %2982 = vrot.lane.b32.xlu0 %v2816, 56
      %v2983 = vpop.permute.xlu0 %2982
      %2984 = vrot.lane.b32.xlu0 %v2817, 56
      %v2985 = vpop.permute.xlu0 %2984
      %v2987 = vsel %vm723, %v2979, 0
      %v2990 = vsel %vm723, %v2981, 0
      %v2993 = vsel %vm723, %v2983, 0
      %v2996 = vsel %vm723, %v2985, 0
      %2998 = vmatprep.subr.bf16.mxu0 0
      %2999 = vmatpush1.bf16.xpose.msra.mxu0 0
      %3000 = vmatprep.subr.bf16.mxu0 0
      %3001 = vmatpush1.bf16.xpose.msra.mxu0 0
      %3002 = vmatprep.subr.bf16.mxu0 0
      %3003 = vmatpush1.bf16.xpose.msra.mxu0 0
      %3004 = vmatprep.subr.bf16.mxu0 0
      %3005 = vmatpush1.bf16.xpose.msra.mxu0 0
      %3006 = vmatprep.subr.bf16.mxu0 0
      %3007 = vmatpush1.bf16.xpose.msra.mxu0 0
      %3008 = vmatprep.subr.bf16.mxu0 0
      %3009 = vmatpush1.bf16.xpose.msra.mxu0 0
      %3010 = vmatprep.subr.bf16.mxu0 0
      %3011 = vmatpush1.bf16.xpose.msra.mxu0 %v2996
      %3012 = vmatprep.subr.bf16.mxu0 0
      %3013 = vmatpush1.bf16.xpose.msra.mxu0 %v2993
      %3014 = vmatprep.subr.bf16.mxu0 0
      %3015 = vmatpush2.bf16.xpose.msra.mxu0 0
      %3016 = vmatprep.subr.bf16.mxu0 0
      %3017 = vmatpush2.bf16.xpose.msra.mxu0 0
      %3018 = vmatprep.subr.bf16.mxu0 0
      %3019 = vmatpush2.bf16.xpose.msra.mxu0 0
      %3020 = vmatprep.subr.bf16.mxu0 0
      %3021 = vmatpush2.bf16.xpose.msra.mxu0 0
      %3022 = vmatprep.subr.bf16.mxu0 0
      %3023 = vmatpush2.bf16.xpose.msra.mxu0 0
      %3024 = vmatprep.subr.bf16.mxu0 0
      %3025 = vmatpush2.bf16.xpose.msra.mxu0 0
      %3026 = vmatprep.subr.bf16.mxu0 0
      %3027 = vmatpush2.bf16.xpose.msra.mxu0 0
      %3028 = vmatprep.subr.bf16.mxu0 0
      %3029 = vmatpush2.bf16.xpose.msra.mxu0 0
      %3030 = vmatprep.mubr.bf16.mxu0 0
      %3031 = vmatmul.mubr.bf16.gmra.mxu0 %v2987
      %v3032 = vpop.f32.mrf.mxu0
      %v3033 = vadd.f32 %v539, %v3032
      %v3034 = vpop.f32.mrf.mxu0
      %v3035 = vpop.f32.mrf.mxu0
      %v3036 = vadd.f32 %v539, %v3035
      %v3037 = vpop.f32.mrf.mxu0
      %3038 = vmatprep.mubr.bf16.mxu0 0
      %3039 = vmatmul.mubr.bf16.gmra.mxu0 %v2990
      %v3040 = vpop.f32.mrf.mxu0
      %v3041 = vadd.f32 %v539, %v3040
      %v3042 = vpop.f32.mrf.mxu0
      %v3043 = vpop.f32.mrf.mxu0
      %v3044 = vpop.f32.mrf.mxu0
      %3045 = vdwg.mxu0
      %v3046 = vsel %vm784, %v3033, -inf
      %3047 = vmax.xlane.f32.xlu0 %v3046
      %v3048 = vpop.xlane.xlu0 %3047
      %v3049 = vsel %vm784, %v3036, -inf
      %3050 = vmax.xlane.f32.xlu0 %v3049
      %v3051 = vpop.xlane.xlu0 %3050
      %v3052 = vsel %vm784, %v3041, -inf
      %3053 = vmax.xlane.f32.xlu0 %v3052
      %v3054 = vpop.xlane.xlu0 %3053
      %v3055 = vsub.f32 %v3033, %v3048
      %v3056 = vsub.f32 %v3036, %v3051
      %v3057 = vsub.f32 %v3041, %v3054
      %v3058 = vmul.f32 %v3055, 1.442695
      %v3059 = vpow.pop %v3058
      %v3060 = vmul.f32 %v3056, 1.442695
      %v3061 = vpow.pop %v3060
      %v3062 = vmul.f32 %v3057, 1.442695
      %v3063 = vpow.pop %v3062
      %v3064 = vsel %vm784, %v3059, 0.0
      %3065 = vadd.xlane.f32.xlu0 %v3064
      %v3066 = vpop.xlane.xlu0 %3065
      %v3067 = vsel %vm784, %v3061, 0.0
      %3068 = vadd.xlane.f32.xlu0 %v3067
      %v3069 = vpop.xlane.xlu0 %3068
      %v3070 = vsel %vm784, %v3063, 0.0
      %3071 = vadd.xlane.f32.xlu0 %v3070
      %v3072 = vpop.xlane.xlu0 %3071
      %v3073 = vpack.c.bf16 %v3061, %v3059
      %v3074 = vpack.c.bf16 %v3063, %v3063
      %3077 = vrot.lane.b32.xlu0 %v2818, 120
      %v3078 = vpop.permute.xlu0 %3077
      %3079 = vrot.lane.b32.xlu0 %v2819, 120
      %v3080 = vpop.permute.xlu0 %3079
      %v3083 = vsel %vm784, %v3073, 0
      %v3086 = vsel %vm784, %v3074, 0
      %v3089 = vsel %vm820, %v3080, 0
      %3091 = vmatprep.subr.bf16.mxu0 0
      %3092 = vmatpush1.bf16.msra.mxu0 0
      %3093 = vmatprep.subr.bf16.mxu0 0
      %3094 = vmatpush1.bf16.msra.mxu0 0
      %3095 = vmatprep.subr.bf16.mxu0 0
      %3096 = vmatpush1.bf16.msra.mxu0 0
      %3097 = vmatprep.subr.bf16.mxu0 0
      %3098 = vmatpush1.bf16.msra.mxu0 0
      %3099 = vmatprep.subr.bf16.mxu0 0
      %3100 = vmatpush1.bf16.msra.mxu0 0
      %3101 = vmatprep.subr.bf16.mxu0 0
      %3102 = vmatpush1.bf16.msra.mxu0 0
      %3103 = vmatprep.subr.bf16.mxu0 0
      %3104 = vmatpush1.bf16.msra.mxu0 %v3089
      %3105 = vmatprep.subr.bf16.mxu0 0
      %3106 = vmatpush1.bf16.msra.mxu0 %v3078
      %3107 = vmatprep.subr.bf16.mxu0 0
      %3108 = vmatpush2.bf16.msra.mxu0 0
      %3109 = vmatprep.subr.bf16.mxu0 0
      %3110 = vmatpush2.bf16.msra.mxu0 0
      %3111 = vmatprep.subr.bf16.mxu0 0
      %3112 = vmatpush2.bf16.msra.mxu0 0
      %3113 = vmatprep.subr.bf16.mxu0 0
      %3114 = vmatpush2.bf16.msra.mxu0 0
      %3115 = vmatprep.subr.bf16.mxu0 0
      %3116 = vmatpush2.bf16.msra.mxu0 0
      %3117 = vmatprep.subr.bf16.mxu0 0
      %3118 = vmatpush2.bf16.msra.mxu0 0
      %3119 = vmatprep.subr.bf16.mxu0 0
      %3120 = vmatpush2.bf16.msra.mxu0 0
      %3121 = vmatprep.subr.bf16.mxu0 0
      %3122 = vmatpush2.bf16.msra.mxu0 0
      %3123 = vmatprep.mubr.bf16.mxu0 0
      %3124 = vmatmul.mubr.bf16.gmra.mxu0 %v3083
      %v3125 = vpop.f32.mrf.mxu0
      %v3126 = vadd.f32 0.0, %v3125
      %v3127 = vpop.f32.mrf.mxu0
      %v3128 = vpop.f32.mrf.mxu0
      %v3129 = vadd.f32 0.0, %v3128
      %v3130 = vpop.f32.mrf.mxu0
      %3131 = vmatprep.mubr.bf16.mxu0 0
      %3132 = vmatmul.mubr.bf16.gmra.mxu0 %v3086
      %v3133 = vpop.f32.mrf.mxu0
      %v3134 = vadd.f32 0.0, %v3133
      %v3135 = vpop.f32.mrf.mxu0
      %v3136 = vpop.f32.mrf.mxu0
      %v3137 = vpop.f32.mrf.mxu0
      %3138 = vdwg.mxu0
      %v3139 = vrcp.pop %v3066
      %v3140 = vrcp.pop %v3069
      %v3141 = vrcp.pop %v3072
      %v3142 = vmul.f32 %v3126, %v3139
      %v3143 = vmul.f32 %v3129, %v3140
      %v3144 = vmul.f32 %v3134, %v3141
      %3145 = vrot.lane.b32.xlu0 %v2816, 112
      %v3146 = vpop.permute.xlu0 %3145
      %3147 = vrot.lane.b32.xlu0 %v2817, 112
      %v3148 = vpop.permute.xlu0 %3147
      %3149 = vrot.lane.b32.xlu0 %v2816, 48
      %v3150 = vpop.permute.xlu0 %3149
      %3151 = vrot.lane.b32.xlu0 %v2817, 48
      %v3152 = vpop.permute.xlu0 %3151
      %v3154 = vsel %vm723, %v3146, 0
      %v3157 = vsel %vm723, %v3148, 0
      %v3160 = vsel %vm723, %v3150, 0
      %v3163 = vsel %vm723, %v3152, 0
      %3165 = vmatprep.subr.bf16.mxu0 0
      %3166 = vmatpush1.bf16.xpose.msra.mxu0 0
      %3167 = vmatprep.subr.bf16.mxu0 0
      %3168 = vmatpush1.bf16.xpose.msra.mxu0 0
      %3169 = vmatprep.subr.bf16.mxu0 0
      %3170 = vmatpush1.bf16.xpose.msra.mxu0 0
      %3171 = vmatprep.subr.bf16.mxu0 0
      %3172 = vmatpush1.bf16.xpose.msra.mxu0 0
      %3173 = vmatprep.subr.bf16.mxu0 0
      %3174 = vmatpush1.bf16.xpose.msra.mxu0 0
      %3175 = vmatprep.subr.bf16.mxu0 0
      %3176 = vmatpush1.bf16.xpose.msra.mxu0 0
      %3177 = vmatprep.subr.bf16.mxu0 0
      %3178 = vmatpush1.bf16.xpose.msra.mxu0 %v3163
      %3179 = vmatprep.subr.bf16.mxu0 0
      %3180 = vmatpush1.bf16.xpose.msra.mxu0 %v3160
      %3181 = vmatprep.subr.bf16.mxu0 0
      %3182 = vmatpush2.bf16.xpose.msra.mxu0 0
      %3183 = vmatprep.subr.bf16.mxu0 0
      %3184 = vmatpush2.bf16.xpose.msra.mxu0 0
      %3185 = vmatprep.subr.bf16.mxu0 0
      %3186 = vmatpush2.bf16.xpose.msra.mxu0 0
      %3187 = vmatprep.subr.bf16.mxu0 0
      %3188 = vmatpush2.bf16.xpose.msra.mxu0 0
      %3189 = vmatprep.subr.bf16.mxu0 0
      %3190 = vmatpush2.bf16.xpose.msra.mxu0 0
      %3191 = vmatprep.subr.bf16.mxu0 0
      %3192 = vmatpush2.bf16.xpose.msra.mxu0 0
      %3193 = vmatprep.subr.bf16.mxu0 0
      %3194 = vmatpush2.bf16.xpose.msra.mxu0 0
      %3195 = vmatprep.subr.bf16.mxu0 0
      %3196 = vmatpush2.bf16.xpose.msra.mxu0 0
      %3197 = vmatprep.mubr.bf16.mxu0 0
      %3198 = vmatmul.mubr.bf16.gmra.mxu0 %v3154
      %v3199 = vpop.f32.mrf.mxu0
      %v3200 = vadd.f32 %v539, %v3199
      %v3201 = vpop.f32.mrf.mxu0
      %v3202 = vpop.f32.mrf.mxu0
      %v3203 = vadd.f32 %v539, %v3202
      %v3204 = vpop.f32.mrf.mxu0
      %3205 = vmatprep.mubr.bf16.mxu0 0
      %3206 = vmatmul.mubr.bf16.gmra.mxu0 %v3157
      %v3207 = vpop.f32.mrf.mxu0
      %v3208 = vadd.f32 %v539, %v3207
      %v3209 = vpop.f32.mrf.mxu0
      %v3210 = vpop.f32.mrf.mxu0
      %v3211 = vpop.f32.mrf.mxu0
      %3212 = vdwg.mxu0
      %v3213 = vsel %vm784, %v3200, -inf
      %3214 = vmax.xlane.f32.xlu0 %v3213
      %v3215 = vpop.xlane.xlu0 %3214
      %v3216 = vsel %vm784, %v3203, -inf
      %3217 = vmax.xlane.f32.xlu0 %v3216
      %v3218 = vpop.xlane.xlu0 %3217
      %v3219 = vsel %vm784, %v3208, -inf
      %3220 = vmax.xlane.f32.xlu0 %v3219
      %v3221 = vpop.xlane.xlu0 %3220
      %v3222 = vsub.f32 %v3200, %v3215
      %v3223 = vsub.f32 %v3203, %v3218
      %v3224 = vsub.f32 %v3208, %v3221
      %v3225 = vmul.f32 %v3222, 1.442695
      %v3226 = vpow.pop %v3225
      %v3227 = vmul.f32 %v3223, 1.442695
      %v3228 = vpow.pop %v3227
      %v3229 = vmul.f32 %v3224, 1.442695
      %v3230 = vpow.pop %v3229
      %v3231 = vsel %vm784, %v3226, 0.0
      %3232 = vadd.xlane.f32.xlu0 %v3231
      %v3233 = vpop.xlane.xlu0 %3232
      %v3234 = vsel %vm784, %v3228, 0.0
      %3235 = vadd.xlane.f32.xlu0 %v3234
      %v3236 = vpop.xlane.xlu0 %3235
      %v3237 = vsel %vm784, %v3230, 0.0
      %3238 = vadd.xlane.f32.xlu0 %v3237
      %v3239 = vpop.xlane.xlu0 %3238
      %v3240 = vpack.c.bf16 %v3228, %v3226
      %v3241 = vpack.c.bf16 %v3230, %v3230
      %3242 = vrot.lane.b32.xlu0 %v2818, 112
      %v3243 = vpop.permute.xlu0 %3242
      %3244 = vrot.lane.b32.xlu0 %v2819, 112
      %v3245 = vpop.permute.xlu0 %3244
      %v3248 = vsel %vm784, %v3240, 0
      %v3251 = vsel %vm784, %v3241, 0
      %v3254 = vsel %vm820, %v3245, 0
      %3256 = vmatprep.subr.bf16.mxu0 0
      %3257 = vmatpush1.bf16.msra.mxu0 0
      %3258 = vmatprep.subr.bf16.mxu0 0
      %3259 = vmatpush1.bf16.msra.mxu0 0
      %3260 = vmatprep.subr.bf16.mxu0 0
      %3261 = vmatpush1.bf16.msra.mxu0 0
      %3262 = vmatprep.subr.bf16.mxu0 0
      %3263 = vmatpush1.bf16.msra.mxu0 0
      %3264 = vmatprep.subr.bf16.mxu0 0
      %3265 = vmatpush1.bf16.msra.mxu0 0
      %3266 = vmatprep.subr.bf16.mxu0 0
      %3267 = vmatpush1.bf16.msra.mxu0 0
      %3268 = vmatprep.subr.bf16.mxu0 0
      %3269 = vmatpush1.bf16.msra.mxu0 %v3254
      %3270 = vmatprep.subr.bf16.mxu0 0
      %3271 = vmatpush1.bf16.msra.mxu0 %v3243
      %3272 = vmatprep.subr.bf16.mxu0 0
      %3273 = vmatpush2.bf16.msra.mxu0 0
      %3274 = vmatprep.subr.bf16.mxu0 0
      %3275 = vmatpush2.bf16.msra.mxu0 0
      %3276 = vmatprep.subr.bf16.mxu0 0
      %3277 = vmatpush2.bf16.msra.mxu0 0
      %3278 = vmatprep.subr.bf16.mxu0 0
      %3279 = vmatpush2.bf16.msra.mxu0 0
      %3280 = vmatprep.subr.bf16.mxu0 0
      %3281 = vmatpush2.bf16.msra.mxu0 0
      %3282 = vmatprep.subr.bf16.mxu0 0
      %3283 = vmatpush2.bf16.msra.mxu0 0
      %3284 = vmatprep.subr.bf16.mxu0 0
      %3285 = vmatpush2.bf16.msra.mxu0 0
      %3286 = vmatprep.subr.bf16.mxu0 0
      %3287 = vmatpush2.bf16.msra.mxu0 0
      %3288 = vmatprep.mubr.bf16.mxu0 0
      %3289 = vmatmul.mubr.bf16.gmra.mxu0 %v3248
      %v3290 = vpop.f32.mrf.mxu0
      %v3291 = vadd.f32 0.0, %v3290
      %v3292 = vpop.f32.mrf.mxu0
      %v3293 = vpop.f32.mrf.mxu0
      %v3294 = vadd.f32 0.0, %v3293
      %v3295 = vpop.f32.mrf.mxu0
      %3296 = vmatprep.mubr.bf16.mxu0 0
      %3297 = vmatmul.mubr.bf16.gmra.mxu0 %v3251
      %v3298 = vpop.f32.mrf.mxu0
      %v3299 = vadd.f32 0.0, %v3298
      %v3300 = vpop.f32.mrf.mxu0
      %v3301 = vpop.f32.mrf.mxu0
      %v3302 = vpop.f32.mrf.mxu0
      %3303 = vdwg.mxu0
      %v3304 = vrcp.pop %v3233
      %v3305 = vrcp.pop %v3236
      %v3306 = vrcp.pop %v3239
      %v3307 = vmul.f32 %v3291, %v3304
      %v3308 = vmul.f32 %v3294, %v3305
      %v3309 = vmul.f32 %v3299, %v3306
      %3310 = vrot.lane.b32.xlu0 %v2816, 104
      %v3311 = vpop.permute.xlu0 %3310
      %3312 = vrot.lane.b32.xlu0 %v2817, 104
      %v3313 = vpop.permute.xlu0 %3312
      %3314 = vrot.lane.b32.xlu0 %v2816, 40
      %v3315 = vpop.permute.xlu0 %3314
      %3316 = vrot.lane.b32.xlu0 %v2817, 40
      %v3317 = vpop.permute.xlu0 %3316
      %v3319 = vsel %vm723, %v3311, 0
      %v3322 = vsel %vm723, %v3313, 0
      %v3325 = vsel %vm723, %v3315, 0
      %v3328 = vsel %vm723, %v3317, 0
      %3330 = vmatprep.subr.bf16.mxu0 0
      %3331 = vmatpush1.bf16.xpose.msra.mxu0 0
      %3332 = vmatprep.subr.bf16.mxu0 0
      %3333 = vmatpush1.bf16.xpose.msra.mxu0 0
      %3334 = vmatprep.subr.bf16.mxu0 0
      %3335 = vmatpush1.bf16.xpose.msra.mxu0 0
      %3336 = vmatprep.subr.bf16.mxu0 0
      %3337 = vmatpush1.bf16.xpose.msra.mxu0 0
      %3338 = vmatprep.subr.bf16.mxu0 0
      %3339 = vmatpush1.bf16.xpose.msra.mxu0 0
      %3340 = vmatprep.subr.bf16.mxu0 0
      %3341 = vmatpush1.bf16.xpose.msra.mxu0 0
      %3342 = vmatprep.subr.bf16.mxu0 0
      %3343 = vmatpush1.bf16.xpose.msra.mxu0 %v3328
      %3344 = vmatprep.subr.bf16.mxu0 0
      %3345 = vmatpush1.bf16.xpose.msra.mxu0 %v3325
      %3346 = vmatprep.subr.bf16.mxu0 0
      %3347 = vmatpush2.bf16.xpose.msra.mxu0 0
      %3348 = vmatprep.subr.bf16.mxu0 0
      %3349 = vmatpush2.bf16.xpose.msra.mxu0 0
      %3350 = vmatprep.subr.bf16.mxu0 0
      %3351 = vmatpush2.bf16.xpose.msra.mxu0 0
      %3352 = vmatprep.subr.bf16.mxu0 0
      %3353 = vmatpush2.bf16.xpose.msra.mxu0 0
      %3354 = vmatprep.subr.bf16.mxu0 0
      %3355 = vmatpush2.bf16.xpose.msra.mxu0 0
      %3356 = vmatprep.subr.bf16.mxu0 0
      %3357 = vmatpush2.bf16.xpose.msra.mxu0 0
      %3358 = vmatprep.subr.bf16.mxu0 0
      %3359 = vmatpush2.bf16.xpose.msra.mxu0 0
      %3360 = vmatprep.subr.bf16.mxu0 0
      %3361 = vmatpush2.bf16.xpose.msra.mxu0 0
      %3362 = vmatprep.mubr.bf16.mxu0 0
      %3363 = vmatmul.mubr.bf16.gmra.mxu0 %v3319
      %v3364 = vpop.f32.mrf.mxu0
      %v3365 = vadd.f32 %v539, %v3364
      %v3366 = vpop.f32.mrf.mxu0
      %v3367 = vpop.f32.mrf.mxu0
      %v3368 = vadd.f32 %v539, %v3367
      %v3369 = vpop.f32.mrf.mxu0
      %3370 = vmatprep.mubr.bf16.mxu0 0
      %3371 = vmatmul.mubr.bf16.gmra.mxu0 %v3322
      %v3372 = vpop.f32.mrf.mxu0
      %v3373 = vadd.f32 %v539, %v3372
      %v3374 = vpop.f32.mrf.mxu0
      %v3375 = vpop.f32.mrf.mxu0
      %v3376 = vpop.f32.mrf.mxu0
      %3377 = vdwg.mxu0
      %v3378 = vsel %vm784, %v3365, -inf
      %3379 = vmax.xlane.f32.xlu0 %v3378
      %v3380 = vpop.xlane.xlu0 %3379
      %v3381 = vsel %vm784, %v3368, -inf
      %3382 = vmax.xlane.f32.xlu0 %v3381
      %v3383 = vpop.xlane.xlu0 %3382
      %v3384 = vsel %vm784, %v3373, -inf
      %3385 = vmax.xlane.f32.xlu0 %v3384
      %v3386 = vpop.xlane.xlu0 %3385
      %v3387 = vsub.f32 %v3365, %v3380
      %v3388 = vsub.f32 %v3368, %v3383
      %v3389 = vsub.f32 %v3373, %v3386
      %v3390 = vmul.f32 %v3387, 1.442695
      %v3391 = vpow.pop %v3390
      %v3392 = vmul.f32 %v3388, 1.442695
      %v3393 = vpow.pop %v3392
      %v3394 = vmul.f32 %v3389, 1.442695
      %v3395 = vpow.pop %v3394
      %v3396 = vsel %vm784, %v3391, 0.0
      %3397 = vadd.xlane.f32.xlu0 %v3396
      %v3398 = vpop.xlane.xlu0 %3397
      %v3399 = vsel %vm784, %v3393, 0.0
      %3400 = vadd.xlane.f32.xlu0 %v3399
      %v3401 = vpop.xlane.xlu0 %3400
      %v3402 = vsel %vm784, %v3395, 0.0
      %3403 = vadd.xlane.f32.xlu0 %v3402
      %v3404 = vpop.xlane.xlu0 %3403
      %v3405 = vpack.c.bf16 %v3393, %v3391
      %v3406 = vpack.c.bf16 %v3395, %v3395
      %3407 = vrot.lane.b32.xlu0 %v2818, 104
      %v3408 = vpop.permute.xlu0 %3407
      %3409 = vrot.lane.b32.xlu0 %v2819, 104
      %v3410 = vpop.permute.xlu0 %3409
      %v3413 = vsel %vm784, %v3405, 0
      %v3416 = vsel %vm784, %v3406, 0
      %v3419 = vsel %vm820, %v3410, 0
      %3421 = vmatprep.subr.bf16.mxu0 0
      %3422 = vmatpush1.bf16.msra.mxu0 0
      %3423 = vmatprep.subr.bf16.mxu0 0
      %3424 = vmatpush1.bf16.msra.mxu0 0
      %3425 = vmatprep.subr.bf16.mxu0 0
      %3426 = vmatpush1.bf16.msra.mxu0 0
      %3427 = vmatprep.subr.bf16.mxu0 0
      %3428 = vmatpush1.bf16.msra.mxu0 0
      %3429 = vmatprep.subr.bf16.mxu0 0
      %3430 = vmatpush1.bf16.msra.mxu0 0
      %3431 = vmatprep.subr.bf16.mxu0 0
      %3432 = vmatpush1.bf16.msra.mxu0 0
      %3433 = vmatprep.subr.bf16.mxu0 0
      %3434 = vmatpush1.bf16.msra.mxu0 %v3419
      %3435 = vmatprep.subr.bf16.mxu0 0
      %3436 = vmatpush1.bf16.msra.mxu0 %v3408
      %3437 = vmatprep.subr.bf16.mxu0 0
      %3438 = vmatpush2.bf16.msra.mxu0 0
      %3439 = vmatprep.subr.bf16.mxu0 0
      %3440 = vmatpush2.bf16.msra.mxu0 0
      %3441 = vmatprep.subr.bf16.mxu0 0
      %3442 = vmatpush2.bf16.msra.mxu0 0
      %3443 = vmatprep.subr.bf16.mxu0 0
      %3444 = vmatpush2.bf16.msra.mxu0 0
      %3445 = vmatprep.subr.bf16.mxu0 0
      %3446 = vmatpush2.bf16.msra.mxu0 0
      %3447 = vmatprep.subr.bf16.mxu0 0
      %3448 = vmatpush2.bf16.msra.mxu0 0
      %3449 = vmatprep.subr.bf16.mxu0 0
      %3450 = vmatpush2.bf16.msra.mxu0 0
      %3451 = vmatprep.subr.bf16.mxu0 0
      %3452 = vmatpush2.bf16.msra.mxu0 0
      %3453 = vmatprep.mubr.bf16.mxu0 0
      %3454 = vmatmul.mubr.bf16.gmra.mxu0 %v3413
      %v3455 = vpop.f32.mrf.mxu0
      %v3456 = vadd.f32 0.0, %v3455
      %v3457 = vpop.f32.mrf.mxu0
      %v3458 = vpop.f32.mrf.mxu0
      %v3459 = vadd.f32 0.0, %v3458
      %v3460 = vpop.f32.mrf.mxu0
      %3461 = vmatprep.mubr.bf16.mxu0 0
      %3462 = vmatmul.mubr.bf16.gmra.mxu0 %v3416
      %v3463 = vpop.f32.mrf.mxu0
      %v3464 = vadd.f32 0.0, %v3463
      %v3465 = vpop.f32.mrf.mxu0
      %v3466 = vpop.f32.mrf.mxu0
      %v3467 = vpop.f32.mrf.mxu0
      %3468 = vdwg.mxu0
      %v3469 = vrcp.pop %v3398
      %v3470 = vrcp.pop %v3401
      %v3471 = vrcp.pop %v3404
      %v3472 = vmul.f32 %v3456, %v3469
      %v3473 = vmul.f32 %v3459, %v3470
      %v3474 = vmul.f32 %v3464, %v3471
      %3475 = vrot.lane.b32.xlu0 %v2816, 96
      %v3476 = vpop.permute.xlu0 %3475
      %3477 = vrot.lane.b32.xlu0 %v2817, 96
      %v3478 = vpop.permute.xlu0 %3477
      %3479 = vrot.lane.b32.xlu0 %v2816, 32
      %v3480 = vpop.permute.xlu0 %3479
      %3481 = vrot.lane.b32.xlu0 %v2817, 32
      %v3482 = vpop.permute.xlu0 %3481
      %v3484 = vsel %vm723, %v3476, 0
      %v3487 = vsel %vm723, %v3478, 0
      %v3490 = vsel %vm723, %v3480, 0
      %v3493 = vsel %vm723, %v3482, 0
      %3495 = vmatprep.subr.bf16.mxu0 0
      %3496 = vmatpush1.bf16.xpose.msra.mxu0 0
      %3497 = vmatprep.subr.bf16.mxu0 0
      %3498 = vmatpush1.bf16.xpose.msra.mxu0 0
      %3499 = vmatprep.subr.bf16.mxu0 0
      %3500 = vmatpush1.bf16.xpose.msra.mxu0 0
      %3501 = vmatprep.subr.bf16.mxu0 0
      %3502 = vmatpush1.bf16.xpose.msra.mxu0 0
      %3503 = vmatprep.subr.bf16.mxu0 0
      %3504 = vmatpush1.bf16.xpose.msra.mxu0 0
      %3505 = vmatprep.subr.bf16.mxu0 0
      %3506 = vmatpush1.bf16.xpose.msra.mxu0 0
      %3507 = vmatprep.subr.bf16.mxu0 0
      %3508 = vmatpush1.bf16.xpose.msra.mxu0 %v3493
      %3509 = vmatprep.subr.bf16.mxu0 0
      %3510 = vmatpush1.bf16.xpose.msra.mxu0 %v3490
      %3511 = vmatprep.subr.bf16.mxu0 0
      %3512 = vmatpush2.bf16.xpose.msra.mxu0 0
      %3513 = vmatprep.subr.bf16.mxu0 0
      %3514 = vmatpush2.bf16.xpose.msra.mxu0 0
      %3515 = vmatprep.subr.bf16.mxu0 0
      %3516 = vmatpush2.bf16.xpose.msra.mxu0 0
      %3517 = vmatprep.subr.bf16.mxu0 0
      %3518 = vmatpush2.bf16.xpose.msra.mxu0 0
      %3519 = vmatprep.subr.bf16.mxu0 0
      %3520 = vmatpush2.bf16.xpose.msra.mxu0 0
      %3521 = vmatprep.subr.bf16.mxu0 0
      %3522 = vmatpush2.bf16.xpose.msra.mxu0 0
      %3523 = vmatprep.subr.bf16.mxu0 0
      %3524 = vmatpush2.bf16.xpose.msra.mxu0 0
      %3525 = vmatprep.subr.bf16.mxu0 0
      %3526 = vmatpush2.bf16.xpose.msra.mxu0 0
      %3527 = vmatprep.mubr.bf16.mxu0 0
      %3528 = vmatmul.mubr.bf16.gmra.mxu0 %v3484
      %v3529 = vpop.f32.mrf.mxu0
      %v3530 = vadd.f32 %v539, %v3529
      %v3531 = vpop.f32.mrf.mxu0
      %v3532 = vpop.f32.mrf.mxu0
      %v3533 = vadd.f32 %v539, %v3532
      %v3534 = vpop.f32.mrf.mxu0
      %3535 = vmatprep.mubr.bf16.mxu0 0
      %3536 = vmatmul.mubr.bf16.gmra.mxu0 %v3487
      %v3537 = vpop.f32.mrf.mxu0
      %v3538 = vadd.f32 %v539, %v3537
      %v3539 = vpop.f32.mrf.mxu0
      %v3540 = vpop.f32.mrf.mxu0
      %v3541 = vpop.f32.mrf.mxu0
      %3542 = vdwg.mxu0
      %v3543 = vsel %vm784, %v3530, -inf
      %3544 = vmax.xlane.f32.xlu0 %v3543
      %v3545 = vpop.xlane.xlu0 %3544
      %v3546 = vsel %vm784, %v3533, -inf
      %3547 = vmax.xlane.f32.xlu0 %v3546
      %v3548 = vpop.xlane.xlu0 %3547
      %v3549 = vsel %vm784, %v3538, -inf
      %3550 = vmax.xlane.f32.xlu0 %v3549
      %v3551 = vpop.xlane.xlu0 %3550
      %v3552 = vsub.f32 %v3530, %v3545
      %v3553 = vsub.f32 %v3533, %v3548
      %v3554 = vsub.f32 %v3538, %v3551
      %v3555 = vmul.f32 %v3552, 1.442695
      %v3556 = vpow.pop %v3555
      %v3557 = vmul.f32 %v3553, 1.442695
      %v3558 = vpow.pop %v3557
      %v3559 = vmul.f32 %v3554, 1.442695
      %v3560 = vpow.pop %v3559
      %v3561 = vsel %vm784, %v3556, 0.0
      %3562 = vadd.xlane.f32.xlu0 %v3561
      %v3563 = vpop.xlane.xlu0 %3562
      %v3564 = vsel %vm784, %v3558, 0.0
      %3565 = vadd.xlane.f32.xlu0 %v3564
      %v3566 = vpop.xlane.xlu0 %3565
      %v3567 = vsel %vm784, %v3560, 0.0
      %3568 = vadd.xlane.f32.xlu0 %v3567
      %v3569 = vpop.xlane.xlu0 %3568
      %v3570 = vpack.c.bf16 %v3558, %v3556
      %v3571 = vpack.c.bf16 %v3560, %v3560
      %3572 = vrot.lane.b32.xlu0 %v2818, 96
      %v3573 = vpop.permute.xlu0 %3572
      %3574 = vrot.lane.b32.xlu0 %v2819, 96
      %v3575 = vpop.permute.xlu0 %3574
      %v3578 = vsel %vm784, %v3570, 0
      %v3581 = vsel %vm784, %v3571, 0
      %v3584 = vsel %vm820, %v3575, 0
      %3586 = vmatprep.subr.bf16.mxu0 0
      %3587 = vmatpush1.bf16.msra.mxu0 0
      %3588 = vmatprep.subr.bf16.mxu0 0
      %3589 = vmatpush1.bf16.msra.mxu0 0
      %3590 = vmatprep.subr.bf16.mxu0 0
      %3591 = vmatpush1.bf16.msra.mxu0 0
      %3592 = vmatprep.subr.bf16.mxu0 0
      %3593 = vmatpush1.bf16.msra.mxu0 0
      %3594 = vmatprep.subr.bf16.mxu0 0
      %3595 = vmatpush1.bf16.msra.mxu0 0
      %3596 = vmatprep.subr.bf16.mxu0 0
      %3597 = vmatpush1.bf16.msra.mxu0 0
      %3598 = vmatprep.subr.bf16.mxu0 0
      %3599 = vmatpush1.bf16.msra.mxu0 %v3584
      %3600 = vmatprep.subr.bf16.mxu0 0
      %3601 = vmatpush1.bf16.msra.mxu0 %v3573
      %3602 = vmatprep.subr.bf16.mxu0 0
      %3603 = vmatpush2.bf16.msra.mxu0 0
      %3604 = vmatprep.subr.bf16.mxu0 0
      %3605 = vmatpush2.bf16.msra.mxu0 0
      %3606 = vmatprep.subr.bf16.mxu0 0
      %3607 = vmatpush2.bf16.msra.mxu0 0
      %3608 = vmatprep.subr.bf16.mxu0 0
      %3609 = vmatpush2.bf16.msra.mxu0 0
      %3610 = vmatprep.subr.bf16.mxu0 0
      %3611 = vmatpush2.bf16.msra.mxu0 0
      %3612 = vmatprep.subr.bf16.mxu0 0
      %3613 = vmatpush2.bf16.msra.mxu0 0
      %3614 = vmatprep.subr.bf16.mxu0 0
      %3615 = vmatpush2.bf16.msra.mxu0 0
      %3616 = vmatprep.subr.bf16.mxu0 0
      %3617 = vmatpush2.bf16.msra.mxu0 0
      %3618 = vmatprep.mubr.bf16.mxu0 0
      %3619 = vmatmul.mubr.bf16.gmra.mxu0 %v3578
      %v3620 = vpop.f32.mrf.mxu0
      %v3621 = vadd.f32 0.0, %v3620
      %v3622 = vpop.f32.mrf.mxu0
      %v3623 = vpop.f32.mrf.mxu0
      %v3624 = vadd.f32 0.0, %v3623
      %v3625 = vpop.f32.mrf.mxu0
      %3626 = vmatprep.mubr.bf16.mxu0 0
      %3627 = vmatmul.mubr.bf16.gmra.mxu0 %v3581
      %v3628 = vpop.f32.mrf.mxu0
      %v3629 = vadd.f32 0.0, %v3628
      %v3630 = vpop.f32.mrf.mxu0
      %v3631 = vpop.f32.mrf.mxu0
      %v3632 = vpop.f32.mrf.mxu0
      %3633 = vdwg.mxu0
      %v3634 = vrcp.pop %v3563
      %v3635 = vrcp.pop %v3566
      %v3636 = vrcp.pop %v3569
      %v3637 = vmul.f32 %v3621, %v3634
      %v3638 = vmul.f32 %v3624, %v3635
      %v3639 = vmul.f32 %v3629, %v3636
      %3640 = vrot.lane.b32.xlu0 %v2816, 88
      %v3641 = vpop.permute.xlu0 %3640
      %3642 = vrot.lane.b32.xlu0 %v2817, 88
      %v3643 = vpop.permute.xlu0 %3642
      %3644 = vrot.lane.b32.xlu0 %v2816, 24
      %v3645 = vpop.permute.xlu0 %3644
      %3646 = vrot.lane.b32.xlu0 %v2817, 24
      %v3647 = vpop.permute.xlu0 %3646
      %v3649 = vsel %vm723, %v3641, 0
      %v3652 = vsel %vm723, %v3643, 0
      %v3655 = vsel %vm723, %v3645, 0
      %v3658 = vsel %vm723, %v3647, 0
      %3660 = vmatprep.subr.bf16.mxu0 0
      %3661 = vmatpush1.bf16.xpose.msra.mxu0 0
      %3662 = vmatprep.subr.bf16.mxu0 0
      %3663 = vmatpush1.bf16.xpose.msra.mxu0 0
      %3664 = vmatprep.subr.bf16.mxu0 0
      %3665 = vmatpush1.bf16.xpose.msra.mxu0 0
      %3666 = vmatprep.subr.bf16.mxu0 0
      %3667 = vmatpush1.bf16.xpose.msra.mxu0 0
      %3668 = vmatprep.subr.bf16.mxu0 0
      %3669 = vmatpush1.bf16.xpose.msra.mxu0 0
      %3670 = vmatprep.subr.bf16.mxu0 0
      %3671 = vmatpush1.bf16.xpose.msra.mxu0 0
      %3672 = vmatprep.subr.bf16.mxu0 0
      %3673 = vmatpush1.bf16.xpose.msra.mxu0 %v3658
      %3674 = vmatprep.subr.bf16.mxu0 0
      %3675 = vmatpush1.bf16.xpose.msra.mxu0 %v3655
      %3676 = vmatprep.subr.bf16.mxu0 0
      %3677 = vmatpush2.bf16.xpose.msra.mxu0 0
      %3678 = vmatprep.subr.bf16.mxu0 0
      %3679 = vmatpush2.bf16.xpose.msra.mxu0 0
      %3680 = vmatprep.subr.bf16.mxu0 0
      %3681 = vmatpush2.bf16.xpose.msra.mxu0 0
      %3682 = vmatprep.subr.bf16.mxu0 0
      %3683 = vmatpush2.bf16.xpose.msra.mxu0 0
      %3684 = vmatprep.subr.bf16.mxu0 0
      %3685 = vmatpush2.bf16.xpose.msra.mxu0 0
      %3686 = vmatprep.subr.bf16.mxu0 0
      %3687 = vmatpush2.bf16.xpose.msra.mxu0 0
      %3688 = vmatprep.subr.bf16.mxu0 0
      %3689 = vmatpush2.bf16.xpose.msra.mxu0 0
      %3690 = vmatprep.subr.bf16.mxu0 0
      %3691 = vmatpush2.bf16.xpose.msra.mxu0 0
      %3692 = vmatprep.mubr.bf16.mxu0 0
      %3693 = vmatmul.mubr.bf16.gmra.mxu0 %v3649
      %v3694 = vpop.f32.mrf.mxu0
      %v3695 = vadd.f32 %v539, %v3694
      %v3696 = vpop.f32.mrf.mxu0
      %v3697 = vpop.f32.mrf.mxu0
      %v3698 = vadd.f32 %v539, %v3697
      %v3699 = vpop.f32.mrf.mxu0
      %3700 = vmatprep.mubr.bf16.mxu0 0
      %3701 = vmatmul.mubr.bf16.gmra.mxu0 %v3652
      %v3702 = vpop.f32.mrf.mxu0
      %v3703 = vadd.f32 %v539, %v3702
      %v3704 = vpop.f32.mrf.mxu0
      %v3705 = vpop.f32.mrf.mxu0
      %v3706 = vpop.f32.mrf.mxu0
      %3707 = vdwg.mxu0
      %v3708 = vsel %vm784, %v3695, -inf
      %3709 = vmax.xlane.f32.xlu0 %v3708
      %v3710 = vpop.xlane.xlu0 %3709
      %v3711 = vsel %vm784, %v3698, -inf
      %3712 = vmax.xlane.f32.xlu0 %v3711
      %v3713 = vpop.xlane.xlu0 %3712
      %v3714 = vsel %vm784, %v3703, -inf
      %3715 = vmax.xlane.f32.xlu0 %v3714
      %v3716 = vpop.xlane.xlu0 %3715
      %v3717 = vsub.f32 %v3695, %v3710
      %v3718 = vsub.f32 %v3698, %v3713
      %v3719 = vsub.f32 %v3703, %v3716
      %v3720 = vmul.f32 %v3717, 1.442695
      %v3721 = vpow.pop %v3720
      %v3722 = vmul.f32 %v3718, 1.442695
      %v3723 = vpow.pop %v3722
      %v3724 = vmul.f32 %v3719, 1.442695
      %v3725 = vpow.pop %v3724
      %v3726 = vsel %vm784, %v3721, 0.0
      %3727 = vadd.xlane.f32.xlu0 %v3726
      %v3728 = vpop.xlane.xlu0 %3727
      %v3729 = vsel %vm784, %v3723, 0.0
      %3730 = vadd.xlane.f32.xlu0 %v3729
      %v3731 = vpop.xlane.xlu0 %3730
      %v3732 = vsel %vm784, %v3725, 0.0
      %3733 = vadd.xlane.f32.xlu0 %v3732
      %v3734 = vpop.xlane.xlu0 %3733
      %v3735 = vpack.c.bf16 %v3723, %v3721
      %v3736 = vpack.c.bf16 %v3725, %v3725
      %3737 = vrot.lane.b32.xlu0 %v2818, 88
      %v3738 = vpop.permute.xlu0 %3737
      %3739 = vrot.lane.b32.xlu0 %v2819, 88
      %v3740 = vpop.permute.xlu0 %3739
      %v3743 = vsel %vm784, %v3735, 0
      %v3746 = vsel %vm784, %v3736, 0
      %v3749 = vsel %vm820, %v3740, 0
      %3751 = vmatprep.subr.bf16.mxu0 0
      %3752 = vmatpush1.bf16.msra.mxu0 0
      %3753 = vmatprep.subr.bf16.mxu0 0
      %3754 = vmatpush1.bf16.msra.mxu0 0
      %3755 = vmatprep.subr.bf16.mxu0 0
      %3756 = vmatpush1.bf16.msra.mxu0 0
      %3757 = vmatprep.subr.bf16.mxu0 0
      %3758 = vmatpush1.bf16.msra.mxu0 0
      %3759 = vmatprep.subr.bf16.mxu0 0
      %3760 = vmatpush1.bf16.msra.mxu0 0
      %3761 = vmatprep.subr.bf16.mxu0 0
      %3762 = vmatpush1.bf16.msra.mxu0 0
      %3763 = vmatprep.subr.bf16.mxu0 0
      %3764 = vmatpush1.bf16.msra.mxu0 %v3749
      %3765 = vmatprep.subr.bf16.mxu0 0
      %3766 = vmatpush1.bf16.msra.mxu0 %v3738
      %3767 = vmatprep.subr.bf16.mxu0 0
      %3768 = vmatpush2.bf16.msra.mxu0 0
      %3769 = vmatprep.subr.bf16.mxu0 0
      %3770 = vmatpush2.bf16.msra.mxu0 0
      %3771 = vmatprep.subr.bf16.mxu0 0
      %3772 = vmatpush2.bf16.msra.mxu0 0
      %3773 = vmatprep.subr.bf16.mxu0 0
      %3774 = vmatpush2.bf16.msra.mxu0 0
      %3775 = vmatprep.subr.bf16.mxu0 0
      %3776 = vmatpush2.bf16.msra.mxu0 0
      %3777 = vmatprep.subr.bf16.mxu0 0
      %3778 = vmatpush2.bf16.msra.mxu0 0
      %3779 = vmatprep.subr.bf16.mxu0 0
      %3780 = vmatpush2.bf16.msra.mxu0 0
      %3781 = vmatprep.subr.bf16.mxu0 0
      %3782 = vmatpush2.bf16.msra.mxu0 0
      %3783 = vmatprep.mubr.bf16.mxu0 0
      %3784 = vmatmul.mubr.bf16.gmra.mxu0 %v3743
      %v3785 = vpop.f32.mrf.mxu0
      %v3786 = vadd.f32 0.0, %v3785
      %v3787 = vpop.f32.mrf.mxu0
      %v3788 = vpop.f32.mrf.mxu0
      %v3789 = vadd.f32 0.0, %v3788
      %v3790 = vpop.f32.mrf.mxu0
      %3791 = vmatprep.mubr.bf16.mxu0 0
      %3792 = vmatmul.mubr.bf16.gmra.mxu0 %v3746
      %v3793 = vpop.f32.mrf.mxu0
      %v3794 = vadd.f32 0.0, %v3793
      %v3795 = vpop.f32.mrf.mxu0
      %v3796 = vpop.f32.mrf.mxu0
      %v3797 = vpop.f32.mrf.mxu0
      %3798 = vdwg.mxu0
      %v3799 = vrcp.pop %v3728
      %v3800 = vrcp.pop %v3731
      %v3801 = vrcp.pop %v3734
      %v3802 = vmul.f32 %v3786, %v3799
      %v3803 = vmul.f32 %v3789, %v3800
      %v3804 = vmul.f32 %v3794, %v3801
      %3805 = vrot.lane.b32.xlu0 %v2816, 80
      %v3806 = vpop.permute.xlu0 %3805
      %3807 = vrot.lane.b32.xlu0 %v2817, 80
      %v3808 = vpop.permute.xlu0 %3807
      %3809 = vrot.lane.b32.xlu0 %v2816, 16
      %v3810 = vpop.permute.xlu0 %3809
      %3811 = vrot.lane.b32.xlu0 %v2817, 16
      %v3812 = vpop.permute.xlu0 %3811
      %v3814 = vsel %vm723, %v3806, 0
      %v3817 = vsel %vm723, %v3808, 0
      %v3820 = vsel %vm723, %v3810, 0
      %v3823 = vsel %vm723, %v3812, 0
      %3825 = vmatprep.subr.bf16.mxu0 0
      %3826 = vmatpush1.bf16.xpose.msra.mxu0 0
      %3827 = vmatprep.subr.bf16.mxu0 0
      %3828 = vmatpush1.bf16.xpose.msra.mxu0 0
      %3829 = vmatprep.subr.bf16.mxu0 0
      %3830 = vmatpush1.bf16.xpose.msra.mxu0 0
      %3831 = vmatprep.subr.bf16.mxu0 0
      %3832 = vmatpush1.bf16.xpose.msra.mxu0 0
      %3833 = vmatprep.subr.bf16.mxu0 0
      %3834 = vmatpush1.bf16.xpose.msra.mxu0 0
      %3835 = vmatprep.subr.bf16.mxu0 0
      %3836 = vmatpush1.bf16.xpose.msra.mxu0 0
      %3837 = vmatprep.subr.bf16.mxu0 0
      %3838 = vmatpush1.bf16.xpose.msra.mxu0 %v3823
      %3839 = vmatprep.subr.bf16.mxu0 0
      %3840 = vmatpush1.bf16.xpose.msra.mxu0 %v3820
      %3841 = vmatprep.subr.bf16.mxu0 0
      %3842 = vmatpush2.bf16.xpose.msra.mxu0 0
      %3843 = vmatprep.subr.bf16.mxu0 0
      %3844 = vmatpush2.bf16.xpose.msra.mxu0 0
      %3845 = vmatprep.subr.bf16.mxu0 0
      %3846 = vmatpush2.bf16.xpose.msra.mxu0 0
      %3847 = vmatprep.subr.bf16.mxu0 0
      %3848 = vmatpush2.bf16.xpose.msra.mxu0 0
      %3849 = vmatprep.subr.bf16.mxu0 0
      %3850 = vmatpush2.bf16.xpose.msra.mxu0 0
      %3851 = vmatprep.subr.bf16.mxu0 0
      %3852 = vmatpush2.bf16.xpose.msra.mxu0 0
      %3853 = vmatprep.subr.bf16.mxu0 0
      %3854 = vmatpush2.bf16.xpose.msra.mxu0 0
      %3855 = vmatprep.subr.bf16.mxu0 0
      %3856 = vmatpush2.bf16.xpose.msra.mxu0 0
      %3857 = vmatprep.mubr.bf16.mxu0 0
      %3858 = vmatmul.mubr.bf16.gmra.mxu0 %v3814
      %v3859 = vpop.f32.mrf.mxu0
      %v3860 = vadd.f32 %v539, %v3859
      %v3861 = vpop.f32.mrf.mxu0
      %v3862 = vpop.f32.mrf.mxu0
      %v3863 = vadd.f32 %v539, %v3862
      %v3864 = vpop.f32.mrf.mxu0
      %3865 = vmatprep.mubr.bf16.mxu0 0
      %3866 = vmatmul.mubr.bf16.gmra.mxu0 %v3817
      %v3867 = vpop.f32.mrf.mxu0
      %v3868 = vadd.f32 %v539, %v3867
      %v3869 = vpop.f32.mrf.mxu0
      %v3870 = vpop.f32.mrf.mxu0
      %v3871 = vpop.f32.mrf.mxu0
      %3872 = vdwg.mxu0
      %v3873 = vsel %vm784, %v3860, -inf
      %3874 = vmax.xlane.f32.xlu0 %v3873
      %v3875 = vpop.xlane.xlu0 %3874
      %v3876 = vsel %vm784, %v3863, -inf
      %3877 = vmax.xlane.f32.xlu0 %v3876
      %v3878 = vpop.xlane.xlu0 %3877
      %v3879 = vsel %vm784, %v3868, -inf
      %3880 = vmax.xlane.f32.xlu0 %v3879
      %v3881 = vpop.xlane.xlu0 %3880
      %v3882 = vsub.f32 %v3860, %v3875
      %v3883 = vsub.f32 %v3863, %v3878
      %v3884 = vsub.f32 %v3868, %v3881
      %v3885 = vmul.f32 %v3882, 1.442695
      %v3886 = vpow.pop %v3885
      %v3887 = vmul.f32 %v3883, 1.442695
      %v3888 = vpow.pop %v3887
      %v3889 = vmul.f32 %v3884, 1.442695
      %v3890 = vpow.pop %v3889
      %v3891 = vsel %vm784, %v3886, 0.0
      %3892 = vadd.xlane.f32.xlu0 %v3891
      %v3893 = vpop.xlane.xlu0 %3892
      %v3894 = vsel %vm784, %v3888, 0.0
      %3895 = vadd.xlane.f32.xlu0 %v3894
      %v3896 = vpop.xlane.xlu0 %3895
      %v3897 = vsel %vm784, %v3890, 0.0
      %3898 = vadd.xlane.f32.xlu0 %v3897
      %v3899 = vpop.xlane.xlu0 %3898
      %v3900 = vpack.c.bf16 %v3888, %v3886
      %v3901 = vpack.c.bf16 %v3890, %v3890
      %3902 = vrot.lane.b32.xlu0 %v2818, 80
      %v3903 = vpop.permute.xlu0 %3902
      %3904 = vrot.lane.b32.xlu0 %v2819, 80
      %v3905 = vpop.permute.xlu0 %3904
      %v3908 = vsel %vm784, %v3900, 0
      %v3911 = vsel %vm784, %v3901, 0
      %v3914 = vsel %vm820, %v3905, 0
      %3916 = vmatprep.subr.bf16.mxu0 0
      %3917 = vmatpush1.bf16.msra.mxu0 0
      %3918 = vmatprep.subr.bf16.mxu0 0
      %3919 = vmatpush1.bf16.msra.mxu0 0
      %3920 = vmatprep.subr.bf16.mxu0 0
      %3921 = vmatpush1.bf16.msra.mxu0 0
      %3922 = vmatprep.subr.bf16.mxu0 0
      %3923 = vmatpush1.bf16.msra.mxu0 0
      %3924 = vmatprep.subr.bf16.mxu0 0
      %3925 = vmatpush1.bf16.msra.mxu0 0
      %3926 = vmatprep.subr.bf16.mxu0 0
      %3927 = vmatpush1.bf16.msra.mxu0 0
      %3928 = vmatprep.subr.bf16.mxu0 0
      %3929 = vmatpush1.bf16.msra.mxu0 %v3914
      %3930 = vmatprep.subr.bf16.mxu0 0
      %3931 = vmatpush1.bf16.msra.mxu0 %v3903
      %3932 = vmatprep.subr.bf16.mxu0 0
      %3933 = vmatpush2.bf16.msra.mxu0 0
      %3934 = vmatprep.subr.bf16.mxu0 0
      %3935 = vmatpush2.bf16.msra.mxu0 0
      %3936 = vmatprep.subr.bf16.mxu0 0
      %3937 = vmatpush2.bf16.msra.mxu0 0
      %3938 = vmatprep.subr.bf16.mxu0 0
      %3939 = vmatpush2.bf16.msra.mxu0 0
      %3940 = vmatprep.subr.bf16.mxu0 0
      %3941 = vmatpush2.bf16.msra.mxu0 0
      %3942 = vmatprep.subr.bf16.mxu0 0
      %3943 = vmatpush2.bf16.msra.mxu0 0
      %3944 = vmatprep.subr.bf16.mxu0 0
      %3945 = vmatpush2.bf16.msra.mxu0 0
      %3946 = vmatprep.subr.bf16.mxu0 0
      %3947 = vmatpush2.bf16.msra.mxu0 0
      %3948 = vmatprep.mubr.bf16.mxu0 0
      %3949 = vmatmul.mubr.bf16.gmra.mxu0 %v3908
      %v3950 = vpop.f32.mrf.mxu0
      %v3951 = vadd.f32 0.0, %v3950
      %v3952 = vpop.f32.mrf.mxu0
      %v3953 = vpop.f32.mrf.mxu0
      %v3954 = vadd.f32 0.0, %v3953
      %v3955 = vpop.f32.mrf.mxu0
      %3956 = vmatprep.mubr.bf16.mxu0 0
      %3957 = vmatmul.mubr.bf16.gmra.mxu0 %v3911
      %v3958 = vpop.f32.mrf.mxu0
      %v3959 = vadd.f32 0.0, %v3958
      %v3960 = vpop.f32.mrf.mxu0
      %v3961 = vpop.f32.mrf.mxu0
      %v3962 = vpop.f32.mrf.mxu0
      %3963 = vdwg.mxu0
      %v3964 = vrcp.pop %v3893
      %v3965 = vrcp.pop %v3896
      %v3966 = vrcp.pop %v3899
      %v3967 = vmul.f32 %v3951, %v3964
      %v3968 = vmul.f32 %v3954, %v3965
      %v3969 = vmul.f32 %v3959, %v3966
      %3970 = vrot.lane.b32.xlu0 %v2816, 72
      %v3971 = vpop.permute.xlu0 %3970
      %3972 = vrot.lane.b32.xlu0 %v2817, 72
      %v3973 = vpop.permute.xlu0 %3972
      %3974 = vrot.lane.b32.xlu0 %v2816, 8
      %v3975 = vpop.permute.xlu0 %3974
      %3976 = vrot.lane.b32.xlu0 %v2817, 8
      %v3977 = vpop.permute.xlu0 %3976
      %v3979 = vsel %vm723, %v3971, 0
      %v3982 = vsel %vm723, %v3973, 0
      %v3985 = vsel %vm723, %v3975, 0
      %v3988 = vsel %vm723, %v3977, 0
      %3990 = vmatprep.subr.bf16.mxu0 0
      %3991 = vmatpush1.bf16.xpose.msra.mxu0 0
      %3992 = vmatprep.subr.bf16.mxu0 0
      %3993 = vmatpush1.bf16.xpose.msra.mxu0 0
      %3994 = vmatprep.subr.bf16.mxu0 0
      %3995 = vmatpush1.bf16.xpose.msra.mxu0 0
      %3996 = vmatprep.subr.bf16.mxu0 0
      %3997 = vmatpush1.bf16.xpose.msra.mxu0 0
      %3998 = vmatprep.subr.bf16.mxu0 0
      %3999 = vmatpush1.bf16.xpose.msra.mxu0 0
      %4000 = vmatprep.subr.bf16.mxu0 0
      %4001 = vmatpush1.bf16.xpose.msra.mxu0 0
      %4002 = vmatprep.subr.bf16.mxu0 0
      %4003 = vmatpush1.bf16.xpose.msra.mxu0 %v3988
      %4004 = vmatprep.subr.bf16.mxu0 0
      %4005 = vmatpush1.bf16.xpose.msra.mxu0 %v3985
      %4006 = vmatprep.subr.bf16.mxu0 0
      %4007 = vmatpush2.bf16.xpose.msra.mxu0 0
      %4008 = vmatprep.subr.bf16.mxu0 0
      %4009 = vmatpush2.bf16.xpose.msra.mxu0 0
      %4010 = vmatprep.subr.bf16.mxu0 0
      %4011 = vmatpush2.bf16.xpose.msra.mxu0 0
      %4012 = vmatprep.subr.bf16.mxu0 0
      %4013 = vmatpush2.bf16.xpose.msra.mxu0 0
      %4014 = vmatprep.subr.bf16.mxu0 0
      %4015 = vmatpush2.bf16.xpose.msra.mxu0 0
      %4016 = vmatprep.subr.bf16.mxu0 0
      %4017 = vmatpush2.bf16.xpose.msra.mxu0 0
      %4018 = vmatprep.subr.bf16.mxu0 0
      %4019 = vmatpush2.bf16.xpose.msra.mxu0 0
      %4020 = vmatprep.subr.bf16.mxu0 0
      %4021 = vmatpush2.bf16.xpose.msra.mxu0 0
      %4022 = vmatprep.mubr.bf16.mxu0 0
      %4023 = vmatmul.mubr.bf16.gmra.mxu0 %v3979
      %v4024 = vpop.f32.mrf.mxu0
      %v4025 = vadd.f32 %v539, %v4024
      %v4026 = vpop.f32.mrf.mxu0
      %v4027 = vpop.f32.mrf.mxu0
      %v4028 = vadd.f32 %v539, %v4027
      %v4029 = vpop.f32.mrf.mxu0
      %4030 = vmatprep.mubr.bf16.mxu0 0
      %4031 = vmatmul.mubr.bf16.gmra.mxu0 %v3982
      %v4032 = vpop.f32.mrf.mxu0
      %v4033 = vadd.f32 %v539, %v4032
      %v4034 = vpop.f32.mrf.mxu0
      %v4035 = vpop.f32.mrf.mxu0
      %v4036 = vpop.f32.mrf.mxu0
      %4037 = vdwg.mxu0
      %v4038 = vsel %vm784, %v4025, -inf
      %4039 = vmax.xlane.f32.xlu0 %v4038
      %v4040 = vpop.xlane.xlu0 %4039
      %v4041 = vsel %vm784, %v4028, -inf
      %4042 = vmax.xlane.f32.xlu0 %v4041
      %v4043 = vpop.xlane.xlu0 %4042
      %v4044 = vsel %vm784, %v4033, -inf
      %4045 = vmax.xlane.f32.xlu0 %v4044
      %v4046 = vpop.xlane.xlu0 %4045
      %v4047 = vsub.f32 %v4025, %v4040
      %v4048 = vsub.f32 %v4028, %v4043
      %v4049 = vsub.f32 %v4033, %v4046
      %v4050 = vmul.f32 %v4047, 1.442695
      %v4051 = vpow.pop %v4050
      %v4052 = vmul.f32 %v4048, 1.442695
      %v4053 = vpow.pop %v4052
      %v4054 = vmul.f32 %v4049, 1.442695
      %v4055 = vpow.pop %v4054
      %v4056 = vsel %vm784, %v4051, 0.0
      %4057 = vadd.xlane.f32.xlu0 %v4056
      %v4058 = vpop.xlane.xlu0 %4057
      %v4059 = vsel %vm784, %v4053, 0.0
      %4060 = vadd.xlane.f32.xlu0 %v4059
      %v4061 = vpop.xlane.xlu0 %4060
      %v4062 = vsel %vm784, %v4055, 0.0
      %4063 = vadd.xlane.f32.xlu0 %v4062
      %v4064 = vpop.xlane.xlu0 %4063
      %v4065 = vpack.c.bf16 %v4053, %v4051
      %v4066 = vpack.c.bf16 %v4055, %v4055
      %4067 = vrot.lane.b32.xlu0 %v2818, 72
      %v4068 = vpop.permute.xlu0 %4067
      %4069 = vrot.lane.b32.xlu0 %v2819, 72
      %v4070 = vpop.permute.xlu0 %4069
      %v4073 = vsel %vm784, %v4065, 0
      %v4076 = vsel %vm784, %v4066, 0
      %v4079 = vsel %vm820, %v4070, 0
      %4081 = vmatprep.subr.bf16.mxu0 0
      %4082 = vmatpush1.bf16.msra.mxu0 0
      %4083 = vmatprep.subr.bf16.mxu0 0
      %4084 = vmatpush1.bf16.msra.mxu0 0
      %4085 = vmatprep.subr.bf16.mxu0 0
      %4086 = vmatpush1.bf16.msra.mxu0 0
      %4087 = vmatprep.subr.bf16.mxu0 0
      %4088 = vmatpush1.bf16.msra.mxu0 0
      %4089 = vmatprep.subr.bf16.mxu0 0
      %4090 = vmatpush1.bf16.msra.mxu0 0
      %4091 = vmatprep.subr.bf16.mxu0 0
      %4092 = vmatpush1.bf16.msra.mxu0 0
      %4093 = vmatprep.subr.bf16.mxu0 0
      %4094 = vmatpush1.bf16.msra.mxu0 %v4079
      %4095 = vmatprep.subr.bf16.mxu0 0
      %4096 = vmatpush1.bf16.msra.mxu0 %v4068
      %4097 = vmatprep.subr.bf16.mxu0 0
      %4098 = vmatpush2.bf16.msra.mxu0 0
      %4099 = vmatprep.subr.bf16.mxu0 0
      %4100 = vmatpush2.bf16.msra.mxu0 0
      %4101 = vmatprep.subr.bf16.mxu0 0
      %4102 = vmatpush2.bf16.msra.mxu0 0
      %4103 = vmatprep.subr.bf16.mxu0 0
      %4104 = vmatpush2.bf16.msra.mxu0 0
      %4105 = vmatprep.subr.bf16.mxu0 0
      %4106 = vmatpush2.bf16.msra.mxu0 0
      %4107 = vmatprep.subr.bf16.mxu0 0
      %4108 = vmatpush2.bf16.msra.mxu0 0
      %4109 = vmatprep.subr.bf16.mxu0 0
      %4110 = vmatpush2.bf16.msra.mxu0 0
      %4111 = vmatprep.subr.bf16.mxu0 0
      %4112 = vmatpush2.bf16.msra.mxu0 0
      %4113 = vmatprep.mubr.bf16.mxu0 0
      %4114 = vmatmul.mubr.bf16.gmra.mxu0 %v4073
      %v4115 = vpop.f32.mrf.mxu0
      %v4116 = vadd.f32 0.0, %v4115
      %v4117 = vpop.f32.mrf.mxu0
      %v4118 = vpop.f32.mrf.mxu0
      %v4119 = vadd.f32 0.0, %v4118
      %v4120 = vpop.f32.mrf.mxu0
      %4121 = vmatprep.mubr.bf16.mxu0 0
      %4122 = vmatmul.mubr.bf16.gmra.mxu0 %v4076
      %v4123 = vpop.f32.mrf.mxu0
      %v4124 = vadd.f32 0.0, %v4123
      %v4125 = vpop.f32.mrf.mxu0
      %v4126 = vpop.f32.mrf.mxu0
      %v4127 = vpop.f32.mrf.mxu0
      %4128 = vdwg.mxu0
      %v4129 = vrcp.pop %v4058
      %v4130 = vrcp.pop %v4061
      %v4131 = vrcp.pop %v4064
      %v4132 = vmul.f32 %v4116, %v4129
      %v4133 = vmul.f32 %v4119, %v4130
      %v4134 = vmul.f32 %v4124, %v4131
      %4138 = vrot.lane.b32.xlu0 %v3142, 8
      %v4139 = vpop.permute.xlu0 %4138
      %4140 = vrot.lane.b32.xlu0 %v3143, 8
      %v4141 = vpop.permute.xlu0 %4140
      %4142 = vrot.lane.b32.xlu0 %v3144, 8
      %v4143 = vpop.permute.xlu0 %4142
      %4150 = vrot.lane.b32.xlu0 %v3307, 16
      %v4151 = vpop.permute.xlu0 %4150
      %4152 = vrot.lane.b32.xlu0 %v3308, 16
      %v4153 = vpop.permute.xlu0 %4152
      %4154 = vrot.lane.b32.xlu0 %v3309, 16
      %v4155 = vpop.permute.xlu0 %4154
      %4162 = vrot.lane.b32.xlu0 %v3472, 24
      %v4163 = vpop.permute.xlu0 %4162
      %4164 = vrot.lane.b32.xlu0 %v3473, 24
      %v4165 = vpop.permute.xlu0 %4164
      %4166 = vrot.lane.b32.xlu0 %v3474, 24
      %v4167 = vpop.permute.xlu0 %4166
      %4174 = vrot.lane.b32.xlu0 %v3637, 32
      %v4175 = vpop.permute.xlu0 %4174
      %4176 = vrot.lane.b32.xlu0 %v3638, 32
      %v4177 = vpop.permute.xlu0 %4176
      %4178 = vrot.lane.b32.xlu0 %v3639, 32
      %v4179 = vpop.permute.xlu0 %4178
      %4186 = vrot.lane.b32.xlu0 %v3802, 40
      %v4187 = vpop.permute.xlu0 %4186
      %4188 = vrot.lane.b32.xlu0 %v3803, 40
      %v4189 = vpop.permute.xlu0 %4188
      %4190 = vrot.lane.b32.xlu0 %v3804, 40
      %v4191 = vpop.permute.xlu0 %4190
      %4198 = vrot.lane.b32.xlu0 %v3967, 48
      %v4199 = vpop.permute.xlu0 %4198
      %4200 = vrot.lane.b32.xlu0 %v3968, 48
      %v4201 = vpop.permute.xlu0 %4200
      %4202 = vrot.lane.b32.xlu0 %v3969, 48
      %v4203 = vpop.permute.xlu0 %4202
      %4210 = vrot.lane.b32.xlu0 %v4132, 56
      %v4211 = vpop.permute.xlu0 %4210
      %4212 = vrot.lane.b32.xlu0 %v4133, 56
      %v4213 = vpop.permute.xlu0 %4212
      %4214 = vrot.lane.b32.xlu0 %v4134, 56
      %v4215 = vpop.permute.xlu0 %4214
      %v4219 = vsel %vm723, %v2975, %v4139
      %v4220 = vsel %vm723, %v2976, %v4141
      %v4221 = vsel %vm723, %v2977, %v4143
      %v4222 = vsel %vm2122, %v4219, %v4151
      %v4223 = vsel %vm2122, %v4220, %v4153
      %v4224 = vsel %vm2122, %v4221, %v4155
      %v4225 = vsel %vm784, %v4222, %v4163
      %v4226 = vsel %vm784, %v4223, %v4165
      %v4227 = vsel %vm784, %v4224, %v4167
      %v4228 = vsel %vm2129, %v4225, %v4175
      %v4229 = vsel %vm2129, %v4226, %v4177
      %v4230 = vsel %vm2129, %v4227, %v4179
      %v4231 = vsel %vm2133, %v4228, %v4187
      %v4232 = vsel %vm2133, %v4229, %v4189
      %v4233 = vsel %vm2133, %v4230, %v4191
      %v4234 = vsel %vm2137, %v4231, %v4199
      %v4235 = vsel %vm2137, %v4232, %v4201
      %v4236 = vsel %vm2137, %v4233, %v4203
      %v4237 = vsel %vm2141, %v4234, %v4211
      %v4238 = vsel %vm2141, %v4235, %v4213
      %v4239 = vsel %vm2141, %v4236, %v4215
      %v4240 = vpack.c.bf16 %v4238, %v4237
      %v4241 = vpack.c.bf16 %v4239, %v4239
      %s4242 = scalar_lea.vmem %s4, 32
      %v4243 = vld [vmem:[%s4242] sm:$0xf]
      %v4244 = vld [vmem:[%s4242 + $0x4] sm:$0xf]
      %v4245 = vld [vmem:[%s4242 + $0x8] sm:$0xf]
      %v4246 = vld [vmem:[%s4242 + $0xc] sm:$0xf]
      %v4247 = vld [vmem:[%s4242 + $0x10] sm:$0xf]
      %v4248 = vld [vmem:[%s4242 + $0x14] sm:$0xf]
      %v4249 = vld [vmem:[%s4242 + $0x18] sm:$0xf]
      %v4250 = vld [vmem:[%s4242 + $0x1c] sm:$0xf]
      %v4259 = vunpack.c.l.b16 %v4243
      %v4260 = vunpack.c.l.b16 %v4244
      %v4261 = vunpack.c.l.b16 %v4245
      %v4262 = vunpack.c.l.b16 %v4246
      %v4263 = vunpack.c.l.b16 %v4247
      %v4264 = vunpack.c.l.b16 %v4248
      %v4265 = vunpack.c.l.b16 %v4249
      %v4266 = vunpack.c.l.b16 %v4250
      %v4267 = vpack.c.b16 %v4260, %v4259
      %v4268 = vpack.c.b16 %v4262, %v4261
      %v4269 = vpack.c.b16 %v4264, %v4263
      %v4270 = vpack.c.b16 %v4266, %v4265
      %v4276 = vsel %vm481, %v4240, 0
      %v4279 = vsel %vm481, %v4241, 0
      %4281 = vmatprep.subr.bf16.mxu0 0
      %4282 = vmatpush1.bf16.msra.mxu0 0
      %4283 = vmatprep.subr.bf16.mxu0 0
      %4284 = vmatpush1.bf16.msra.mxu0 0
      %4285 = vmatprep.subr.bf16.mxu0 0
      %4286 = vmatpush1.bf16.msra.mxu0 0
      %4287 = vmatprep.subr.bf16.mxu0 0
      %4288 = vmatpush1.bf16.msra.mxu0 0
      %4289 = vmatprep.subr.bf16.mxu0 0
      %4290 = vmatpush1.bf16.msra.mxu0 %v4270
      %4291 = vmatprep.subr.bf16.mxu0 0
      %4292 = vmatpush1.bf16.msra.mxu0 %v4269
      %4293 = vmatprep.subr.bf16.mxu0 0
      %4294 = vmatpush1.bf16.msra.mxu0 %v4268
      %4295 = vmatprep.subr.bf16.mxu0 0
      %4296 = vmatpush1.bf16.msra.mxu0 %v4267
      %4297 = vmatprep.subr.bf16.mxu0 0
      %4298 = vmatpush2.bf16.msra.mxu0 0
      %4299 = vmatprep.subr.bf16.mxu0 0
      %4300 = vmatpush2.bf16.msra.mxu0 0
      %4301 = vmatprep.subr.bf16.mxu0 0
      %4302 = vmatpush2.bf16.msra.mxu0 0
      %4303 = vmatprep.subr.bf16.mxu0 0
      %4304 = vmatpush2.bf16.msra.mxu0 0
      %4305 = vmatprep.subr.bf16.mxu0 0
      %4306 = vmatpush2.bf16.msra.mxu0 0
      %4307 = vmatprep.subr.bf16.mxu0 0
      %4308 = vmatpush2.bf16.msra.mxu0 0
      %4309 = vmatprep.subr.bf16.mxu0 0
      %4310 = vmatpush2.bf16.msra.mxu0 0
      %4311 = vmatprep.subr.bf16.mxu0 0
      %4312 = vmatpush2.bf16.msra.mxu0 0
      %4313 = vmatprep.mubr.bf16.mxu0 0
      %4314 = vmatmul.mubr.bf16.gmra.mxu0 %v4276
      %v4315 = vpop.f32.mrf.mxu0
      %v4316 = vadd.f32 0.0, %v4315
      %v4317 = vpop.f32.mrf.mxu0
      %v4318 = vpop.f32.mrf.mxu0
      %v4319 = vadd.f32 0.0, %v4318
      %v4320 = vpop.f32.mrf.mxu0
      %4321 = vmatprep.mubr.bf16.mxu0 0
      %4322 = vmatmul.mubr.bf16.gmra.mxu0 %v4279
      %v4323 = vpop.f32.mrf.mxu0
      %v4324 = vadd.f32 0.0, %v4323
      %v4325 = vpop.f32.mrf.mxu0
      %v4326 = vpop.f32.mrf.mxu0
      %v4327 = vpop.f32.mrf.mxu0
      %4328 = vdwg.mxu0
      %v4329 = vadd.f32 %v2639, %v4316
      %v4330 = vadd.f32 %v2640, %v4319
      %v4331 = vadd.f32 %v2641, %v4324
      %v4332 = vadd.f32 %v4329, %v2650
      %v4333 = vadd.f32 %v4330, %v2650
      %v4334 = vadd.f32 %v4331, %v2650
      %v4335 = vsel %vm481, %v4332, 0.0
      %4336 = vadd.xlane.f32.xlu0 %v4335
      %v4337 = vpop.xlane.xlu0 %4336
      %v4338 = vsel %vm481, %v4333, 0.0
      %4339 = vadd.xlane.f32.xlu0 %v4338
      %v4340 = vpop.xlane.xlu0 %4339
      %v4341 = vsel %vm481, %v4334, 0.0
      %4342 = vadd.xlane.f32.xlu0 %v4341
      %v4343 = vpop.xlane.xlu0 %4342
      %v4344 = vmul.f32 %v4337, %v558
      %v4345 = vmul.f32 %v4340, %v558
      %v4346 = vmul.f32 %v4343, %v558
      %v4347 = vsub.f32 %v4332, %v4344
      %v4348 = vsub.f32 %v4333, %v4345
      %v4349 = vsub.f32 %v4334, %v4346
      %v4350 = vmul.f32 %v4347, %v4347
      %v4351 = vmul.f32 %v4348, %v4348
      %v4352 = vmul.f32 %v4349, %v4349
      %v4353 = vsel %vm481, %v4350, 0.0
      %4354 = vadd.xlane.f32.xlu0 %v4353
      %v4355 = vpop.xlane.xlu0 %4354
      %v4356 = vsel %vm481, %v4351, 0.0
      %4357 = vadd.xlane.f32.xlu0 %v4356
      %v4358 = vpop.xlane.xlu0 %4357
      %v4359 = vsel %vm481, %v4352, 0.0
      %4360 = vadd.xlane.f32.xlu0 %v4359
      %v4361 = vpop.xlane.xlu0 %4360
      %v4362 = vmul.f32 %v4355, %v558
      %v4363 = vmul.f32 %v4358, %v558
      %v4364 = vmul.f32 %v4361, %v558
      %v4365 = vadd.f32 %v4362, 1e-05
      %v4366 = vadd.f32 %v4363, 1e-05
      %v4367 = vadd.f32 %v4364, 1e-05
      %v4368 = vrsqrt.pop %v4365
      %v4369 = vrsqrt.pop %v4366
      %v4370 = vrsqrt.pop %v4367
      %v4371 = vmul.f32 %v4347, %v4368
      %v4372 = vmul.f32 %v4348, %v4369
      %v4373 = vmul.f32 %v4349, %v4370
      %v4374 = vmul.f32 %v4371, %v2648
      %v4375 = vmul.f32 %v4372, %v2648
      %v4376 = vmul.f32 %v4373, %v2648
      %v4377 = vadd.f32 %v4374, %v2649
      %v4378 = vadd.f32 %v4375, %v2649
      %v4379 = vadd.f32 %v4376, %v2649
      %v4380 = vpack.c.bf16 %v4378, %v4377
      %v4381 = vpack.c.bf16 %v4379, %v4379
      %s4382 = scalar_lea.vmem %s5, 64
      %v4383 = vld [vmem:[%s4382] sm:$0xff]
      %v4384 = vld [vmem:[%s4382 + $0x8] sm:$0xff]
      %v4385 = vld [vmem:[%s4382 + $0x10] sm:$0xff]
      %v4386 = vld [vmem:[%s4382 + $0x18] sm:$0xff]
      %v4387 = vld [vmem:[%s4382 + $0x20] sm:$0xff]
      %v4388 = vld [vmem:[%s4382 + $0x28] sm:$0xff]
      %v4389 = vld [vmem:[%s4382 + $0x30] sm:$0xff]
      %v4390 = vld [vmem:[%s4382 + $0x38] sm:$0xff]
      %v4392 = vlaneseq
      %v4393 = vshrl.u32 %v4392, 7
      %v4394 = vsub.s32 0, %v4393
      %v4395 = vrot.slane %v2645, %v4394
      %v4396 = vlaneseq
      %v4397 = vshrl.u32 %v4396, 7
      %v4398 = vsub.s32 1, %v4397
      %v4399 = vrot.slane %v2645, %v4398
      %v4410 = vunpack.c.l.b16 %v4383
      %v4411 = vunpack.c.h.b16 %v4383
      %v4412 = vunpack.c.l.b16 %v4384
      %v4413 = vunpack.c.h.b16 %v4384
      %v4414 = vunpack.c.l.b16 %v4385
      %v4415 = vunpack.c.h.b16 %v4385
      %v4416 = vunpack.c.l.b16 %v4386
      %v4417 = vunpack.c.h.b16 %v4386
      %v4418 = vunpack.c.l.b16 %v4387
      %v4419 = vunpack.c.h.b16 %v4387
      %v4420 = vunpack.c.l.b16 %v4388
      %v4421 = vunpack.c.h.b16 %v4388
      %v4422 = vunpack.c.l.b16 %v4389
      %v4423 = vunpack.c.h.b16 %v4389
      %v4424 = vunpack.c.l.b16 %v4390
      %v4425 = vunpack.c.h.b16 %v4390
      %v4426 = vpack.c.b16 %v4412, %v4410
      %v4427 = vpack.c.b16 %v4413, %v4411
      %v4428 = vpack.c.b16 %v4416, %v4414
      %v4429 = vpack.c.b16 %v4417, %v4415
      %v4430 = vpack.c.b16 %v4420, %v4418
      %v4431 = vpack.c.b16 %v4421, %v4419
      %v4432 = vpack.c.b16 %v4424, %v4422
      %v4433 = vpack.c.b16 %v4425, %v4423
      %v4443 = vsel %vm481, %v4380, 0
      %v4446 = vsel %vm481, %v4381, 0
      %4448 = vmatprep.subr.bf16.mxu0 0
      %4449 = vmatpush1.bf16.msra.mxu0 0
      %4450 = vmatprep.subr.bf16.mxu0 0
      %4451 = vmatpush1.bf16.msra.mxu0 0
      %4452 = vmatprep.subr.bf16.mxu0 0
      %4453 = vmatpush1.bf16.msra.mxu0 0
      %4454 = vmatprep.subr.bf16.mxu0 0
      %4455 = vmatpush1.bf16.msra.mxu0 0
      %4456 = vmatprep.subr.bf16.mxu0 %v4433
      %4457 = vmatpush1.bf16.msra.mxu0 %v4432
      %4458 = vmatprep.subr.bf16.mxu0 %v4431
      %4459 = vmatpush1.bf16.msra.mxu0 %v4430
      %4460 = vmatprep.subr.bf16.mxu0 %v4429
      %4461 = vmatpush1.bf16.msra.mxu0 %v4428
      %4462 = vmatprep.subr.bf16.mxu0 %v4427
      %4463 = vmatpush1.bf16.msra.mxu0 %v4426
      %4464 = vmatprep.subr.bf16.mxu0 0
      %4465 = vmatpush2.bf16.msra.mxu0 0
      %4466 = vmatprep.subr.bf16.mxu0 0
      %4467 = vmatpush2.bf16.msra.mxu0 0
      %4468 = vmatprep.subr.bf16.mxu0 0
      %4469 = vmatpush2.bf16.msra.mxu0 0
      %4470 = vmatprep.subr.bf16.mxu0 0
      %4471 = vmatpush2.bf16.msra.mxu0 0
      %4472 = vmatprep.subr.bf16.mxu0 0
      %4473 = vmatpush2.bf16.msra.mxu0 0
      %4474 = vmatprep.subr.bf16.mxu0 0
      %4475 = vmatpush2.bf16.msra.mxu0 0
      %4476 = vmatprep.subr.bf16.mxu0 0
      %4477 = vmatpush2.bf16.msra.mxu0 0
      %4478 = vmatprep.subr.bf16.mxu0 0
      %4479 = vmatpush2.bf16.msra.mxu0 0
      %4480 = vmatprep.mubr.bf16.mxu0 0
      %4481 = vmatmul.mubr.bf16.gmra.mxu0 %v4443
      %v4482 = vpop.f32.mrf.mxu0
      %v4483 = vadd.f32 %v4395, %v4482
      %v4484 = vpop.f32.mrf.mxu0
      %v4485 = vadd.f32 %v4399, %v4484
      %v4486 = vpop.f32.mrf.mxu0
      %v4487 = vadd.f32 %v4395, %v4486
      %v4488 = vpop.f32.mrf.mxu0
      %v4489 = vadd.f32 %v4399, %v4488
      %4490 = vmatprep.mubr.bf16.mxu0 0
      %4491 = vmatmul.mubr.bf16.gmra.mxu0 %v4446
      %v4492 = vpop.f32.mrf.mxu0
      %v4493 = vadd.f32 %v4395, %v4492
      %v4494 = vpop.f32.mrf.mxu0
      %v4495 = vadd.f32 %v4399, %v4494
      %v4496 = vpop.f32.mrf.mxu0
      %v4497 = vpop.f32.mrf.mxu0
      %4498 = vdwg.mxu0
      %v4499 = vmul.f32 %v4483, %v4483
      %v4500 = vmul.f32 %v4485, %v4485
      %v4501 = vmul.f32 %v4487, %v4487
      %v4502 = vmul.f32 %v4489, %v4489
      %v4503 = vmul.f32 %v4493, %v4493
      %v4504 = vmul.f32 %v4495, %v4495
      %v4505 = vmul.f32 %v4483, %v4499
      %v4506 = vmul.f32 %v4485, %v4500
      %v4507 = vmul.f32 %v4487, %v4501
      %v4508 = vmul.f32 %v4489, %v4502
      %v4509 = vmul.f32 %v4493, %v4503
      %v4510 = vmul.f32 %v4495, %v4504
      %v4511 = vmul.f32 %v4505, 0.044715
      %v4512 = vmul.f32 %v4506, 0.044715
      %v4513 = vmul.f32 %v4507, 0.044715
      %v4514 = vmul.f32 %v4508, 0.044715
      %v4515 = vmul.f32 %v4509, 0.044715
      %v4516 = vmul.f32 %v4510, 0.044715
      %v4517 = vadd.f32 %v4483, %v4511
      %v4518 = vadd.f32 %v4485, %v4512
      %v4519 = vadd.f32 %v4487, %v4513
      %v4520 = vadd.f32 %v4489, %v4514
      %v4521 = vadd.f32 %v4493, %v4515
      %v4522 = vadd.f32 %v4495, %v4516
      %v4523 = vmul.f32 %v4517, 0.7978846
      %v4524 = vmul.f32 %v4518, 0.7978846
      %v4525 = vmul.f32 %v4519, 0.7978846
      %v4526 = vmul.f32 %v4520, 0.7978846
      %v4527 = vmul.f32 %v4521, 0.7978846
      %v4528 = vmul.f32 %v4522, 0.7978846
      %v4529 = vtanh.pop %v4523
      %v4530 = vtanh.pop %v4524
      %v4531 = vtanh.pop %v4525
      %v4532 = vtanh.pop %v4526
      %v4533 = vtanh.pop %v4527
      %v4534 = vtanh.pop %v4528
      %v4535 = vadd.f32 %v4529, 1.0
      %v4536 = vadd.f32 %v4530, 1.0
      %v4537 = vadd.f32 %v4531, 1.0
      %v4538 = vadd.f32 %v4532, 1.0
      %v4539 = vadd.f32 %v4533, 1.0
      %v4540 = vadd.f32 %v4534, 1.0
      %v4541 = vmul.f32 %v4535, 0.5
      %v4542 = vmul.f32 %v4536, 0.5
      %v4543 = vmul.f32 %v4537, 0.5
      %v4544 = vmul.f32 %v4538, 0.5
      %v4545 = vmul.f32 %v4539, 0.5
      %v4546 = vmul.f32 %v4540, 0.5
      %v4547 = vmul.f32 %v4483, %v4541
      %v4548 = vmul.f32 %v4485, %v4542
      %v4549 = vmul.f32 %v4487, %v4543
      %v4550 = vmul.f32 %v4489, %v4544
      %v4551 = vmul.f32 %v4493, %v4545
      %v4552 = vmul.f32 %v4495, %v4546
      %v4553 = vpack.c.bf16 %v4549, %v4547
      %v4554 = vpack.c.bf16 %v4550, %v4548
      %v4555 = vpack.c.bf16 %v4551, %v4551
      %v4556 = vpack.c.bf16 %v4552, %v4552
      %s4557 = scalar_lea.vmem %s6, 128
      %v4558 = vld [vmem:[%s4557] sm:$0xf]
      %v4559 = vld [vmem:[%s4557 + $0x4] sm:$0xf]
      %v4560 = vld [vmem:[%s4557 + $0x8] sm:$0xf]
      %v4561 = vld [vmem:[%s4557 + $0xc] sm:$0xf]
      %v4562 = vld [vmem:[%s4557 + $0x10] sm:$0xf]
      %v4563 = vld [vmem:[%s4557 + $0x14] sm:$0xf]
      %v4564 = vld [vmem:[%s4557 + $0x18] sm:$0xf]
      %v4565 = vld [vmem:[%s4557 + $0x1c] sm:$0xf]
      %v4566 = vld [vmem:[%s4557 + $0x20] sm:$0xf]
      %v4567 = vld [vmem:[%s4557 + $0x24] sm:$0xf]
      %v4568 = vld [vmem:[%s4557 + $0x28] sm:$0xf]
      %v4569 = vld [vmem:[%s4557 + $0x2c] sm:$0xf]
      %v4570 = vld [vmem:[%s4557 + $0x30] sm:$0xf]
      %v4571 = vld [vmem:[%s4557 + $0x34] sm:$0xf]
      %v4572 = vld [vmem:[%s4557 + $0x38] sm:$0xf]
      %v4573 = vld [vmem:[%s4557 + $0x3c] sm:$0xf]
      %v4574 = vld [vmem:[%s4557 + $0x40] sm:$0xf]
      %v4575 = vld [vmem:[%s4557 + $0x44] sm:$0xf]
      %v4576 = vld [vmem:[%s4557 + $0x48] sm:$0xf]
      %v4577 = vld [vmem:[%s4557 + $0x4c] sm:$0xf]
      %v4578 = vld [vmem:[%s4557 + $0x50] sm:$0xf]
      %v4579 = vld [vmem:[%s4557 + $0x54] sm:$0xf]
      %v4580 = vld [vmem:[%s4557 + $0x58] sm:$0xf]
      %v4581 = vld [vmem:[%s4557 + $0x5c] sm:$0xf]
      %v4582 = vld [vmem:[%s4557 + $0x60] sm:$0xf]
      %v4583 = vld [vmem:[%s4557 + $0x64] sm:$0xf]
      %v4584 = vld [vmem:[%s4557 + $0x68] sm:$0xf]
      %v4585 = vld [vmem:[%s4557 + $0x6c] sm:$0xf]
      %v4586 = vld [vmem:[%s4557 + $0x70] sm:$0xf]
      %v4587 = vld [vmem:[%s4557 + $0x74] sm:$0xf]
      %v4588 = vld [vmem:[%s4557 + $0x78] sm:$0xf]
      %v4589 = vld [vmem:[%s4557 + $0x7c] sm:$0xf]
      %v4622 = vunpack.c.l.b16 %v4558
      %v4623 = vunpack.c.l.b16 %v4559
      %v4624 = vunpack.c.l.b16 %v4560
      %v4625 = vunpack.c.l.b16 %v4561
      %v4626 = vunpack.c.l.b16 %v4562
      %v4627 = vunpack.c.l.b16 %v4563
      %v4628 = vunpack.c.l.b16 %v4564
      %v4629 = vunpack.c.l.b16 %v4565
      %v4630 = vunpack.c.l.b16 %v4566
      %v4631 = vunpack.c.l.b16 %v4567
      %v4632 = vunpack.c.l.b16 %v4568
      %v4633 = vunpack.c.l.b16 %v4569
      %v4634 = vunpack.c.l.b16 %v4570
      %v4635 = vunpack.c.l.b16 %v4571
      %v4636 = vunpack.c.l.b16 %v4572
      %v4637 = vunpack.c.l.b16 %v4573
      %v4638 = vunpack.c.l.b16 %v4574
      %v4639 = vunpack.c.l.b16 %v4575
      %v4640 = vunpack.c.l.b16 %v4576
      %v4641 = vunpack.c.l.b16 %v4577
      %v4642 = vunpack.c.l.b16 %v4578
      %v4643 = vunpack.c.l.b16 %v4579
      %v4644 = vunpack.c.l.b16 %v4580
      %v4645 = vunpack.c.l.b16 %v4581
      %v4646 = vunpack.c.l.b16 %v4582
      %v4647 = vunpack.c.l.b16 %v4583
      %v4648 = vunpack.c.l.b16 %v4584
      %v4649 = vunpack.c.l.b16 %v4585
      %v4650 = vunpack.c.l.b16 %v4586
      %v4651 = vunpack.c.l.b16 %v4587
      %v4652 = vunpack.c.l.b16 %v4588
      %v4653 = vunpack.c.l.b16 %v4589
      %v4654 = vpack.c.b16 %v4623, %v4622
      %v4655 = vpack.c.b16 %v4625, %v4624
      %v4656 = vpack.c.b16 %v4627, %v4626
      %v4657 = vpack.c.b16 %v4629, %v4628
      %v4658 = vpack.c.b16 %v4631, %v4630
      %v4659 = vpack.c.b16 %v4633, %v4632
      %v4660 = vpack.c.b16 %v4635, %v4634
      %v4661 = vpack.c.b16 %v4637, %v4636
      %v4662 = vpack.c.b16 %v4639, %v4638
      %v4663 = vpack.c.b16 %v4641, %v4640
      %v4664 = vpack.c.b16 %v4643, %v4642
      %v4665 = vpack.c.b16 %v4645, %v4644
      %v4666 = vpack.c.b16 %v4647, %v4646
      %v4667 = vpack.c.b16 %v4649, %v4648
      %v4668 = vpack.c.b16 %v4651, %v4650
      %v4669 = vpack.c.b16 %v4653, %v4652
      %4686 = vmatprep.subr.bf16.mxu0 0
      %4687 = vmatpush1.bf16.msra.mxu0 %v4661
      %4688 = vmatprep.subr.bf16.mxu0 0
      %4689 = vmatpush1.bf16.msra.mxu0 %v4660
      %4690 = vmatprep.subr.bf16.mxu0 0
      %4691 = vmatpush1.bf16.msra.mxu0 %v4659
      %4692 = vmatprep.subr.bf16.mxu0 0
      %4693 = vmatpush1.bf16.msra.mxu0 %v4658
      %4694 = vmatprep.subr.bf16.mxu0 0
      %4695 = vmatpush1.bf16.msra.mxu0 %v4657
      %4696 = vmatprep.subr.bf16.mxu0 0
      %4697 = vmatpush1.bf16.msra.mxu0 %v4656
      %4698 = vmatprep.subr.bf16.mxu0 0
      %4699 = vmatpush1.bf16.msra.mxu0 %v4655
      %4700 = vmatprep.subr.bf16.mxu0 0
      %4701 = vmatpush1.bf16.msra.mxu0 %v4654
      %4702 = vmatprep.subr.bf16.mxu0 0
      %4703 = vmatpush2.bf16.msra.mxu0 %v4669
      %4704 = vmatprep.subr.bf16.mxu0 0
      %4705 = vmatpush2.bf16.msra.mxu0 %v4668
      %4706 = vmatprep.subr.bf16.mxu0 0
      %4707 = vmatpush2.bf16.msra.mxu0 %v4667
      %4708 = vmatprep.subr.bf16.mxu0 0
      %4709 = vmatpush2.bf16.msra.mxu0 %v4666
      %4710 = vmatprep.subr.bf16.mxu0 0
      %4711 = vmatpush2.bf16.msra.mxu0 %v4665
      %4712 = vmatprep.subr.bf16.mxu0 0
      %4713 = vmatpush2.bf16.msra.mxu0 %v4664
      %4714 = vmatprep.subr.bf16.mxu0 0
      %4715 = vmatpush2.bf16.msra.mxu0 %v4663
      %4716 = vmatprep.subr.bf16.mxu0 0
      %4717 = vmatpush2.bf16.msra.mxu0 %v4662
      %4718 = vmatprep.mubr.bf16.mxu0 %v4554
      %4719 = vmatmul.mubr.bf16.gmra.mxu0 %v4553
      %v4720 = vpop.f32.mrf.mxu0
      %v4721 = vadd.f32 0.0, %v4720
      %v4722 = vpop.f32.mrf.mxu0
      %v4723 = vpop.f32.mrf.mxu0
      %v4724 = vpop.f32.mrf.mxu0
      %4725 = vmatprep.mubr.bf16.mxu0 %v4556
      %4726 = vmatmul.mubr.bf16.gmra.mxu0 %v4555
      %v4727 = vpop.f32.mrf.mxu0
      %v4728 = vpop.f32.mrf.mxu0
      %v4729 = vpop.f32.mrf.mxu0
      %v4730 = vpop.f32.mrf.mxu0
      %4731 = vdwg.mxu0
      %v4732 = vadd.f32 %v4332, %v4721
      %v4733 = vadd.f32 %v4732, %v2651
      %v4734 = vpack.c.bf16 %v4733, %v4733
      %v4735 = vld [vmem:[%s8] sm:$0xf]
      %v4736 = vld [vmem:[%s8 + $0x4] sm:$0xf]
      %v4737 = vld [vmem:[%s8 + $0x8] sm:$0xf]
      %v4738 = vld [vmem:[%s8 + $0xc] sm:$0xf]
      %v4739 = vld [vmem:[%s8 + $0x10] sm:$0xf]
      %v4740 = vld [vmem:[%s8 + $0x14] sm:$0xf]
      %v4741 = vld [vmem:[%s8 + $0x18] sm:$0xf]
      %v4742 = vld [vmem:[%s8 + $0x1c] sm:$0xf]
      %v4743 = vld [vmem:[%s9] sm:$0x1]
      %v4745 = vlaneseq
      %v4746 = vshrl.u32 %v4745, 7
      %v4747 = vsub.s32 0, %v4746
      %v4748 = vrot.slane %v4743, %v4747
      %v4758 = vunpack.c.l.b16 %v4735
      %v4759 = vunpack.c.l.b16 %v4736
      %v4760 = vunpack.c.l.b16 %v4737
      %v4761 = vunpack.c.l.b16 %v4738
      %v4762 = vunpack.c.l.b16 %v4739
      %v4763 = vunpack.c.l.b16 %v4740
      %v4764 = vunpack.c.l.b16 %v4741
      %v4765 = vunpack.c.l.b16 %v4742
      %v4766 = vpack.c.b16 %v4759, %v4758
      %v4767 = vpack.c.b16 %v4761, %v4760
      %v4768 = vpack.c.b16 %v4763, %v4762
      %v4769 = vpack.c.b16 %v4765, %v4764
      %v4775 = vsel %vm481, %v4734, 0
      %4777 = vmatprep.subr.bf16.mxu0 0
      %4778 = vmatpush1.bf16.msra.mxu0 0
      %4779 = vmatprep.subr.bf16.mxu0 0
      %4780 = vmatpush1.bf16.msra.mxu0 0
      %4781 = vmatprep.subr.bf16.mxu0 0
      %4782 = vmatpush1.bf16.msra.mxu0 0
      %4783 = vmatprep.subr.bf16.mxu0 0
      %4784 = vmatpush1.bf16.msra.mxu0 0
      %4785 = vmatprep.subr.bf16.mxu0 0
      %4786 = vmatpush1.bf16.msra.mxu0 %v4769
      %4787 = vmatprep.subr.bf16.mxu0 0
      %4788 = vmatpush1.bf16.msra.mxu0 %v4768
      %4789 = vmatprep.subr.bf16.mxu0 0
      %4790 = vmatpush1.bf16.msra.mxu0 %v4767
      %4791 = vmatprep.subr.bf16.mxu0 0
      %4792 = vmatpush1.bf16.msra.mxu0 %v4766
      %4793 = vmatprep.subr.bf16.mxu0 0
      %4794 = vmatpush2.bf16.msra.mxu0 0
      %4795 = vmatprep.subr.bf16.mxu0 0
      %4796 = vmatpush2.bf16.msra.mxu0 0
      %4797 = vmatprep.subr.bf16.mxu0 0
      %4798 = vmatpush2.bf16.msra.mxu0 0
      %4799 = vmatprep.subr.bf16.mxu0 0
      %4800 = vmatpush2.bf16.msra.mxu0 0
      %4801 = vmatprep.subr.bf16.mxu0 0
      %4802 = vmatpush2.bf16.msra.mxu0 0
      %4803 = vmatprep.subr.bf16.mxu0 0
      %4804 = vmatpush2.bf16.msra.mxu0 0
      %4805 = vmatprep.subr.bf16.mxu0 0
      %4806 = vmatpush2.bf16.msra.mxu0 0
      %4807 = vmatprep.subr.bf16.mxu0 0
      %4808 = vmatpush2.bf16.msra.mxu0 0
      %4809 = vmatprep.mubr.bf16.mxu0 0
      %4810 = vmatmul.mubr.bf16.gmra.mxu0 %v4775
      %v4811 = vpop.f32.mrf.mxu0
      %v4812 = vadd.f32 %v4748, %v4811
      %v4813 = vpop.f32.mrf.mxu0
      %v4814 = vpop.f32.mrf.mxu0
      %v4815 = vpop.f32.mrf.mxu0
      %4816 = vdwg.mxu0
      %4817 = vst [vmem:[%s362] sm:$0xff] %v4812
      %p4818 = scmp.lt.s32.totalorder %s21, 1
      %s4819 = scalar_select %p4818, %s21, 1
      %s4820 = smul.addr %s4819, 8
      %s4821 = scalar_lea.vmem %s10, %s4820
      // Predicated region
      $region61: #{trans_med_forward.1} parent=59 // pred_check
        %p4822 = pneg %p254
      $region62: #{trans_med_forward.1} parent=59 // pred_check_branch
        %4824 = sbr.rel (%p4822) target = $region64
      $region63: #{trans_med_forward.1} parent=59 // pred_region
        _
      $region64: #{trans_med_forward.1} parent=59 // pred_fallthru
        _
    $region60: #{trans_med_forward.1} parent=5 // pred_fallthru
      _
    %p4825 = scmp.le.s32.totalorder 2, %s16
    // Predicated region
    $region65: #{trans_med_forward.1} parent=5 // pred_check
      %p4826 = pneg %p4825
    $region66: #{trans_med_forward.1} parent=5 // pred_check_branch
      %4828 = sbr.rel (%p4826) target = $region68
    $region67: #{trans_med_forward.1} parent=5 // pred_region
      %s4829 = ssub.s32 %s16, 2
      // Predicated region
      $region69: #{trans_med_forward.1} parent=67 // pred_check
        %p4830 = pneg %p260
      $region70: #{trans_med_forward.1} parent=67 // pred_check_branch
        %4832 = sbr.rel (%p4830) target = $region72
      $region71: #{trans_med_forward.1} parent=67 // pred_region
        %p4833 = scmp.lt.s32.totalorder %s22, 1
        %s4834 = scalar_select %p4833, %s22, 1
        %s4835 = smul.addr %s4834, 8
        %s4836 = scalar_lea.vmem %s10, %s4835
      $region72: #{trans_med_forward.1} parent=67 // pred_fallthru
        _
    $region68: #{trans_med_forward.1} parent=5 // pred_fallthru
      _
  $region6: #{trans_med_forward.1} parent=0 // loop_footer
    %s20 = sadd.s32 1, %s16
  $region7: #{trans_med_forward.1} parent=0 // loop_footer_branch
    %15 = sbr.rel target = $region3
  $region8: #{trans_med_forward.1} parent=0 // loop_exit
    _

</llo_original>
